<compile_context>
chip_gen: v7x
topology: tpu7x:2x2x1
jax: 0.10.0
libtpu: 0.0.40
codegen_flags: <defaults>
</compile_context>

<pallas_src>
import functools

import jax
import jax.numpy as jnp
from jax.experimental import pallas as pl
from jax.experimental.pallas import tpu as pltpu

F32 = jnp.float32
BF16 = jnp.bfloat16


def _device_kind():
    try:
        return jax.devices()[0].device_kind.lower()
    except Exception:
        return ""


_KIND = _device_kind()
_IS_V5E = ("v5 lite" in _KIND) or ("v5e" in _KIND) or ("v5litepod" in _KIND)
_IS_V7 = "v7" in _KIND
# v7x has 64 MiB physical VMEM -> keep the scoped limit at 32 MiB there;
# v5e / v6e have 128 MiB -> raise to 64 MiB so larger tiles get selected.
_VMEM_LIMIT = (32 if _IS_V7 else 64) * 1024 * 1024
_TN_CAP = 128 if _IS_V5E else 256        # v5e MXU is only 128 wide
_CONV_BUDGET = int(_VMEM_LIMIT * 0.7)
_POOL_BUDGET = _VMEM_LIMIT // 4
_L1_BUDGET = _VMEM_LIMIT // 4


def _lane(c):   # minor (lane) dim padding in VMEM
    return -(-c // 128) * 128


def _subl(r):   # second-minor (sublane) dim padding in VMEM
    return -(-r // 8) * 8


# ----------------------------- 3x3 conv (+bias, +optional ReLU) -----------------------------

def _conv_accumulate(src, w_ref, b_ref, o_ref, acc_ref, *, th, W, cin, n_dy, apply_relu):
    """Shared conv body.  src: (nb, th+2, W+2, cin) halo (ref or value).
    w_ref: (n_dy, K, tn) bf16, b_ref: (1, tn) f32, o_ref: (nb, th*W, tn) bf16,
    acc_ref: (nb*th*W, tn) f32 VMEM scratch (dummy (8,128) when n_dy == 1)."""
    nb = o_ref.shape[0]
    tn = o_ref.shape[-1]
    m = nb * th * W

    def patch(taps):
        parts = [src[:, dy:dy + th, dx:dx + W, :] for (dy, dx) in taps]
        return jnp.concatenate(parts, axis=-1).reshape(m, len(taps) * cin)

    if n_dy == 1:
        # small Cin (first conv): all 9 taps folded into one matmul with K = 9*Cin
        p9 = patch([(dy, dx) for dy in range(3) for dx in range(3)])
        total = jnp.dot(p9, w_ref[0], preferred_element_type=jnp.float32)
    else:
        # 3 matmuls with K = 3*Cin, accumulated in the VMEM f32 scratch
        for dy in range(3):
            p3 = patch([(dy, dx) for dx in range(3)])
            contrib = jnp.dot(p3, w_ref[dy], preferred_element_type=jnp.float32)
            if dy == 0:
                acc_ref[...] = contrib
            else:
                acc_ref[...] += contrib
        total = acc_ref[...]

    total = total + b_ref[...]
    if apply_relu:
        total = jnp.maximum(total, 0.0)
    o_ref[...] = total.reshape(nb, th * W, tn).astype(o_ref.dtype)


def _conv_batched_kernel(x_ref, w_ref, b_ref, o_ref, acc_ref,
                         *, H, W, cin, n_dy, apply_relu):
    # Whole (small) batch activation resident in VMEM; zero-pad it in VMEM so the
    # activation never does an extra HBM pad round trip.  Batch folds into GEMM M.
    xb = x_ref[...]
    nb = xb.shape[0]
    zr = jnp.zeros((nb, 1, W, cin), xb.dtype)
    xp = jnp.concatenate([zr, xb, zr], axis=1)            # (nb, H+2, W, cin)
    zc = jnp.zeros((nb, H + 2, 1, cin), xb.dtype)
    xp = jnp.concatenate([zc, xp, zc], axis=2)            # (nb, H+2, W+2, cin)
    _conv_accumulate(xp, w_ref, b_ref, o_ref, acc_ref,
                     th=H, W=W, cin=cin, n_dy=n_dy, apply_relu=apply_relu)


def _conv_rows_kernel(x_hbm, w_ref, b_ref, o_ref, halo_ref, acc_ref, sem,
                      *, th, W, cin, n_dy, apply_relu):
    # Row-tiled path: the overlapping halo window is DMA'd straight from the padded
    # HBM activation (no overlapping slab in HBM), once per (image, row tile), and
    # reused across all Cout tiles (innermost "arbitrary" grid axis).
    n = pl.program_id(0)
    r = pl.program_id(1)

    @pl.when(pl.program_id(2) == 0)
    def _():
        cp = pltpu.make_async_copy(
            x_hbm.at[n, pl.ds(r * th, th + 2)], halo_ref.at[0], sem)
        cp.start()
        cp.wait()

    _conv_accumulate(halo_ref, w_ref, b_ref, o_ref, acc_ref,
                     th=th, W=W, cin=cin, n_dy=n_dy, apply_relu=apply_relu)


def _conv_tile_bytes(nb, th, W, cin, tn, n_dy, K, pipelined_input):
    m = nb * th * W
    halo = nb * (th + 2) * _subl(W + 2) * _lane(cin) * 2
    xblk = (2 * nb * th * _subl(W) * _lane(cin) * 2) if pipelined_input else 0
    wts = 2 * (n_dy * _subl(K) * _lane(tn) * 2 + _lane(tn) * 4)
    patch = _subl(m) * _lane(K) * 2 + _subl(m) * _lane(tn) * 4
    acc = 0 if n_dy == 1 else _subl(m) * _lane(tn) * 4
    out = 2 * _subl(m) * _lane(tn) * 2
    return halo + xblk + wts + patch + acc + out


def _pick_row_tile(H, W, cin, tn, n_dy, K):
    best = None
    for th in range(1, H + 1):
        if H % th:
            continue
        if _conv_tile_bytes(1, th, W, cin, tn, n_dy, K, False) <= _CONV_BUDGET:
            best = th
    assert best is not None, (
        f"conv3x3 row tile does not fit the VMEM budget (H={H}, W={W}, cin={cin}, tn={tn})")
    return best


def conv3x3(x, w, b, apply_relu, force_rows=None):
    """3x3 same-padded conv + bias (+ optional ReLU); NHWC bf16 in, bf16 out."""
    x = x.astype(BF16)
    Nb, H, W, Cin = x.shape
    Cout = w.shape[-1]
    tn = Cout if Cout <= _TN_CAP else _TN_CAP
    if Cout % tn:
        tn = Cout
    n_ct = Cout // tn

    fold_all = Cin <= 16                     # first conv: one matmul, K = 9*Cin = 27
    n_dy = 1 if fold_all else 3
    K = (9 if fold_all else 3) * Cin
    wK = w.astype(BF16).reshape(n_dy, K, Cout)
    b2 = b.reshape(1, Cout).astype(F32)

    batched_ok = (force_rows is None and
                  _conv_tile_bytes(Nb, H, W, Cin, tn, n_dy, K, True) <= _CONV_BUDGET)

    if batched_ok:
        m = Nb * H * W
        acc_shape = (8, 128) if n_dy == 1 else (m, tn)
        kern = functools.partial(_conv_batched_kernel, H=H, W=W, cin=Cin,
                                 n_dy=n_dy, apply_relu=apply_relu)
        out = pl.pallas_call(
            kern,
            out_shape=jax.ShapeDtypeStruct((Nb, H * W, Cout), BF16),
            grid=(n_ct,),
            in_specs=[
                pl.BlockSpec((Nb, H, W, Cin), lambda j: (0, 0, 0, 0)),
                pl.BlockSpec((n_dy, K, tn), lambda j: (0, 0, j)),
                pl.BlockSpec((1, tn), lambda j: (0, j)),
            ],
            out_specs=pl.BlockSpec((Nb, H * W, tn), lambda j: (0, 0, j)),
            scratch_shapes=[pltpu.VMEM(acc_shape, F32)],
            compiler_params=pltpu.CompilerParams(
                dimension_semantics=("parallel",),
                vmem_limit_bytes=_VMEM_LIMIT),
        )(x, wK, b2)
        return out.reshape(Nb, H, W, Cout)

    # Row-tiled path for large feature maps.
    th = force_rows if force_rows is not None else _pick_row_tile(H, W, Cin, tn, n_dy, K)
    assert H % th == 0
    n_rt = H // th
    m = th * W
    acc_shape = (8, 128) if n_dy == 1 else (m, tn)
    # TODO(synk): this jnp.pad is the one remaining HBM round trip of the activation;
    # boundary-aware DMAs inside the kernel could eliminate it as well.
    xp = jnp.pad(x, ((0, 0), (1, 1), (1, 1), (0, 0)))
    kern = functools.partial(_conv_rows_kernel, th=th, W=W, cin=Cin,
                             n_dy=n_dy, apply_relu=apply_relu)
    out = pl.pallas_call(
        kern,
        out_shape=jax.ShapeDtypeStruct((Nb, n_rt, m, Cout), BF16),
        grid=(Nb, n_rt, n_ct),
        in_specs=[
            pl.BlockSpec(memory_space=pl.ANY),
            pl.BlockSpec((n_dy, K, tn), lambda n, r, j: (0, 0, j)),
            pl.BlockSpec((1, tn), lambda n, r, j: (0, j)),
        ],
        out_specs=pl.BlockSpec((None, 1, m, tn), lambda n, r, j: (n, r, 0, j)),
        scratch_shapes=[
            pltpu.VMEM((1, th + 2, W + 2, Cin), BF16),   # halo window
            pltpu.VMEM(acc_shape, F32),                  # f32 accumulator
            pltpu.SemaphoreType.DMA,
        ],
        compiler_params=pltpu.CompilerParams(
            dimension_semantics=("parallel", "parallel", "arbitrary"),
            vmem_limit_bytes=_VMEM_LIMIT),
    )(xp, wK, b2)
    return out.reshape(Nb, H, W, Cout)


# ---------------------- fused ReLU + MaxPool2d(2,2) + L1 partial sums ----------------------

def _pool_l1_kernel(x_ref, o_ref, p_ref, *, tp, Wo, C):
    xb = x_ref[...]                                        # (2, 2*tp, Wo, 2*C) bf16
    # L1 partial sum on the raw (pre-ReLU) x/y feature halves -> f32.
    d = xb[0].astype(F32) - xb[1].astype(F32)
    p_ref[...] = jnp.broadcast_to(jnp.sum(jnp.abs(d)), (8, 128))
    # ReLU + 2x2 max-pool (ReLU/max commute); max done in bf16.
    mw = jnp.maximum(xb[..., :C], xb[..., C:])             # pair over width
    mh = mw.reshape(2, tp, 2, Wo, C)
    mp = jnp.maximum(mh[:, :, 0], mh[:, :, 1])             # pair over height
    o_ref[...] = jnp.maximum(mp, 0.0).astype(o_ref.dtype)


def _pick_pool_tile(Ho, Wo, C):
    best = 1
    for tp in range(1, Ho + 1):
        if Ho % tp:
            continue
        blk_in = 2 * (2 * tp) * _subl(Wo) * _lane(2 * C) * 2
        blk_out = 2 * tp * _subl(Wo) * _lane(C) * 2
        if 2 * (blk_in + blk_out) <= _POOL_BUDGET:
            best = tp
    return best


def relu_maxpool2x2_l1(t, n_x):
    """Fused ReLU + MaxPool(2,2) over the shared x/y batch, plus the L1 partial sums
    of the (pre-ReLU) compared features, so that tensor is read from HBM only once."""
    nb, H, W, C = t.shape
    assert nb == 2 * n_x and H % 2 == 0 and W % 2 == 0
    Ho, Wo = H // 2, W // 2
    xr = t.reshape(2, n_x, 2 * Ho, Wo, 2 * C)              # contiguous (free) reshape
    tp = _pick_pool_tile(Ho, Wo, C)
    n_pt = Ho // tp
    kern = functools.partial(_pool_l1_kernel, tp=tp, Wo=Wo, C=C)
    pooled, partial = pl.pallas_call(
        kern,
        out_shape=(jax.ShapeDtypeStruct((2, n_x, Ho, Wo, C), BF16),
                   jax.ShapeDtypeStruct((n_x, n_pt, 8, 128), F32)),
        grid=(n_x, n_pt),
        in_specs=[pl.BlockSpec((2, None, 2 * tp, Wo, 2 * C),
                               lambda n, p: (0, n, p, 0, 0))],
        out_specs=(pl.BlockSpec((2, None, tp, Wo, C), lambda n, p: (0, n, p, 0, 0)),
                   pl.BlockSpec((None, None, 8, 128), lambda n, p: (n, p, 0, 0))),
        compiler_params=pltpu.CompilerParams(
            dimension_semantics=("parallel", "parallel"),
            vmem_limit_bytes=_VMEM_LIMIT),
    )(xr)
    l1 = jnp.sum(partial[:, :, 0, 0]) / jnp.float32(n_x * H * W * C)
    return pooled.reshape(2 * n_x, Ho, Wo, C), l1


# --------------------------- standalone L1 (last slice / fallback) ---------------------------

def _l1_partial_kernel(x_ref, p_ref):
    d = x_ref[0].astype(F32) - x_ref[1].astype(F32)
    p_ref[...] = jnp.broadcast_to(jnp.sum(jnp.abs(d)), (8, 128))


def _pick_l1_tile(m_half, C):
    cands = [d for d in range(1, m_half + 1)
             if m_half % d == 0 and (d % 8 == 0 or d == m_half)]
    within = [d for d in cands if 4 * _subl(d) * _lane(C) * 2 <= _L1_BUDGET]
    return max(within) if within else min(cands)


def l1_mean_halves(t, n_x):
    """Mean |x_feat - y_feat|; images [0, n_x) are x features, [n_x, 2*n_x) are y."""
    nb, H, W, C = t.shape
    m_half = n_x * H * W
    xr = t.reshape(2, m_half, C)
    tm = _pick_l1_tile(m_half, C)
    n_blk = m_half // tm
    partial = pl.pallas_call(
        _l1_partial_kernel,
        out_shape=jax.ShapeDtypeStruct((n_blk, 8, 128), F32),
        grid=(n_blk,),
        in_specs=[pl.BlockSpec((2, tm, C), lambda i: (0, i, 0))],
        out_specs=pl.BlockSpec((None, 8, 128), lambda i: (i, 0, 0)),
        compiler_params=pltpu.CompilerParams(
            dimension_semantics=("parallel",),
            vmem_limit_bytes=_VMEM_LIMIT),
    )(xr)
    return jnp.sum(partial[:, 0, 0]) / jnp.float32(m_half * C)


# --------------------------------------- model ---------------------------------------

# (cin, cout) of the conv layers inside each VGG16 feature slice.
VGG_SLICE_CHANNELS = [
    [(3, 64), (64, 64)],                    # vgg16.features[0:3]   -> conv1_2 (pre-ReLU)
    [(64, 128), (128, 128)],                # vgg16.features[3:8]   -> conv2_2 (pre-ReLU)
    [(128, 256), (256, 256), (256, 256)],   # vgg16.features[8:15]  -> conv3_3 (pre-ReLU)
    [(256, 512), (512, 512), (512, 512)],   # vgg16.features[15:22] -> conv4_3 (pre-ReLU)
]


def init_params(key):
    # TODO(synk): pretrained IMAGENET1K_V1 VGG16 weights cannot be loaded here (no
    # file / network access); deterministic He-normal init with identical shapes.
    params = []
    for block in VGG_SLICE_CHANNELS:
        bp = []
        for cin, cout in block:
            key, kw, kb = jax.random.split(key, 3)
            scale = jnp.sqrt(2.0 / (9.0 * cin)).astype(F32)
            w = jax.random.normal(kw, (3, 3, cin, cout), F32) * scale
            b = jax.random.normal(kb, (cout,), F32) * jnp.float32(0.01)
            bp.append((w, b))
        params.append(bp)
    return params


def perceptual_loss(x_nchw, y_nchw, params):
    """Mirrors PerceptualLoss.forward: sum of mean-L1 over the four VGG16 feature
    slices.  x and y share one forward pass (concatenated batch).  Each compared
    feature is the PRE-ReLU conv output (slice stop index excluded); that ReLU is
    applied at the start of the next slice, fused into its max-pool."""
    n = x_nchw.shape[0]
    xy = jnp.concatenate([x_nchw, y_nchw], axis=0)
    t = jnp.transpose(xy, (0, 2, 3, 1)).astype(BF16)     # NCHW -> NHWC, bf16 activations
    loss = jnp.float32(0.0)
    for si, block in enumerate(params):
        if si > 0:
            H, W = t.shape[1], t.shape[2]
            if H % 2 == 0 and W % 2 == 0:
                # fused: previous slice's L1 + leading ReLU + MaxPool(2,2)
                t, l1_prev = relu_maxpool2x2_l1(t, n)
            else:
                # odd spatial dims: L1 must see the uncropped features
                l1_prev = l1_mean_halves(t, n)
                t, _ = relu_maxpool2x2_l1(t[:, :2 * (H // 2), :2 * (W // 2), :], n)
            loss = loss + l1_prev
        for li, (w, b) in enumerate(block):
            # interior convs are followed by ReLU; the slice's last conv is not
            t = conv3x3(t, w, b, apply_relu=(li < len(block) - 1))
    loss = loss + l1_mean_halves(t, n)                   # last slice (conv4_3, pre-ReLU)
    return loss


# ------------------------------------ references ------------------------------------

def _conv3x3_ref(x, w, b, apply_relu):
    out = jax.lax.conv_general_dilated(
        x.astype(F32), w.astype(BF16).astype(F32), (1, 1), ((1, 1), (1, 1)),
        dimension_numbers=("NHWC", "HWIO", "NHWC"),
        precision=jax.lax.Precision.HIGHEST)
    out = out + b.reshape(1, 1, 1, -1).astype(F32)
    if apply_relu:
        out = jnp.maximum(out, 0.0)
    return out


def _ref_perceptual_loss(x_nchw, y_nchw, params):
    n = x_nchw.shape[0]
    xy = jnp.concatenate([x_nchw, y_nchw], axis=0)
    t = jnp.transpose(xy, (0, 2, 3, 1)).astype(BF16)
    loss = jnp.float32(0.0)
    for si, block in enumerate(params):
        if si > 0:
            t = jnp.maximum(t, 0)
            b0, H, W, C = t.shape
            Ho, Wo = H // 2, W // 2
            t = jnp.max(t[:, :2 * Ho, :2 * Wo, :].reshape(b0, Ho, 2, Wo, 2, C),
                        axis=(2, 4))
        for li, (w, b) in enumerate(block):
            t = _conv3x3_ref(t, w, b, li < len(block) - 1).astype(BF16)
        loss = loss + jnp.mean(jnp.abs(t[:n].astype(F32) - t[n:].astype(F32)))
    return loss


if __name__ == "__main__":
    key = jax.random.PRNGKey(0)
    kp, kx, ky, k1, k2, k3 = jax.random.split(key, 6)
    params = init_params(kp)
    x = jax.random.normal(kx, (2, 3, 16, 16), F32)       # NCHW, VGG expects 3 channels
    y = jax.random.normal(ky, (2, 3, 16, 16), F32)

    # --- unit check of the conv kernel (both code paths) against lax.conv ---
    xt = jax.random.normal(k1, (2, 16, 16, 32), F32).astype(BF16)
    wt = jax.random.normal(k2, (3, 3, 32, 16), F32) * 0.1
    bt = jax.random.normal(k3, (16,), F32) * 0.1
    ref = _conv3x3_ref(xt, wt, bt, True)
    for kw in ({}, {"force_rows": 4}):
        got = conv3x3(xt, wt, bt, True, **kw).astype(F32)
        rel = float(jnp.max(jnp.abs(got - ref)) / (jnp.max(jnp.abs(ref)) + 1e-6))
        assert rel < 2e-2, f"conv3x3 mismatch ({kw}): rel={rel}"

    # --- full perceptual loss ---
    loss = jax.jit(perceptual_loss)(x, y, params)
    jax.block_until_ready(loss)
    assert loss.shape == () and bool(jnp.isfinite(loss))
    ref_loss = _ref_perceptual_loss(x, y, params)
    rel = abs(float(loss) - float(ref_loss)) / (abs(float(ref_loss)) + 1e-6)
    assert rel < 3e-2, f"loss mismatch: {float(loss)} vs {float(ref_loss)} (rel={rel})"
    print("KERNEL_OK")
</pallas_src>

<mosaic_0001>
module attributes {stable_mosaic.version = 11 : i64} {
  func.func @_conv_batched_kernel(%arg0: i32, %arg1: memref<2x16x16x32xbf16, #tpu.memory_space<vmem>>, %arg2: memref<3x96x16xbf16, #tpu.memory_space<vmem>>, %arg3: memref<1x16xf32, #tpu.memory_space<vmem>>, %arg4: memref<2x256x16xbf16, #tpu.memory_space<vmem>>, %arg5: memref<512x16xf32, #tpu.memory_space<vmem>>) attributes {dimension_semantics = [#tpu.dimension_semantics<parallel>], iteration_bounds = array<i64: 1>, scalar_prefetch = 0 : i64, scratch_operands = 1 : i64, tpu.core_type = #tpu.core_type<tc>, window_params = [{pipeline_mode = #tpu.pipeline_mode<synchronous>, transform_indices = @transform_0, window_bounds = array<i64: 2, 16, 16, 32>}, {transform_indices = @transform_1, window_bounds = array<i64: 3, 96, 16>}, {transform_indices = @transform_2, window_bounds = array<i64: 1, 16>}, {transform_indices = @transform_3, window_bounds = array<i64: 2, 256, 16>}]} {
    %c0 = arith.constant 0 : index
    %c0_0 = arith.constant 0 : index
    %c0_1 = arith.constant 0 : index
    %c0_2 = arith.constant 0 : index
    %0 = vector.load %arg1[%c0, %c0_0, %c0_1, %c0_2] : memref<2x16x16x32xbf16, #tpu.memory_space<vmem>>, vector<2x16x16x32xbf16>
    %cst = arith.constant 0.000000e+00 : bf16
    %1 = vector.broadcast %cst : bf16 to vector<2x1x16x32xbf16>
    %2 = tpu.concatenate %1, %0, %1 in 1 : vector<2x1x16x32xbf16>, vector<2x16x16x32xbf16>, vector<2x1x16x32xbf16> -> vector<2x18x16x32xbf16>
    %cst_3 = arith.constant 0.000000e+00 : bf16
    %3 = vector.broadcast %cst_3 : bf16 to vector<2x18x1x32xbf16>
    %4 = tpu.concatenate %3, %2, %3 in 2 : vector<2x18x1x32xbf16>, vector<2x18x16x32xbf16>, vector<2x18x1x32xbf16> -> vector<2x18x18x32xbf16>
    %5 = vector.extract_strided_slice %4 {offsets = [0, 0, 0, 0], sizes = [2, 16, 16, 32], strides = [1, 1, 1, 1]} : vector<2x18x18x32xbf16> to vector<2x16x16x32xbf16>
    %6 = vector.extract_strided_slice %4 {offsets = [0, 0, 1, 0], sizes = [2, 16, 16, 32], strides = [1, 1, 1, 1]} : vector<2x18x18x32xbf16> to vector<2x16x16x32xbf16>
    %7 = vector.extract_strided_slice %4 {offsets = [0, 0, 2, 0], sizes = [2, 16, 16, 32], strides = [1, 1, 1, 1]} : vector<2x18x18x32xbf16> to vector<2x16x16x32xbf16>
    %8 = tpu.concatenate %5, %6, %7 in 3 : vector<2x16x16x32xbf16>, vector<2x16x16x32xbf16>, vector<2x16x16x32xbf16> -> vector<2x16x16x96xbf16>
    %9 = vector.shape_cast %8 : vector<2x16x16x96xbf16> to vector<512x96xbf16>
    %c0_4 = arith.constant 0 : index
    %c0_5 = arith.constant 0 : index
    %c0_6 = arith.constant 0 : index
    %10 = vector.load %arg2[%c0_4, %c0_5, %c0_6] : memref<3x96x16xbf16, #tpu.memory_space<vmem>>, vector<1x96x16xbf16>
    %11 = vector.shape_cast %10 : vector<1x96x16xbf16> to vector<96x16xbf16>
    %cst_7 = arith.constant dense<0.000000e+00> : vector<512x16xf32>
    %12 = tpu.matmul %9, %11, %cst_7 {dimension_numbers = #tpu.dot_dimension_numbers<[1], [0], [0], [1], [0, 0, 1, 1], [], []>} : vector<512x96xbf16>, vector<96x16xbf16>, vector<512x16xf32> -> vector<512x16xf32>
    %c0_8 = arith.constant 0 : index
    %c0_9 = arith.constant 0 : index
    %13 = vector.load %arg5[%c0_8, %c0_9] : memref<512x16xf32, #tpu.memory_space<vmem>>, vector<512x16xf32>
    tpu.vector_store %arg5[%c0_8, %c0_9], %12 {strides = array<i32>} : memref<512x16xf32, #tpu.memory_space<vmem>>, vector<512x16xf32>,
    %14 = vector.extract_strided_slice %4 {offsets = [0, 1, 0, 0], sizes = [2, 16, 16, 32], strides = [1, 1, 1, 1]} : vector<2x18x18x32xbf16> to vector<2x16x16x32xbf16>
    %15 = vector.extract_strided_slice %4 {offsets = [0, 1, 1, 0], sizes = [2, 16, 16, 32], strides = [1, 1, 1, 1]} : vector<2x18x18x32xbf16> to vector<2x16x16x32xbf16>
    %16 = vector.extract_strided_slice %4 {offsets = [0, 1, 2, 0], sizes = [2, 16, 16, 32], strides = [1, 1, 1, 1]} : vector<2x18x18x32xbf16> to vector<2x16x16x32xbf16>
    %17 = tpu.concatenate %14, %15, %16 in 3 : vector<2x16x16x32xbf16>, vector<2x16x16x32xbf16>, vector<2x16x16x32xbf16> -> vector<2x16x16x96xbf16>
    %18 = vector.shape_cast %17 : vector<2x16x16x96xbf16> to vector<512x96xbf16>
    %c1 = arith.constant 1 : index
    %c0_10 = arith.constant 0 : index
    %c0_11 = arith.constant 0 : index
    %19 = vector.load %arg2[%c1, %c0_10, %c0_11] : memref<3x96x16xbf16, #tpu.memory_space<vmem>>, vector<1x96x16xbf16>
    %20 = vector.shape_cast %19 : vector<1x96x16xbf16> to vector<96x16xbf16>
    %cst_12 = arith.constant dense<0.000000e+00> : vector<512x16xf32>
    %21 = tpu.matmul %18, %20, %cst_12 {dimension_numbers = #tpu.dot_dimension_numbers<[1], [0], [0], [1], [0, 0, 1, 1], [], []>} : vector<512x96xbf16>, vector<96x16xbf16>, vector<512x16xf32> -> vector<512x16xf32>
    %c0_13 = arith.constant 0 : index
    %c0_14 = arith.constant 0 : index
    %22 = vector.load %arg5[%c0_13, %c0_14] : memref<512x16xf32, #tpu.memory_space<vmem>>, vector<512x16xf32>
    %23 = arith.addf %22, %21 : vector<512x16xf32>
    %c0_15 = arith.constant 0 : index
    %c0_16 = arith.constant 0 : index
    %24 = vector.load %arg5[%c0_15, %c0_16] : memref<512x16xf32, #tpu.memory_space<vmem>>, vector<512x16xf32>
    tpu.vector_store %arg5[%c0_15, %c0_16], %23 {strides = array<i32>} : memref<512x16xf32, #tpu.memory_space<vmem>>, vector<512x16xf32>,
    %25 = vector.extract_strided_slice %4 {offsets = [0, 2, 0, 0], sizes = [2, 16, 16, 32], strides = [1, 1, 1, 1]} : vector<2x18x18x32xbf16> to vector<2x16x16x32xbf16>
    %26 = vector.extract_strided_slice %4 {offsets = [0, 2, 1, 0], sizes = [2, 16, 16, 32], strides = [1, 1, 1, 1]} : vector<2x18x18x32xbf16> to vector<2x16x16x32xbf16>
    %27 = vector.extract_strided_slice %4 {offsets = [0, 2, 2, 0], sizes = [2, 16, 16, 32], strides = [1, 1, 1, 1]} : vector<2x18x18x32xbf16> to vector<2x16x16x32xbf16>
    %28 = tpu.concatenate %25, %26, %27 in 3 : vector<2x16x16x32xbf16>, vector<2x16x16x32xbf16>, vector<2x16x16x32xbf16> -> vector<2x16x16x96xbf16>
    %29 = vector.shape_cast %28 : vector<2x16x16x96xbf16> to vector<512x96xbf16>
    %c2 = arith.constant 2 : index
    %c0_17 = arith.constant 0 : index
    %c0_18 = arith.constant 0 : index
    %30 = vector.load %arg2[%c2, %c0_17, %c0_18] : memref<3x96x16xbf16, #tpu.memory_space<vmem>>, vector<1x96x16xbf16>
    %31 = vector.shape_cast %30 : vector<1x96x16xbf16> to vector<96x16xbf16>
    %cst_19 = arith.constant dense<0.000000e+00> : vector<512x16xf32>
    %32 = tpu.matmul %29, %31, %cst_19 {dimension_numbers = #tpu.dot_dimension_numbers<[1], [0], [0], [1], [0, 0, 1, 1], [], []>} : vector<512x96xbf16>, vector<96x16xbf16>, vector<512x16xf32> -> vector<512x16xf32>
    %c0_20 = arith.constant 0 : index
    %c0_21 = arith.constant 0 : index
    %33 = vector.load %arg5[%c0_20, %c0_21] : memref<512x16xf32, #tpu.memory_space<vmem>>, vector<512x16xf32>
    %34 = arith.addf %33, %32 : vector<512x16xf32>
    %c0_22 = arith.constant 0 : index
    %c0_23 = arith.constant 0 : index
    %35 = vector.load %arg5[%c0_22, %c0_23] : memref<512x16xf32, #tpu.memory_space<vmem>>, vector<512x16xf32>
    tpu.vector_store %arg5[%c0_22, %c0_23], %34 {strides = array<i32>} : memref<512x16xf32, #tpu.memory_space<vmem>>, vector<512x16xf32>,
    %c0_24 = arith.constant 0 : index
    %c0_25 = arith.constant 0 : index
    %36 = vector.load %arg5[%c0_24, %c0_25] : memref<512x16xf32, #tpu.memory_space<vmem>>, vector<512x16xf32>
    %c0_26 = arith.constant 0 : index
    %c0_27 = arith.constant 0 : index
    %37 = vector.load %arg3[%c0_26, %c0_27] : memref<1x16xf32, #tpu.memory_space<vmem>>, vector<1x16xf32>
    %38 = vector.broadcast %37 : vector<1x16xf32> to vector<512x16xf32>
    %39 = arith.addf %36, %38 : vector<512x16xf32>
    %cst_28 = arith.constant 0.000000e+00 : f32
    %40 = vector.broadcast %cst_28 : f32 to vector<512x16xf32>
    %41 = arith.maximumf %39, %40 : vector<512x16xf32>
    %42 = vector.shape_cast %41 : vector<512x16xf32> to vector<2x256x16xf32>
    %43 = arith.truncf %42 : vector<2x256x16xf32> to vector<2x256x16xbf16>
    %c0_29 = arith.constant 0 : index
    %c0_30 = arith.constant 0 : index
    %c0_31 = arith.constant 0 : index
    %44 = vector.load %arg4[%c0_29, %c0_30, %c0_31] : memref<2x256x16xbf16, #tpu.memory_space<vmem>>, vector<2x256x16xbf16>
    tpu.vector_store %arg4[%c0_29, %c0_30, %c0_31], %43 {strides = array<i32>} : memref<2x256x16xbf16, #tpu.memory_space<vmem>>, vector<2x256x16xbf16>,
    return
  }
  func.func @transform_0(%arg0: i32) -> (i32, i32, i32, i32) {
    %c0_i32 = arith.constant 0 : i32
    %c0_i32_0 = arith.constant 0 : i32
    %c0_i32_1 = arith.constant 0 : i32
    %c0_i32_2 = arith.constant 0 : i32
    %c0_i32_3 = arith.constant 0 : i32
    return %c0_i32, %c0_i32_0, %c0_i32_1, %c0_i32_2 : i32, i32, i32, i32
  }
  func.func @transform_1(%arg0: i32) -> (i32, i32, i32) {
    %c0_i32 = arith.constant 0 : i32
    %c0_i32_0 = arith.constant 0 : i32
    %c0_i32_1 = arith.constant 0 : i32
    return %c0_i32, %c0_i32_0, %arg0 : i32, i32, i32
  }
  func.func @transform_2(%arg0: i32) -> (i32, i32) {
    %c0_i32 = arith.constant 0 : i32
    %c0_i32_0 = arith.constant 0 : i32
    return %c0_i32, %arg0 : i32, i32
  }
  func.func @transform_3(%arg0: i32) -> (i32, i32, i32) {
    %c0_i32 = arith.constant 0 : i32
    %c0_i32_0 = arith.constant 0 : i32
    %c0_i32_1 = arith.constant 0 : i32
    return %c0_i32, %c0_i32_0, %arg0 : i32, i32, i32
  }
}

</mosaic_0001>

<llo_original>
// kernel: tpu_custom_call.1
$region0: #{tpu_custom_call.1}
  #allocation0 [shape = 'u32[]', space=smem, size = 0x4, offset = 0x4, fixed_abs, tag = 'smem constant byte address 0x4 - core index']
  #allocation1 [shape = 'u32[144,128]{1,0:T(1,128)}', space=vmem, size = 0x12000, scoped, tag = 'internal scratch']
  #allocation2 [shape = 'f32[512,16]{1,0:T(8,128)}', space=vmem, size = 0x40000, scoped, tag = 'scratch operand']
  %s0 = inlined_call_operand.hbm [shape: bf16[2,16,16,32], index: 0, kind: input, shape index: {}]
  %s1 = inlined_call_operand.hbm [shape: bf16[3,96,16], index: 1, kind: input, shape index: {}]
  %s2 = inlined_call_operand.hbm [shape: f32[1,16], index: 2, kind: input, shape index: {}]
  %s3 = inlined_call_operand.hbm [shape: bf16[2,256,16], index: 3, kind: output, shape index: {}]
  %s4 = sld [smem:[#allocation0]]
  $region34: #{tpu_custom_call.1} parent=0
    _
  %s6 = ssub.s32 1, %s4
  %s7 = scalar_select 0, %s6, %s4
  $region1: #{tpu_custom_call.1} parent=0
    #allocation3 [shape = 'u8[131072]{0}', space=vmem, size = 0x20000, scoped, tag = 'input window, operand 0, single buffered']
    #allocation4 [shape = 's32[1]{0}', space=sflag, size = 0x4, scoped, tag = 'scoped memory for tpu_custom_call.1']
    #allocation5 [shape = 's32[1]{0}', space=sflag, size = 0x4, scoped, tag = 'scoped memory for tpu_custom_call.1']
    #allocation6 [shape = 'u8[73728]{0}', space=vmem, size = 0x12000, scoped, tag = 'input window, operand 1, single buffered']
    #allocation7 [shape = 's32[1]{0}', space=sflag, size = 0x4, scoped, tag = 'scoped memory for tpu_custom_call.1']
    #allocation8 [shape = 'u8[512]{0}', space=vmem, size = 0x400, scoped, tag = 'input window, operand 2, single buffered']
    #allocation9 [shape = 'u8[131072]{0}', space=vmem, size = 0x20000, scoped, tag = 'output window, operand 0, single buffered']
    %8 = vsyncpa [#allocation4], 0
    %9 = vsyncpa [#allocation7], 0
    %10 = vsyncpa [#allocation5], 0
    // Predicated region
    $region2: #{tpu_custom_call.1} parent=1 // pred_check
      _
    $region3: #{tpu_custom_call.1} parent=1 // pred_check_branch
      %12 = sbr.rel (0) target = $region5
    $region4: #{tpu_custom_call.1} parent=1 // pred_region
      %s14 = ssub.s32 4096, 4096
      %15 = vsyncadd [#allocation4], %s14
      %s16 = sshll.u32 [#allocation3], 4
      %s17 = int_to_ptr.vmem [resolvable:$true] %s16
      %22 = dma.hbm_to_vmem [thread:$0]  %s0, 4096, %s17, [#allocation4], 64, 64, 4
    $region5: #{tpu_custom_call.1} parent=1 // pred_fallthru
      _
    // Predicated region
    $region6: #{tpu_custom_call.1} parent=1 // pred_check
      _
    $region7: #{tpu_custom_call.1} parent=1 // pred_check_branch
      %24 = sbr.rel (0) target = $region9
    $region8: #{tpu_custom_call.1} parent=1 // pred_region
      %s26 = ssub.s32 2304, 2304
      %27 = vsyncadd [#allocation7], %s26
      %s28 = sshll.u32 [#allocation6], 4
      %s29 = int_to_ptr.vmem [resolvable:$true] %s28
      %34 = dma.hbm_to_vmem [thread:$0]  %s1, 2304, %s29, [#allocation7], 64, 64, 4
    $region9: #{tpu_custom_call.1} parent=1 // pred_fallthru
      _
    // Predicated region
    $region10: #{tpu_custom_call.1} parent=1 // pred_check
      _
    $region11: #{tpu_custom_call.1} parent=1 // pred_check_branch
      %36 = sbr.rel (0) target = $region13
    $region12: #{tpu_custom_call.1} parent=1 // pred_region
      %s38 = ssub.s32 16, 16
      %39 = vsyncadd [#allocation7], %s38
      %s41 = sshll.u32 [#allocation8], 4
      %s42 = int_to_ptr.vmem [resolvable:$true] %s41
      %44 = dma.hbm_to_vmem [thread:$0]  %s2, 16, %s42, [#allocation7]
    $region13: #{tpu_custom_call.1} parent=1 // pred_fallthru
      _
    // Predicated region
    $region14: #{tpu_custom_call.1} parent=1 // pred_check
      _
    $region15: #{tpu_custom_call.1} parent=1 // pred_check_branch
      %46 = sbr.rel (0) target = $region17
    $region16: #{tpu_custom_call.1} parent=1 // pred_region
      %47 = dma.done [#allocation4], 4096
    $region17: #{tpu_custom_call.1} parent=1 // pred_fallthru
      _
    // Predicated region
    $region18: #{tpu_custom_call.1} parent=1 // pred_check
      _
    $region19: #{tpu_custom_call.1} parent=1 // pred_check_branch
      %49 = sbr.rel (0) target = $region21
    $region20: #{tpu_custom_call.1} parent=1 // pred_region
      %50 = dma.done [#allocation7], 2304
    $region21: #{tpu_custom_call.1} parent=1 // pred_fallthru
      _
    // Predicated region
    $region22: #{tpu_custom_call.1} parent=1 // pred_check
      _
    $region23: #{tpu_custom_call.1} parent=1 // pred_check_branch
      %52 = sbr.rel (0) target = $region25
    $region24: #{tpu_custom_call.1} parent=1 // pred_region
      %53 = dma.done [#allocation7], 16
    $region25: #{tpu_custom_call.1} parent=1 // pred_fallthru
      _
    %v55 = vld [vmem:[#allocation3] sm:$0xf]
    %v56 = vld [vmem:[#allocation3 + $0x4] sm:$0xf]
    %v57 = vld [vmem:[#allocation3 + $0x8] sm:$0xf]
    %v58 = vld [vmem:[#allocation3 + $0xc] sm:$0xf]
    %v59 = vld [vmem:[#allocation3 + $0x10] sm:$0xf]
    %v60 = vld [vmem:[#allocation3 + $0x14] sm:$0xf]
    %v61 = vld [vmem:[#allocation3 + $0x18] sm:$0xf]
    %v62 = vld [vmem:[#allocation3 + $0x1c] sm:$0xf]
    %v63 = vld [vmem:[#allocation3 + $0x20] sm:$0xf]
    %v64 = vld [vmem:[#allocation3 + $0x24] sm:$0xf]
    %v65 = vld [vmem:[#allocation3 + $0x28] sm:$0xf]
    %v66 = vld [vmem:[#allocation3 + $0x2c] sm:$0xf]
    %v67 = vld [vmem:[#allocation3 + $0x30] sm:$0xf]
    %v68 = vld [vmem:[#allocation3 + $0x34] sm:$0xf]
    %v69 = vld [vmem:[#allocation3 + $0x38] sm:$0xf]
    %v70 = vld [vmem:[#allocation3 + $0x3c] sm:$0xf]
    %v71 = vld [vmem:[#allocation3 + $0x40] sm:$0xf]
    %v72 = vld [vmem:[#allocation3 + $0x44] sm:$0xf]
    %v73 = vld [vmem:[#allocation3 + $0x48] sm:$0xf]
    %v74 = vld [vmem:[#allocation3 + $0x4c] sm:$0xf]
    %v75 = vld [vmem:[#allocation3 + $0x50] sm:$0xf]
    %v76 = vld [vmem:[#allocation3 + $0x54] sm:$0xf]
    %v77 = vld [vmem:[#allocation3 + $0x58] sm:$0xf]
    %v78 = vld [vmem:[#allocation3 + $0x5c] sm:$0xf]
    %v79 = vld [vmem:[#allocation3 + $0x60] sm:$0xf]
    %v80 = vld [vmem:[#allocation3 + $0x64] sm:$0xf]
    %v81 = vld [vmem:[#allocation3 + $0x68] sm:$0xf]
    %v82 = vld [vmem:[#allocation3 + $0x6c] sm:$0xf]
    %v83 = vld [vmem:[#allocation3 + $0x70] sm:$0xf]
    %v84 = vld [vmem:[#allocation3 + $0x74] sm:$0xf]
    %v85 = vld [vmem:[#allocation3 + $0x78] sm:$0xf]
    %v86 = vld [vmem:[#allocation3 + $0x7c] sm:$0xf]
    %v87 = vld [vmem:[#allocation3 + $0x80] sm:$0xf]
    %v88 = vld [vmem:[#allocation3 + $0x84] sm:$0xf]
    %v89 = vld [vmem:[#allocation3 + $0x88] sm:$0xf]
    %v90 = vld [vmem:[#allocation3 + $0x8c] sm:$0xf]
    %v91 = vld [vmem:[#allocation3 + $0x90] sm:$0xf]
    %v92 = vld [vmem:[#allocation3 + $0x94] sm:$0xf]
    %v93 = vld [vmem:[#allocation3 + $0x98] sm:$0xf]
    %v94 = vld [vmem:[#allocation3 + $0x9c] sm:$0xf]
    %v95 = vld [vmem:[#allocation3 + $0xa0] sm:$0xf]
    %v96 = vld [vmem:[#allocation3 + $0xa4] sm:$0xf]
    %v97 = vld [vmem:[#allocation3 + $0xa8] sm:$0xf]
    %v98 = vld [vmem:[#allocation3 + $0xac] sm:$0xf]
    %v99 = vld [vmem:[#allocation3 + $0xb0] sm:$0xf]
    %v100 = vld [vmem:[#allocation3 + $0xb4] sm:$0xf]
    %v101 = vld [vmem:[#allocation3 + $0xb8] sm:$0xf]
    %v102 = vld [vmem:[#allocation3 + $0xbc] sm:$0xf]
    %v103 = vld [vmem:[#allocation3 + $0xc0] sm:$0xf]
    %v104 = vld [vmem:[#allocation3 + $0xc4] sm:$0xf]
    %v105 = vld [vmem:[#allocation3 + $0xc8] sm:$0xf]
    %v106 = vld [vmem:[#allocation3 + $0xcc] sm:$0xf]
    %v107 = vld [vmem:[#allocation3 + $0xd0] sm:$0xf]
    %v108 = vld [vmem:[#allocation3 + $0xd4] sm:$0xf]
    %v109 = vld [vmem:[#allocation3 + $0xd8] sm:$0xf]
    %v110 = vld [vmem:[#allocation3 + $0xdc] sm:$0xf]
    %v111 = vld [vmem:[#allocation3 + $0xe0] sm:$0xf]
    %v112 = vld [vmem:[#allocation3 + $0xe4] sm:$0xf]
    %v113 = vld [vmem:[#allocation3 + $0xe8] sm:$0xf]
    %v114 = vld [vmem:[#allocation3 + $0xec] sm:$0xf]
    %v115 = vld [vmem:[#allocation3 + $0xf0] sm:$0xf]
    %v116 = vld [vmem:[#allocation3 + $0xf4] sm:$0xf]
    %v117 = vld [vmem:[#allocation3 + $0xf8] sm:$0xf]
    %v118 = vld [vmem:[#allocation3 + $0xfc] sm:$0xf]
    %v183 = vunpack.c.l.b16 %v55
    %v184 = vunpack.c.l.b16 %v56
    %v185 = vunpack.c.l.b16 %v57
    %v186 = vunpack.c.l.b16 %v58
    %v187 = vunpack.c.l.b16 %v59
    %v188 = vunpack.c.l.b16 %v60
    %v189 = vunpack.c.l.b16 %v61
    %v190 = vunpack.c.l.b16 %v62
    %v191 = vunpack.c.l.b16 %v63
    %v192 = vunpack.c.l.b16 %v64
    %v193 = vunpack.c.l.b16 %v65
    %v194 = vunpack.c.l.b16 %v66
    %v195 = vunpack.c.l.b16 %v67
    %v196 = vunpack.c.l.b16 %v68
    %v197 = vunpack.c.l.b16 %v69
    %v198 = vunpack.c.l.b16 %v70
    %v199 = vunpack.c.l.b16 %v71
    %v200 = vunpack.c.l.b16 %v72
    %v201 = vunpack.c.l.b16 %v73
    %v202 = vunpack.c.l.b16 %v74
    %v203 = vunpack.c.l.b16 %v75
    %v204 = vunpack.c.l.b16 %v76
    %v205 = vunpack.c.l.b16 %v77
    %v206 = vunpack.c.l.b16 %v78
    %v207 = vunpack.c.l.b16 %v79
    %v208 = vunpack.c.l.b16 %v80
    %v209 = vunpack.c.l.b16 %v81
    %v210 = vunpack.c.l.b16 %v82
    %v211 = vunpack.c.l.b16 %v83
    %v212 = vunpack.c.l.b16 %v84
    %v213 = vunpack.c.l.b16 %v85
    %v214 = vunpack.c.l.b16 %v86
    %v215 = vunpack.c.l.b16 %v87
    %v216 = vunpack.c.l.b16 %v88
    %v217 = vunpack.c.l.b16 %v89
    %v218 = vunpack.c.l.b16 %v90
    %v219 = vunpack.c.l.b16 %v91
    %v220 = vunpack.c.l.b16 %v92
    %v221 = vunpack.c.l.b16 %v93
    %v222 = vunpack.c.l.b16 %v94
    %v223 = vunpack.c.l.b16 %v95
    %v224 = vunpack.c.l.b16 %v96
    %v225 = vunpack.c.l.b16 %v97
    %v226 = vunpack.c.l.b16 %v98
    %v227 = vunpack.c.l.b16 %v99
    %v228 = vunpack.c.l.b16 %v100
    %v229 = vunpack.c.l.b16 %v101
    %v230 = vunpack.c.l.b16 %v102
    %v231 = vunpack.c.l.b16 %v103
    %v232 = vunpack.c.l.b16 %v104
    %v233 = vunpack.c.l.b16 %v105
    %v234 = vunpack.c.l.b16 %v106
    %v235 = vunpack.c.l.b16 %v107
    %v236 = vunpack.c.l.b16 %v108
    %v237 = vunpack.c.l.b16 %v109
    %v238 = vunpack.c.l.b16 %v110
    %v239 = vunpack.c.l.b16 %v111
    %v240 = vunpack.c.l.b16 %v112
    %v241 = vunpack.c.l.b16 %v113
    %v242 = vunpack.c.l.b16 %v114
    %v243 = vunpack.c.l.b16 %v115
    %v244 = vunpack.c.l.b16 %v116
    %v245 = vunpack.c.l.b16 %v117
    %v246 = vunpack.c.l.b16 %v118
    %v247 = vpack.c.b16 %v184, %v183
    %v248 = vpack.c.b16 %v186, %v185
    %v249 = vpack.c.b16 %v188, %v187
    %v250 = vpack.c.b16 %v190, %v189
    %v251 = vpack.c.b16 %v192, %v191
    %v252 = vpack.c.b16 %v194, %v193
    %v253 = vpack.c.b16 %v196, %v195
    %v254 = vpack.c.b16 %v198, %v197
    %v255 = vpack.c.b16 %v200, %v199
    %v256 = vpack.c.b16 %v202, %v201
    %v257 = vpack.c.b16 %v204, %v203
    %v258 = vpack.c.b16 %v206, %v205
    %v259 = vpack.c.b16 %v208, %v207
    %v260 = vpack.c.b16 %v210, %v209
    %v261 = vpack.c.b16 %v212, %v211
    %v262 = vpack.c.b16 %v214, %v213
    %v263 = vpack.c.b16 %v216, %v215
    %v264 = vpack.c.b16 %v218, %v217
    %v265 = vpack.c.b16 %v220, %v219
    %v266 = vpack.c.b16 %v222, %v221
    %v267 = vpack.c.b16 %v224, %v223
    %v268 = vpack.c.b16 %v226, %v225
    %v269 = vpack.c.b16 %v228, %v227
    %v270 = vpack.c.b16 %v230, %v229
    %v271 = vpack.c.b16 %v232, %v231
    %v272 = vpack.c.b16 %v234, %v233
    %v273 = vpack.c.b16 %v236, %v235
    %v274 = vpack.c.b16 %v238, %v237
    %v275 = vpack.c.b16 %v240, %v239
    %v276 = vpack.c.b16 %v242, %v241
    %v277 = vpack.c.b16 %v244, %v243
    %v278 = vpack.c.b16 %v246, %v245
    %v280 = vshrl.u32 0, 16
    %v282 = vrot.slane %v280, 7
    %v283 = vshll.u32 0, 16
    %v285 = vor.u32 %v282, %v283
    %v287 = vshrl.u32 %v247, 16
    %v289 = vrot.slane %v287, 7
    %v290 = vshll.u32 %v247, 16
    %v292 = vor.u32 %v289, %v290
    %v294 = vshrl.u32 %v248, 16
    %v296 = vrot.slane %v294, 7
    %v297 = vshll.u32 %v248, 16
    %v299 = vor.u32 %v296, %v297
    %v301 = vshrl.u32 %v249, 16
    %v303 = vrot.slane %v301, 7
    %v304 = vshll.u32 %v249, 16
    %v306 = vor.u32 %v303, %v304
    %v308 = vshrl.u32 %v250, 16
    %v310 = vrot.slane %v308, 7
    %v311 = vshll.u32 %v250, 16
    %v313 = vor.u32 %v310, %v311
    %v315 = vshrl.u32 %v251, 16
    %v317 = vrot.slane %v315, 7
    %v318 = vshll.u32 %v251, 16
    %v320 = vor.u32 %v317, %v318
    %v322 = vshrl.u32 %v252, 16
    %v324 = vrot.slane %v322, 7
    %v325 = vshll.u32 %v252, 16
    %v327 = vor.u32 %v324, %v325
    %v329 = vshrl.u32 %v253, 16
    %v331 = vrot.slane %v329, 7
    %v332 = vshll.u32 %v253, 16
    %v334 = vor.u32 %v331, %v332
    %v336 = vshrl.u32 %v254, 16
    %v338 = vrot.slane %v336, 7
    %v339 = vshll.u32 %v254, 16
    %v341 = vor.u32 %v338, %v339
    %v343 = vshrl.u32 %v255, 16
    %v345 = vrot.slane %v343, 7
    %v346 = vshll.u32 %v255, 16
    %v348 = vor.u32 %v345, %v346
    %v350 = vshrl.u32 %v256, 16
    %v352 = vrot.slane %v350, 7
    %v353 = vshll.u32 %v256, 16
    %v355 = vor.u32 %v352, %v353
    %v357 = vshrl.u32 %v257, 16
    %v359 = vrot.slane %v357, 7
    %v360 = vshll.u32 %v257, 16
    %v362 = vor.u32 %v359, %v360
    %v364 = vshrl.u32 %v258, 16
    %v366 = vrot.slane %v364, 7
    %v367 = vshll.u32 %v258, 16
    %v369 = vor.u32 %v366, %v367
    %v371 = vshrl.u32 %v259, 16
    %v373 = vrot.slane %v371, 7
    %v374 = vshll.u32 %v259, 16
    %v376 = vor.u32 %v373, %v374
    %v378 = vshrl.u32 %v260, 16
    %v380 = vrot.slane %v378, 7
    %v381 = vshll.u32 %v260, 16
    %v383 = vor.u32 %v380, %v381
    %v385 = vshrl.u32 %v261, 16
    %v387 = vrot.slane %v385, 7
    %v388 = vshll.u32 %v261, 16
    %v390 = vor.u32 %v387, %v388
    %v392 = vshrl.u32 %v262, 16
    %v394 = vrot.slane %v392, 7
    %v395 = vshll.u32 %v262, 16
    %v397 = vor.u32 %v394, %v395
    %v399 = vshrl.u32 %v263, 16
    %v401 = vrot.slane %v399, 7
    %v402 = vshll.u32 %v263, 16
    %v404 = vor.u32 %v401, %v402
    %v406 = vshrl.u32 %v264, 16
    %v408 = vrot.slane %v406, 7
    %v409 = vshll.u32 %v264, 16
    %v411 = vor.u32 %v408, %v409
    %v413 = vshrl.u32 %v265, 16
    %v415 = vrot.slane %v413, 7
    %v416 = vshll.u32 %v265, 16
    %v418 = vor.u32 %v415, %v416
    %v420 = vshrl.u32 %v266, 16
    %v422 = vrot.slane %v420, 7
    %v423 = vshll.u32 %v266, 16
    %v425 = vor.u32 %v422, %v423
    %v427 = vshrl.u32 %v267, 16
    %v429 = vrot.slane %v427, 7
    %v430 = vshll.u32 %v267, 16
    %v432 = vor.u32 %v429, %v430
    %v434 = vshrl.u32 %v268, 16
    %v436 = vrot.slane %v434, 7
    %v437 = vshll.u32 %v268, 16
    %v439 = vor.u32 %v436, %v437
    %v441 = vshrl.u32 %v269, 16
    %v443 = vrot.slane %v441, 7
    %v444 = vshll.u32 %v269, 16
    %v446 = vor.u32 %v443, %v444
    %v448 = vshrl.u32 %v270, 16
    %v450 = vrot.slane %v448, 7
    %v451 = vshll.u32 %v270, 16
    %v453 = vor.u32 %v450, %v451
    %v455 = vshrl.u32 %v271, 16
    %v457 = vrot.slane %v455, 7
    %v458 = vshll.u32 %v271, 16
    %v460 = vor.u32 %v457, %v458
    %v462 = vshrl.u32 %v272, 16
    %v464 = vrot.slane %v462, 7
    %v465 = vshll.u32 %v272, 16
    %v467 = vor.u32 %v464, %v465
    %v469 = vshrl.u32 %v273, 16
    %v471 = vrot.slane %v469, 7
    %v472 = vshll.u32 %v273, 16
    %v474 = vor.u32 %v471, %v472
    %v476 = vshrl.u32 %v274, 16
    %v478 = vrot.slane %v476, 7
    %v479 = vshll.u32 %v274, 16
    %v481 = vor.u32 %v478, %v479
    %v483 = vshrl.u32 %v275, 16
    %v485 = vrot.slane %v483, 7
    %v486 = vshll.u32 %v275, 16
    %v488 = vor.u32 %v485, %v486
    %v490 = vshrl.u32 %v276, 16
    %v492 = vrot.slane %v490, 7
    %v493 = vshll.u32 %v276, 16
    %v495 = vor.u32 %v492, %v493
    %v497 = vshrl.u32 %v277, 16
    %v499 = vrot.slane %v497, 7
    %v500 = vshll.u32 %v277, 16
    %v502 = vor.u32 %v499, %v500
    %v504 = vshrl.u32 %v278, 16
    %v506 = vrot.slane %v504, 7
    %v507 = vshll.u32 %v278, 16
    %v509 = vor.u32 %v506, %v507
    %vm576 = vcmask 1040384
    %vm577 = vsmask.f32 256
    %vm578 = vmand %vm576, %vm577
    %v579 = vsel %vm578, 0, %v285
    %v580 = vsel %vm578, 0, %v292
    %v581 = vsel %vm578, 0, %v299
    %v582 = vsel %vm578, 0, %v306
    %v583 = vsel %vm578, 0, %v313
    %v584 = vsel %vm578, 0, %v320
    %v585 = vsel %vm578, 0, %v327
    %v586 = vsel %vm578, 0, %v334
    %v587 = vsel %vm578, 0, %v341
    %v588 = vsel %vm578, 0, %v348
    %v589 = vsel %vm578, 0, %v355
    %v590 = vsel %vm578, 0, %v362
    %v591 = vsel %vm578, 0, %v369
    %v592 = vsel %vm578, 0, %v376
    %v593 = vsel %vm578, 0, %v383
    %v594 = vsel %vm578, 0, %v390
    %v595 = vsel %vm578, 0, %v397
    %v596 = vsel %vm578, 0, %v404
    %v597 = vsel %vm578, 0, %v411
    %v598 = vsel %vm578, 0, %v418
    %v599 = vsel %vm578, 0, %v425
    %v600 = vsel %vm578, 0, %v432
    %v601 = vsel %vm578, 0, %v439
    %v602 = vsel %vm578, 0, %v446
    %v603 = vsel %vm578, 0, %v453
    %v604 = vsel %vm578, 0, %v460
    %v605 = vsel %vm578, 0, %v467
    %v606 = vsel %vm578, 0, %v474
    %v607 = vsel %vm578, 0, %v481
    %v608 = vsel %vm578, 0, %v488
    %v609 = vsel %vm578, 0, %v495
    %v610 = vsel %vm578, 0, %v502
    %v611 = vsel %vm578, 0, %v509
    %v612 = vsel %vm578, %v282, 0
    %v613 = vsel %vm578, %v289, 0
    %v614 = vsel %vm578, %v296, 0
    %v615 = vsel %vm578, %v303, 0
    %v616 = vsel %vm578, %v310, 0
    %v617 = vsel %vm578, %v317, 0
    %v618 = vsel %vm578, %v324, 0
    %v619 = vsel %vm578, %v331, 0
    %v620 = vsel %vm578, %v338, 0
    %v621 = vsel %vm578, %v345, 0
    %v622 = vsel %vm578, %v352, 0
    %v623 = vsel %vm578, %v359, 0
    %v624 = vsel %vm578, %v366, 0
    %v625 = vsel %vm578, %v373, 0
    %v626 = vsel %vm578, %v380, 0
    %v627 = vsel %vm578, %v387, 0
    %v628 = vsel %vm578, %v394, 0
    %v629 = vsel %vm578, %v401, 0
    %v630 = vsel %vm578, %v408, 0
    %v631 = vsel %vm578, %v415, 0
    %v632 = vsel %vm578, %v422, 0
    %v633 = vsel %vm578, %v429, 0
    %v634 = vsel %vm578, %v436, 0
    %v635 = vsel %vm578, %v443, 0
    %v636 = vsel %vm578, %v450, 0
    %v637 = vsel %vm578, %v457, 0
    %v638 = vsel %vm578, %v464, 0
    %v639 = vsel %vm578, %v471, 0
    %v640 = vsel %vm578, %v478, 0
    %v641 = vsel %vm578, %v485, 0
    %v642 = vsel %vm578, %v492, 0
    %v643 = vsel %vm578, %v499, 0
    %v644 = vsel %vm578, %v506, 0
    %vm645 = vsmask.f32 7424
    %v647 = vshrl.u32 %v579, 16
    %v649 = vshll.u32 %v579, 16
    %v651 = vrot.slane %v649, 1
    %v652 = vor.u32 %v647, %v651
    %v654 = vshll.u32 %v612, 16
    %v656 = vrot.slane %v654, 1
    %v657 = vsel %vm645, %v652, %v656
    %v659 = vshrl.u32 %v580, 16
    %v661 = vshll.u32 %v580, 16
    %v663 = vrot.slane %v661, 1
    %v664 = vor.u32 %v659, %v663
    %v666 = vshll.u32 %v613, 16
    %v668 = vrot.slane %v666, 1
    %v669 = vsel %vm645, %v664, %v668
    %v671 = vshrl.u32 %v581, 16
    %v673 = vshll.u32 %v581, 16
    %v675 = vrot.slane %v673, 1
    %v676 = vor.u32 %v671, %v675
    %v678 = vshll.u32 %v614, 16
    %v680 = vrot.slane %v678, 1
    %v681 = vsel %vm645, %v676, %v680
    %v683 = vshrl.u32 %v582, 16
    %v685 = vshll.u32 %v582, 16
    %v687 = vrot.slane %v685, 1
    %v688 = vor.u32 %v683, %v687
    %v690 = vshll.u32 %v615, 16
    %v692 = vrot.slane %v690, 1
    %v693 = vsel %vm645, %v688, %v692
    %v695 = vshrl.u32 %v583, 16
    %v697 = vshll.u32 %v583, 16
    %v699 = vrot.slane %v697, 1
    %v700 = vor.u32 %v695, %v699
    %v702 = vshll.u32 %v616, 16
    %v704 = vrot.slane %v702, 1
    %v705 = vsel %vm645, %v700, %v704
    %v707 = vshrl.u32 %v584, 16
    %v709 = vshll.u32 %v584, 16
    %v711 = vrot.slane %v709, 1
    %v712 = vor.u32 %v707, %v711
    %v714 = vshll.u32 %v617, 16
    %v716 = vrot.slane %v714, 1
    %v717 = vsel %vm645, %v712, %v716
    %v719 = vshrl.u32 %v585, 16
    %v721 = vshll.u32 %v585, 16
    %v723 = vrot.slane %v721, 1
    %v724 = vor.u32 %v719, %v723
    %v726 = vshll.u32 %v618, 16
    %v728 = vrot.slane %v726, 1
    %v729 = vsel %vm645, %v724, %v728
    %v731 = vshrl.u32 %v586, 16
    %v733 = vshll.u32 %v586, 16
    %v735 = vrot.slane %v733, 1
    %v736 = vor.u32 %v731, %v735
    %v738 = vshll.u32 %v619, 16
    %v740 = vrot.slane %v738, 1
    %v741 = vsel %vm645, %v736, %v740
    %v743 = vshrl.u32 %v587, 16
    %v745 = vshll.u32 %v587, 16
    %v747 = vrot.slane %v745, 1
    %v748 = vor.u32 %v743, %v747
    %v750 = vshll.u32 %v620, 16
    %v752 = vrot.slane %v750, 1
    %v753 = vsel %vm645, %v748, %v752
    %v755 = vshrl.u32 %v588, 16
    %v757 = vshll.u32 %v588, 16
    %v759 = vrot.slane %v757, 1
    %v760 = vor.u32 %v755, %v759
    %v762 = vshll.u32 %v621, 16
    %v764 = vrot.slane %v762, 1
    %v765 = vsel %vm645, %v760, %v764
    %v767 = vshrl.u32 %v589, 16
    %v769 = vshll.u32 %v589, 16
    %v771 = vrot.slane %v769, 1
    %v772 = vor.u32 %v767, %v771
    %v774 = vshll.u32 %v622, 16
    %v776 = vrot.slane %v774, 1
    %v777 = vsel %vm645, %v772, %v776
    %v779 = vshrl.u32 %v590, 16
    %v781 = vshll.u32 %v590, 16
    %v783 = vrot.slane %v781, 1
    %v784 = vor.u32 %v779, %v783
    %v786 = vshll.u32 %v623, 16
    %v788 = vrot.slane %v786, 1
    %v789 = vsel %vm645, %v784, %v788
    %v791 = vshrl.u32 %v591, 16
    %v793 = vshll.u32 %v591, 16
    %v795 = vrot.slane %v793, 1
    %v796 = vor.u32 %v791, %v795
    %v798 = vshll.u32 %v624, 16
    %v800 = vrot.slane %v798, 1
    %v801 = vsel %vm645, %v796, %v800
    %v803 = vshrl.u32 %v592, 16
    %v805 = vshll.u32 %v592, 16
    %v807 = vrot.slane %v805, 1
    %v808 = vor.u32 %v803, %v807
    %v810 = vshll.u32 %v625, 16
    %v812 = vrot.slane %v810, 1
    %v813 = vsel %vm645, %v808, %v812
    %v815 = vshrl.u32 %v593, 16
    %v817 = vshll.u32 %v593, 16
    %v819 = vrot.slane %v817, 1
    %v820 = vor.u32 %v815, %v819
    %v822 = vshll.u32 %v626, 16
    %v824 = vrot.slane %v822, 1
    %v825 = vsel %vm645, %v820, %v824
    %v827 = vshrl.u32 %v594, 16
    %v829 = vshll.u32 %v594, 16
    %v831 = vrot.slane %v829, 1
    %v832 = vor.u32 %v827, %v831
    %v834 = vshll.u32 %v627, 16
    %v836 = vrot.slane %v834, 1
    %v837 = vsel %vm645, %v832, %v836
    %v839 = vshrl.u32 %v596, 16
    %v841 = vshll.u32 %v596, 16
    %v843 = vrot.slane %v841, 1
    %v844 = vor.u32 %v839, %v843
    %v846 = vshll.u32 %v629, 16
    %v848 = vrot.slane %v846, 1
    %v849 = vsel %vm645, %v844, %v848
    %v851 = vshrl.u32 %v597, 16
    %v853 = vshll.u32 %v597, 16
    %v855 = vrot.slane %v853, 1
    %v856 = vor.u32 %v851, %v855
    %v858 = vshll.u32 %v630, 16
    %v860 = vrot.slane %v858, 1
    %v861 = vsel %vm645, %v856, %v860
    %v863 = vshrl.u32 %v598, 16
    %v865 = vshll.u32 %v598, 16
    %v867 = vrot.slane %v865, 1
    %v868 = vor.u32 %v863, %v867
    %v870 = vshll.u32 %v631, 16
    %v872 = vrot.slane %v870, 1
    %v873 = vsel %vm645, %v868, %v872
    %v875 = vshrl.u32 %v599, 16
    %v877 = vshll.u32 %v599, 16
    %v879 = vrot.slane %v877, 1
    %v880 = vor.u32 %v875, %v879
    %v882 = vshll.u32 %v632, 16
    %v884 = vrot.slane %v882, 1
    %v885 = vsel %vm645, %v880, %v884
    %v887 = vshrl.u32 %v600, 16
    %v889 = vshll.u32 %v600, 16
    %v891 = vrot.slane %v889, 1
    %v892 = vor.u32 %v887, %v891
    %v894 = vshll.u32 %v633, 16
    %v896 = vrot.slane %v894, 1
    %v897 = vsel %vm645, %v892, %v896
    %v899 = vshrl.u32 %v601, 16
    %v901 = vshll.u32 %v601, 16
    %v903 = vrot.slane %v901, 1
    %v904 = vor.u32 %v899, %v903
    %v906 = vshll.u32 %v634, 16
    %v908 = vrot.slane %v906, 1
    %v909 = vsel %vm645, %v904, %v908
    %v911 = vshrl.u32 %v602, 16
    %v913 = vshll.u32 %v602, 16
    %v915 = vrot.slane %v913, 1
    %v916 = vor.u32 %v911, %v915
    %v918 = vshll.u32 %v635, 16
    %v920 = vrot.slane %v918, 1
    %v921 = vsel %vm645, %v916, %v920
    %v923 = vshrl.u32 %v603, 16
    %v925 = vshll.u32 %v603, 16
    %v927 = vrot.slane %v925, 1
    %v928 = vor.u32 %v923, %v927
    %v930 = vshll.u32 %v636, 16
    %v932 = vrot.slane %v930, 1
    %v933 = vsel %vm645, %v928, %v932
    %v935 = vshrl.u32 %v604, 16
    %v937 = vshll.u32 %v604, 16
    %v939 = vrot.slane %v937, 1
    %v940 = vor.u32 %v935, %v939
    %v942 = vshll.u32 %v637, 16
    %v944 = vrot.slane %v942, 1
    %v945 = vsel %vm645, %v940, %v944
    %v947 = vshrl.u32 %v605, 16
    %v949 = vshll.u32 %v605, 16
    %v951 = vrot.slane %v949, 1
    %v952 = vor.u32 %v947, %v951
    %v954 = vshll.u32 %v638, 16
    %v956 = vrot.slane %v954, 1
    %v957 = vsel %vm645, %v952, %v956
    %v959 = vshrl.u32 %v606, 16
    %v961 = vshll.u32 %v606, 16
    %v963 = vrot.slane %v961, 1
    %v964 = vor.u32 %v959, %v963
    %v966 = vshll.u32 %v639, 16
    %v968 = vrot.slane %v966, 1
    %v969 = vsel %vm645, %v964, %v968
    %v971 = vshrl.u32 %v607, 16
    %v973 = vshll.u32 %v607, 16
    %v975 = vrot.slane %v973, 1
    %v976 = vor.u32 %v971, %v975
    %v978 = vshll.u32 %v640, 16
    %v980 = vrot.slane %v978, 1
    %v981 = vsel %vm645, %v976, %v980
    %v983 = vshrl.u32 %v608, 16
    %v985 = vshll.u32 %v608, 16
    %v987 = vrot.slane %v985, 1
    %v988 = vor.u32 %v983, %v987
    %v990 = vshll.u32 %v641, 16
    %v992 = vrot.slane %v990, 1
    %v993 = vsel %vm645, %v988, %v992
    %v995 = vshrl.u32 %v609, 16
    %v997 = vshll.u32 %v609, 16
    %v999 = vrot.slane %v997, 1
    %v1000 = vor.u32 %v995, %v999
    %v1002 = vshll.u32 %v642, 16
    %v1004 = vrot.slane %v1002, 1
    %v1005 = vsel %vm645, %v1000, %v1004
    %v1007 = vshrl.u32 %v610, 16
    %v1009 = vshll.u32 %v610, 16
    %v1011 = vrot.slane %v1009, 1
    %v1012 = vor.u32 %v1007, %v1011
    %v1014 = vshll.u32 %v643, 16
    %v1016 = vrot.slane %v1014, 1
    %v1017 = vsel %vm645, %v1012, %v1016
    %1018 = vrot.lane.b32.xlu0 %v657, 32
    %v1019 = vpop.permute.xlu0 %1018
    %1020 = vrot.lane.b32.xlu0 %v669, 32
    %v1021 = vpop.permute.xlu0 %1020
    %1022 = vrot.lane.b32.xlu0 %v681, 32
    %v1023 = vpop.permute.xlu0 %1022
    %1024 = vrot.lane.b32.xlu0 %v693, 32
    %v1025 = vpop.permute.xlu0 %1024
    %1026 = vrot.lane.b32.xlu0 %v705, 32
    %v1027 = vpop.permute.xlu0 %1026
    %1028 = vrot.lane.b32.xlu0 %v717, 32
    %v1029 = vpop.permute.xlu0 %1028
    %1030 = vrot.lane.b32.xlu0 %v729, 32
    %v1031 = vpop.permute.xlu0 %1030
    %1032 = vrot.lane.b32.xlu0 %v741, 32
    %v1033 = vpop.permute.xlu0 %1032
    %1034 = vrot.lane.b32.xlu0 %v753, 32
    %v1035 = vpop.permute.xlu0 %1034
    %1036 = vrot.lane.b32.xlu0 %v765, 32
    %v1037 = vpop.permute.xlu0 %1036
    %1038 = vrot.lane.b32.xlu0 %v777, 32
    %v1039 = vpop.permute.xlu0 %1038
    %1040 = vrot.lane.b32.xlu0 %v789, 32
    %v1041 = vpop.permute.xlu0 %1040
    %1042 = vrot.lane.b32.xlu0 %v801, 32
    %v1043 = vpop.permute.xlu0 %1042
    %1044 = vrot.lane.b32.xlu0 %v813, 32
    %v1045 = vpop.permute.xlu0 %1044
    %1046 = vrot.lane.b32.xlu0 %v825, 32
    %v1047 = vpop.permute.xlu0 %1046
    %1048 = vrot.lane.b32.xlu0 %v837, 32
    %v1049 = vpop.permute.xlu0 %1048
    %1050 = vrot.lane.b32.xlu0 %v849, 32
    %v1051 = vpop.permute.xlu0 %1050
    %1052 = vrot.lane.b32.xlu0 %v861, 32
    %v1053 = vpop.permute.xlu0 %1052
    %1054 = vrot.lane.b32.xlu0 %v873, 32
    %v1055 = vpop.permute.xlu0 %1054
    %1056 = vrot.lane.b32.xlu0 %v885, 32
    %v1057 = vpop.permute.xlu0 %1056
    %1058 = vrot.lane.b32.xlu0 %v897, 32
    %v1059 = vpop.permute.xlu0 %1058
    %1060 = vrot.lane.b32.xlu0 %v909, 32
    %v1061 = vpop.permute.xlu0 %1060
    %1062 = vrot.lane.b32.xlu0 %v921, 32
    %v1063 = vpop.permute.xlu0 %1062
    %1064 = vrot.lane.b32.xlu0 %v933, 32
    %v1065 = vpop.permute.xlu0 %1064
    %1066 = vrot.lane.b32.xlu0 %v945, 32
    %v1067 = vpop.permute.xlu0 %1066
    %1068 = vrot.lane.b32.xlu0 %v957, 32
    %v1069 = vpop.permute.xlu0 %1068
    %1070 = vrot.lane.b32.xlu0 %v969, 32
    %v1071 = vpop.permute.xlu0 %1070
    %1072 = vrot.lane.b32.xlu0 %v981, 32
    %v1073 = vpop.permute.xlu0 %1072
    %1074 = vrot.lane.b32.xlu0 %v993, 32
    %v1075 = vpop.permute.xlu0 %1074
    %1076 = vrot.lane.b32.xlu0 %v1005, 32
    %v1077 = vpop.permute.xlu0 %1076
    %1078 = vrot.lane.b32.xlu0 %v1017, 32
    %v1079 = vpop.permute.xlu0 %1078
    %vm1142 = vcmask 1046528
    %v1143 = vrot.slane %v579, 1
    %v1144 = vrot.slane %v612, 1
    %v1145 = vsel %vm1142, %v1143, %v1144
    %v1146 = vrot.slane %v580, 1
    %v1147 = vrot.slane %v613, 1
    %v1148 = vsel %vm1142, %v1146, %v1147
    %v1149 = vrot.slane %v581, 1
    %v1150 = vrot.slane %v614, 1
    %v1151 = vsel %vm1142, %v1149, %v1150
    %v1152 = vrot.slane %v582, 1
    %v1153 = vrot.slane %v615, 1
    %v1154 = vsel %vm1142, %v1152, %v1153
    %v1155 = vrot.slane %v583, 1
    %v1156 = vrot.slane %v616, 1
    %v1157 = vsel %vm1142, %v1155, %v1156
    %v1158 = vrot.slane %v584, 1
    %v1159 = vrot.slane %v617, 1
    %v1160 = vsel %vm1142, %v1158, %v1159
    %v1161 = vrot.slane %v585, 1
    %v1162 = vrot.slane %v618, 1
    %v1163 = vsel %vm1142, %v1161, %v1162
    %v1164 = vrot.slane %v586, 1
    %v1165 = vrot.slane %v619, 1
    %v1166 = vsel %vm1142, %v1164, %v1165
    %v1167 = vrot.slane %v587, 1
    %v1168 = vrot.slane %v620, 1
    %v1169 = vsel %vm1142, %v1167, %v1168
    %v1170 = vrot.slane %v588, 1
    %v1171 = vrot.slane %v621, 1
    %v1172 = vsel %vm1142, %v1170, %v1171
    %v1173 = vrot.slane %v589, 1
    %v1174 = vrot.slane %v622, 1
    %v1175 = vsel %vm1142, %v1173, %v1174
    %v1176 = vrot.slane %v590, 1
    %v1177 = vrot.slane %v623, 1
    %v1178 = vsel %vm1142, %v1176, %v1177
    %v1179 = vrot.slane %v591, 1
    %v1180 = vrot.slane %v624, 1
    %v1181 = vsel %vm1142, %v1179, %v1180
    %v1182 = vrot.slane %v592, 1
    %v1183 = vrot.slane %v625, 1
    %v1184 = vsel %vm1142, %v1182, %v1183
    %v1185 = vrot.slane %v593, 1
    %v1186 = vrot.slane %v626, 1
    %v1187 = vsel %vm1142, %v1185, %v1186
    %v1188 = vrot.slane %v594, 1
    %v1189 = vrot.slane %v627, 1
    %v1190 = vsel %vm1142, %v1188, %v1189
    %v1191 = vrot.slane %v596, 1
    %v1192 = vrot.slane %v629, 1
    %v1193 = vsel %vm1142, %v1191, %v1192
    %v1194 = vrot.slane %v597, 1
    %v1195 = vrot.slane %v630, 1
    %v1196 = vsel %vm1142, %v1194, %v1195
    %v1197 = vrot.slane %v598, 1
    %v1198 = vrot.slane %v631, 1
    %v1199 = vsel %vm1142, %v1197, %v1198
    %v1200 = vrot.slane %v599, 1
    %v1201 = vrot.slane %v632, 1
    %v1202 = vsel %vm1142, %v1200, %v1201
    %v1203 = vrot.slane %v600, 1
    %v1204 = vrot.slane %v633, 1
    %v1205 = vsel %vm1142, %v1203, %v1204
    %v1206 = vrot.slane %v601, 1
    %v1207 = vrot.slane %v634, 1
    %v1208 = vsel %vm1142, %v1206, %v1207
    %v1209 = vrot.slane %v602, 1
    %v1210 = vrot.slane %v635, 1
    %v1211 = vsel %vm1142, %v1209, %v1210
    %v1212 = vrot.slane %v603, 1
    %v1213 = vrot.slane %v636, 1
    %v1214 = vsel %vm1142, %v1212, %v1213
    %v1215 = vrot.slane %v604, 1
    %v1216 = vrot.slane %v637, 1
    %v1217 = vsel %vm1142, %v1215, %v1216
    %v1218 = vrot.slane %v605, 1
    %v1219 = vrot.slane %v638, 1
    %v1220 = vsel %vm1142, %v1218, %v1219
    %v1221 = vrot.slane %v606, 1
    %v1222 = vrot.slane %v639, 1
    %v1223 = vsel %vm1142, %v1221, %v1222
    %v1224 = vrot.slane %v607, 1
    %v1225 = vrot.slane %v640, 1
    %v1226 = vsel %vm1142, %v1224, %v1225
    %v1227 = vrot.slane %v608, 1
    %v1228 = vrot.slane %v641, 1
    %v1229 = vsel %vm1142, %v1227, %v1228
    %v1230 = vrot.slane %v609, 1
    %v1231 = vrot.slane %v642, 1
    %v1232 = vsel %vm1142, %v1230, %v1231
    %v1233 = vrot.slane %v610, 1
    %v1234 = vrot.slane %v643, 1
    %v1235 = vsel %vm1142, %v1233, %v1234
    %1236 = vrot.lane.b32.xlu0 %v1145, 64
    %v1237 = vpop.permute.xlu0 %1236
    %1238 = vrot.lane.b32.xlu0 %v1148, 64
    %v1239 = vpop.permute.xlu0 %1238
    %1240 = vrot.lane.b32.xlu0 %v1151, 64
    %v1241 = vpop.permute.xlu0 %1240
    %1242 = vrot.lane.b32.xlu0 %v1154, 64
    %v1243 = vpop.permute.xlu0 %1242
    %1244 = vrot.lane.b32.xlu0 %v1157, 64
    %v1245 = vpop.permute.xlu0 %1244
    %1246 = vrot.lane.b32.xlu0 %v1160, 64
    %v1247 = vpop.permute.xlu0 %1246
    %1248 = vrot.lane.b32.xlu0 %v1163, 64
    %v1249 = vpop.permute.xlu0 %1248
    %1250 = vrot.lane.b32.xlu0 %v1166, 64
    %v1251 = vpop.permute.xlu0 %1250
    %1252 = vrot.lane.b32.xlu0 %v1169, 64
    %v1253 = vpop.permute.xlu0 %1252
    %1254 = vrot.lane.b32.xlu0 %v1172, 64
    %v1255 = vpop.permute.xlu0 %1254
    %1256 = vrot.lane.b32.xlu0 %v1175, 64
    %v1257 = vpop.permute.xlu0 %1256
    %1258 = vrot.lane.b32.xlu0 %v1178, 64
    %v1259 = vpop.permute.xlu0 %1258
    %1260 = vrot.lane.b32.xlu0 %v1181, 64
    %v1261 = vpop.permute.xlu0 %1260
    %1262 = vrot.lane.b32.xlu0 %v1184, 64
    %v1263 = vpop.permute.xlu0 %1262
    %1264 = vrot.lane.b32.xlu0 %v1187, 64
    %v1265 = vpop.permute.xlu0 %1264
    %1266 = vrot.lane.b32.xlu0 %v1190, 64
    %v1267 = vpop.permute.xlu0 %1266
    %1268 = vrot.lane.b32.xlu0 %v1193, 64
    %v1269 = vpop.permute.xlu0 %1268
    %1270 = vrot.lane.b32.xlu0 %v1196, 64
    %v1271 = vpop.permute.xlu0 %1270
    %1272 = vrot.lane.b32.xlu0 %v1199, 64
    %v1273 = vpop.permute.xlu0 %1272
    %1274 = vrot.lane.b32.xlu0 %v1202, 64
    %v1275 = vpop.permute.xlu0 %1274
    %1276 = vrot.lane.b32.xlu0 %v1205, 64
    %v1277 = vpop.permute.xlu0 %1276
    %1278 = vrot.lane.b32.xlu0 %v1208, 64
    %v1279 = vpop.permute.xlu0 %1278
    %1280 = vrot.lane.b32.xlu0 %v1211, 64
    %v1281 = vpop.permute.xlu0 %1280
    %1282 = vrot.lane.b32.xlu0 %v1214, 64
    %v1283 = vpop.permute.xlu0 %1282
    %1284 = vrot.lane.b32.xlu0 %v1217, 64
    %v1285 = vpop.permute.xlu0 %1284
    %1286 = vrot.lane.b32.xlu0 %v1220, 64
    %v1287 = vpop.permute.xlu0 %1286
    %1288 = vrot.lane.b32.xlu0 %v1223, 64
    %v1289 = vpop.permute.xlu0 %1288
    %1290 = vrot.lane.b32.xlu0 %v1226, 64
    %v1291 = vpop.permute.xlu0 %1290
    %1292 = vrot.lane.b32.xlu0 %v1229, 64
    %v1293 = vpop.permute.xlu0 %1292
    %1294 = vrot.lane.b32.xlu0 %v1232, 64
    %v1295 = vpop.permute.xlu0 %1294
    %1296 = vrot.lane.b32.xlu0 %v1235, 64
    %v1297 = vpop.permute.xlu0 %1296
    %vm1298 = vcmask 261120
    %v1300 = vsel %vm1298, %v579, %v1019
    %v1302 = vsel %vm1298, %v580, %v1021
    %v1304 = vsel %vm1298, %v581, %v1023
    %v1306 = vsel %vm1298, %v582, %v1025
    %v1308 = vsel %vm1298, %v583, %v1027
    %v1310 = vsel %vm1298, %v584, %v1029
    %v1312 = vsel %vm1298, %v585, %v1031
    %v1314 = vsel %vm1298, %v586, %v1033
    %v1316 = vsel %vm1298, %v587, %v1035
    %v1318 = vsel %vm1298, %v588, %v1037
    %v1320 = vsel %vm1298, %v589, %v1039
    %v1322 = vsel %vm1298, %v590, %v1041
    %v1324 = vsel %vm1298, %v591, %v1043
    %v1326 = vsel %vm1298, %v592, %v1045
    %v1328 = vsel %vm1298, %v593, %v1047
    %v1330 = vsel %vm1298, %v594, %v1049
    %v1332 = vsel %vm1298, %v596, %v1051
    %v1334 = vsel %vm1298, %v597, %v1053
    %v1336 = vsel %vm1298, %v598, %v1055
    %v1338 = vsel %vm1298, %v599, %v1057
    %v1340 = vsel %vm1298, %v600, %v1059
    %v1342 = vsel %vm1298, %v601, %v1061
    %v1344 = vsel %vm1298, %v602, %v1063
    %v1346 = vsel %vm1298, %v603, %v1065
    %v1348 = vsel %vm1298, %v604, %v1067
    %v1350 = vsel %vm1298, %v605, %v1069
    %v1352 = vsel %vm1298, %v606, %v1071
    %v1354 = vsel %vm1298, %v607, %v1073
    %v1356 = vsel %vm1298, %v608, %v1075
    %v1358 = vsel %vm1298, %v609, %v1077
    %v1360 = vsel %vm1298, %v610, %v1079
    %vm1361 = vcmask 523264
    %v1363 = vsel %vm1361, %v1300, %v1237
    %v1365 = vsel %vm1361, %v1302, %v1239
    %v1367 = vsel %vm1361, %v1304, %v1241
    %v1369 = vsel %vm1361, %v1306, %v1243
    %v1371 = vsel %vm1361, %v1308, %v1245
    %v1373 = vsel %vm1361, %v1310, %v1247
    %v1375 = vsel %vm1361, %v1312, %v1249
    %v1377 = vsel %vm1361, %v1314, %v1251
    %v1379 = vsel %vm1361, %v1316, %v1253
    %v1381 = vsel %vm1361, %v1318, %v1255
    %v1383 = vsel %vm1361, %v1320, %v1257
    %v1385 = vsel %vm1361, %v1322, %v1259
    %v1387 = vsel %vm1361, %v1324, %v1261
    %v1389 = vsel %vm1361, %v1326, %v1263
    %v1391 = vsel %vm1361, %v1328, %v1265
    %v1393 = vsel %vm1361, %v1330, %v1267
    %v1395 = vsel %vm1361, %v1332, %v1269
    %v1397 = vsel %vm1361, %v1334, %v1271
    %v1399 = vsel %vm1361, %v1336, %v1273
    %v1401 = vsel %vm1361, %v1338, %v1275
    %v1403 = vsel %vm1361, %v1340, %v1277
    %v1405 = vsel %vm1361, %v1342, %v1279
    %v1407 = vsel %vm1361, %v1344, %v1281
    %v1409 = vsel %vm1361, %v1346, %v1283
    %v1411 = vsel %vm1361, %v1348, %v1285
    %v1413 = vsel %vm1361, %v1350, %v1287
    %v1415 = vsel %vm1361, %v1352, %v1289
    %v1417 = vsel %vm1361, %v1354, %v1291
    %v1419 = vsel %vm1361, %v1356, %v1293
    %v1421 = vsel %vm1361, %v1358, %v1295
    %v1423 = vsel %vm1361, %v1360, %v1297
    %v1424 = vld [vmem:[#allocation6] sm:$0xf]
    %v1425 = vld [vmem:[#allocation6 + $0x4] sm:$0xf]
    %v1426 = vld [vmem:[#allocation6 + $0x8] sm:$0xf]
    %v1427 = vld [vmem:[#allocation6 + $0xc] sm:$0xf]
    %v1428 = vld [vmem:[#allocation6 + $0x10] sm:$0xf]
    %v1429 = vld [vmem:[#allocation6 + $0x14] sm:$0xf]
    %v1430 = vld [vmem:[#allocation6 + $0x18] sm:$0xf]
    %v1431 = vld [vmem:[#allocation6 + $0x1c] sm:$0xf]
    %v1432 = vld [vmem:[#allocation6 + $0x20] sm:$0xf]
    %v1433 = vld [vmem:[#allocation6 + $0x24] sm:$0xf]
    %v1434 = vld [vmem:[#allocation6 + $0x28] sm:$0xf]
    %v1435 = vld [vmem:[#allocation6 + $0x2c] sm:$0xf]
    %v1448 = vunpack.c.l.b16 %v1424
    %v1449 = vunpack.c.l.b16 %v1425
    %v1450 = vunpack.c.l.b16 %v1426
    %v1451 = vunpack.c.l.b16 %v1427
    %v1452 = vunpack.c.l.b16 %v1428
    %v1453 = vunpack.c.l.b16 %v1429
    %v1454 = vunpack.c.l.b16 %v1430
    %v1455 = vunpack.c.l.b16 %v1431
    %v1456 = vunpack.c.l.b16 %v1432
    %v1457 = vunpack.c.l.b16 %v1433
    %v1458 = vunpack.c.l.b16 %v1434
    %v1459 = vunpack.c.l.b16 %v1435
    %v1460 = vpack.c.b16 %v1449, %v1448
    %v1461 = vpack.c.b16 %v1451, %v1450
    %v1462 = vpack.c.b16 %v1453, %v1452
    %v1463 = vpack.c.b16 %v1455, %v1454
    %v1464 = vpack.c.b16 %v1457, %v1456
    %v1465 = vpack.c.b16 %v1459, %v1458
    %vm1472 = vcmask 785408
    %v1473 = vsel %vm1472, %v1363, 0
    %v1475 = vsel %vm1472, %v1365, 0
    %v1477 = vsel %vm1472, %v1367, 0
    %v1479 = vsel %vm1472, %v1369, 0
    %v1481 = vsel %vm1472, %v1371, 0
    %v1483 = vsel %vm1472, %v1373, 0
    %v1485 = vsel %vm1472, %v1375, 0
    %v1487 = vsel %vm1472, %v1377, 0
    %v1489 = vsel %vm1472, %v1379, 0
    %v1491 = vsel %vm1472, %v1381, 0
    %v1493 = vsel %vm1472, %v1383, 0
    %v1495 = vsel %vm1472, %v1385, 0
    %v1497 = vsel %vm1472, %v1387, 0
    %v1499 = vsel %vm1472, %v1389, 0
    %v1501 = vsel %vm1472, %v1391, 0
    %v1503 = vsel %vm1472, %v1393, 0
    %v1505 = vsel %vm1472, %v1395, 0
    %v1507 = vsel %vm1472, %v1397, 0
    %v1509 = vsel %vm1472, %v1399, 0
    %v1511 = vsel %vm1472, %v1401, 0
    %v1513 = vsel %vm1472, %v1403, 0
    %v1515 = vsel %vm1472, %v1405, 0
    %v1517 = vsel %vm1472, %v1407, 0
    %v1519 = vsel %vm1472, %v1409, 0
    %v1521 = vsel %vm1472, %v1411, 0
    %v1523 = vsel %vm1472, %v1413, 0
    %v1525 = vsel %vm1472, %v1415, 0
    %v1527 = vsel %vm1472, %v1417, 0
    %v1529 = vsel %vm1472, %v1419, 0
    %v1531 = vsel %vm1472, %v1421, 0
    %v1533 = vsel %vm1472, %v1423, 0
    %1535 = vmatprep.subr.bf16.mxu0 0
    %1536 = vmatpush1.bf16.msra.mxu0 %v1460
    %1537 = vmatprep.subr.bf16.mxu0 0
    %1538 = vmatpush1.bf16.msra.mxu0 %v1461
    %1539 = vmatprep.subr.bf16.mxu0 0
    %1540 = vmatpush1.bf16.msra.mxu0 %v1462
    %1541 = vmatprep.subr.bf16.mxu0 0
    %1542 = vmatpush1.bf16.msra.mxu0 %v1463
    %1543 = vmatprep.subr.bf16.mxu0 0
    %1544 = vmatpush1.bf16.msra.mxu0 %v1464
    %1545 = vmatprep.subr.bf16.mxu0 0
    %1546 = vmatpush1.bf16.msra.mxu0 %v1465
    %1547 = vmatprep.subr.bf16.mxu0 0
    %1548 = vmatpush1.bf16.msra.mxu0 0
    %1549 = vmatprep.subr.bf16.mxu0 0
    %1550 = vmatpush1.bf16.msra.mxu0 0
    %1551 = vmatprep.subr.bf16.mxu0 0
    %1552 = vmatpush1.bf16.msra.mxu0 0
    %1553 = vmatprep.subr.bf16.mxu0 0
    %1554 = vmatpush1.bf16.msra.mxu0 0
    %1555 = vmatprep.subr.bf16.mxu0 0
    %1556 = vmatpush1.bf16.msra.mxu0 0
    %1557 = vmatprep.subr.bf16.mxu0 0
    %1558 = vmatpush1.bf16.msra.mxu0 0
    %1559 = vmatprep.subr.bf16.mxu0 0
    %1560 = vmatpush1.bf16.msra.mxu0 0
    %1561 = vmatprep.subr.bf16.mxu0 0
    %1562 = vmatpush1.bf16.msra.mxu0 0
    %1563 = vmatprep.subr.bf16.mxu0 0
    %1564 = vmatpush1.bf16.msra.mxu0 0
    %1565 = vmatprep.subr.bf16.mxu0 0
    %1566 = vmatpush1.bf16.msra.mxu0 0
    %1567 = vmatprep.mubr.bf16.mxu0 0
    %1568 = vmatmul.mubr.bf16.gmra.mrb[0].mxu0 %v1473
    %v1569 = vpop.f32.mrb[0].mxu0
    %v1570 = vadd.f32 0.0, %v1569
    %v1571 = vpop.f32.mrb[0].mxu0
    %v1572 = vpop.f32.mrb[0].mxu0
    %v1573 = vadd.f32 0.0, %v1572
    %v1574 = vpop.f32.mrb[0].mxu0
    %1575 = vmatprep.mubr.bf16.mxu0 0
    %1576 = vmatmul.mubr.bf16.gmra.mrb[0].mxu0 %v1475
    %v1577 = vpop.f32.mrb[0].mxu0
    %v1578 = vadd.f32 0.0, %v1577
    %v1579 = vpop.f32.mrb[0].mxu0
    %v1580 = vpop.f32.mrb[0].mxu0
    %v1581 = vadd.f32 0.0, %v1580
    %v1582 = vpop.f32.mrb[0].mxu0
    %1583 = vmatprep.mubr.bf16.mxu0 0
    %1584 = vmatmul.mubr.bf16.gmra.mrb[0].mxu0 %v1477
    %v1585 = vpop.f32.mrb[0].mxu0
    %v1586 = vadd.f32 0.0, %v1585
    %v1587 = vpop.f32.mrb[0].mxu0
    %v1588 = vpop.f32.mrb[0].mxu0
    %v1589 = vadd.f32 0.0, %v1588
    %v1590 = vpop.f32.mrb[0].mxu0
    %1591 = vmatprep.mubr.bf16.mxu0 0
    %1592 = vmatmul.mubr.bf16.gmra.mrb[0].mxu0 %v1479
    %v1593 = vpop.f32.mrb[0].mxu0
    %v1594 = vadd.f32 0.0, %v1593
    %v1595 = vpop.f32.mrb[0].mxu0
    %v1596 = vpop.f32.mrb[0].mxu0
    %v1597 = vadd.f32 0.0, %v1596
    %v1598 = vpop.f32.mrb[0].mxu0
    %1599 = vmatprep.mubr.bf16.mxu0 0
    %1600 = vmatmul.mubr.bf16.gmra.mrb[0].mxu0 %v1481
    %v1601 = vpop.f32.mrb[0].mxu0
    %v1602 = vadd.f32 0.0, %v1601
    %v1603 = vpop.f32.mrb[0].mxu0
    %v1604 = vpop.f32.mrb[0].mxu0
    %v1605 = vadd.f32 0.0, %v1604
    %v1606 = vpop.f32.mrb[0].mxu0
    %1607 = vmatprep.mubr.bf16.mxu0 0
    %1608 = vmatmul.mubr.bf16.gmra.mrb[0].mxu0 %v1483
    %v1609 = vpop.f32.mrb[0].mxu0
    %v1610 = vadd.f32 0.0, %v1609
    %v1611 = vpop.f32.mrb[0].mxu0
    %v1612 = vpop.f32.mrb[0].mxu0
    %v1613 = vadd.f32 0.0, %v1612
    %v1614 = vpop.f32.mrb[0].mxu0
    %1615 = vmatprep.mubr.bf16.mxu0 0
    %1616 = vmatmul.mubr.bf16.gmra.mrb[0].mxu0 %v1485
    %v1617 = vpop.f32.mrb[0].mxu0
    %v1618 = vadd.f32 0.0, %v1617
    %v1619 = vpop.f32.mrb[0].mxu0
    %v1620 = vpop.f32.mrb[0].mxu0
    %v1621 = vadd.f32 0.0, %v1620
    %v1622 = vpop.f32.mrb[0].mxu0
    %1623 = vmatprep.mubr.bf16.mxu0 0
    %1624 = vmatmul.mubr.bf16.gmra.mrb[0].mxu0 %v1487
    %v1625 = vpop.f32.mrb[0].mxu0
    %v1626 = vadd.f32 0.0, %v1625
    %v1627 = vpop.f32.mrb[0].mxu0
    %v1628 = vpop.f32.mrb[0].mxu0
    %v1629 = vadd.f32 0.0, %v1628
    %v1630 = vpop.f32.mrb[0].mxu0
    %1631 = vmatprep.mubr.bf16.mxu0 0
    %1632 = vmatmul.mubr.bf16.gmra.mrb[0].mxu0 %v1489
    %v1633 = vpop.f32.mrb[0].mxu0
    %v1634 = vadd.f32 0.0, %v1633
    %v1635 = vpop.f32.mrb[0].mxu0
    %v1636 = vpop.f32.mrb[0].mxu0
    %v1637 = vadd.f32 0.0, %v1636
    %v1638 = vpop.f32.mrb[0].mxu0
    %1639 = vmatprep.mubr.bf16.mxu0 0
    %1640 = vmatmul.mubr.bf16.gmra.mrb[0].mxu0 %v1491
    %v1641 = vpop.f32.mrb[0].mxu0
    %v1642 = vadd.f32 0.0, %v1641
    %v1643 = vpop.f32.mrb[0].mxu0
    %v1644 = vpop.f32.mrb[0].mxu0
    %v1645 = vadd.f32 0.0, %v1644
    %v1646 = vpop.f32.mrb[0].mxu0
    %1647 = vmatprep.mubr.bf16.mxu0 0
    %1648 = vmatmul.mubr.bf16.gmra.mrb[0].mxu0 %v1493
    %v1649 = vpop.f32.mrb[0].mxu0
    %v1650 = vadd.f32 0.0, %v1649
    %v1651 = vpop.f32.mrb[0].mxu0
    %v1652 = vpop.f32.mrb[0].mxu0
    %v1653 = vadd.f32 0.0, %v1652
    %v1654 = vpop.f32.mrb[0].mxu0
    %1655 = vmatprep.mubr.bf16.mxu0 0
    %1656 = vmatmul.mubr.bf16.gmra.mrb[0].mxu0 %v1495
    %v1657 = vpop.f32.mrb[0].mxu0
    %v1658 = vadd.f32 0.0, %v1657
    %v1659 = vpop.f32.mrb[0].mxu0
    %v1660 = vpop.f32.mrb[0].mxu0
    %v1661 = vadd.f32 0.0, %v1660
    %v1662 = vpop.f32.mrb[0].mxu0
    %1663 = vmatprep.mubr.bf16.mxu0 0
    %1664 = vmatmul.mubr.bf16.gmra.mrb[0].mxu0 %v1497
    %v1665 = vpop.f32.mrb[0].mxu0
    %v1666 = vadd.f32 0.0, %v1665
    %v1667 = vpop.f32.mrb[0].mxu0
    %v1668 = vpop.f32.mrb[0].mxu0
    %v1669 = vadd.f32 0.0, %v1668
    %v1670 = vpop.f32.mrb[0].mxu0
    %1671 = vmatprep.mubr.bf16.mxu0 0
    %1672 = vmatmul.mubr.bf16.gmra.mrb[0].mxu0 %v1499
    %v1673 = vpop.f32.mrb[0].mxu0
    %v1674 = vadd.f32 0.0, %v1673
    %v1675 = vpop.f32.mrb[0].mxu0
    %v1676 = vpop.f32.mrb[0].mxu0
    %v1677 = vadd.f32 0.0, %v1676
    %v1678 = vpop.f32.mrb[0].mxu0
    %1679 = vmatprep.mubr.bf16.mxu0 0
    %1680 = vmatmul.mubr.bf16.gmra.mrb[0].mxu0 %v1501
    %v1681 = vpop.f32.mrb[0].mxu0
    %v1682 = vadd.f32 0.0, %v1681
    %v1683 = vpop.f32.mrb[0].mxu0
    %v1684 = vpop.f32.mrb[0].mxu0
    %v1685 = vadd.f32 0.0, %v1684
    %v1686 = vpop.f32.mrb[0].mxu0
    %1687 = vmatprep.mubr.bf16.mxu0 0
    %1688 = vmatmul.mubr.bf16.gmra.mrb[0].mxu0 %v1503
    %v1689 = vpop.f32.mrb[0].mxu0
    %v1690 = vadd.f32 0.0, %v1689
    %v1691 = vpop.f32.mrb[0].mxu0
    %v1692 = vpop.f32.mrb[0].mxu0
    %v1693 = vadd.f32 0.0, %v1692
    %v1694 = vpop.f32.mrb[0].mxu0
    %1695 = vmatprep.mubr.bf16.mxu0 0
    %1696 = vmatmul.mubr.bf16.gmra.mrb[0].mxu0 %v1473
    %v1697 = vpop.f32.mrb[0].mxu0
    %v1698 = vadd.f32 0.0, %v1697
    %v1699 = vpop.f32.mrb[0].mxu0
    %v1700 = vpop.f32.mrb[0].mxu0
    %v1701 = vadd.f32 0.0, %v1700
    %v1702 = vpop.f32.mrb[0].mxu0
    %1703 = vmatprep.mubr.bf16.mxu0 0
    %1704 = vmatmul.mubr.bf16.gmra.mrb[0].mxu0 %v1505
    %v1705 = vpop.f32.mrb[0].mxu0
    %v1706 = vadd.f32 0.0, %v1705
    %v1707 = vpop.f32.mrb[0].mxu0
    %v1708 = vpop.f32.mrb[0].mxu0
    %v1709 = vadd.f32 0.0, %v1708
    %v1710 = vpop.f32.mrb[0].mxu0
    %1711 = vmatprep.mubr.bf16.mxu0 0
    %1712 = vmatmul.mubr.bf16.gmra.mrb[0].mxu0 %v1507
    %v1713 = vpop.f32.mrb[0].mxu0
    %v1714 = vadd.f32 0.0, %v1713
    %v1715 = vpop.f32.mrb[0].mxu0
    %v1716 = vpop.f32.mrb[0].mxu0
    %v1717 = vadd.f32 0.0, %v1716
    %v1718 = vpop.f32.mrb[0].mxu0
    %1719 = vmatprep.mubr.bf16.mxu0 0
    %1720 = vmatmul.mubr.bf16.gmra.mrb[0].mxu0 %v1509
    %v1721 = vpop.f32.mrb[0].mxu0
    %v1722 = vadd.f32 0.0, %v1721
    %v1723 = vpop.f32.mrb[0].mxu0
    %v1724 = vpop.f32.mrb[0].mxu0
    %v1725 = vadd.f32 0.0, %v1724
    %v1726 = vpop.f32.mrb[0].mxu0
    %1727 = vmatprep.mubr.bf16.mxu0 0
    %1728 = vmatmul.mubr.bf16.gmra.mrb[0].mxu0 %v1511
    %v1729 = vpop.f32.mrb[0].mxu0
    %v1730 = vadd.f32 0.0, %v1729
    %v1731 = vpop.f32.mrb[0].mxu0
    %v1732 = vpop.f32.mrb[0].mxu0
    %v1733 = vadd.f32 0.0, %v1732
    %v1734 = vpop.f32.mrb[0].mxu0
    %1735 = vmatprep.mubr.bf16.mxu0 0
    %1736 = vmatmul.mubr.bf16.gmra.mrb[0].mxu0 %v1513
    %v1737 = vpop.f32.mrb[0].mxu0
    %v1738 = vadd.f32 0.0, %v1737
    %v1739 = vpop.f32.mrb[0].mxu0
    %v1740 = vpop.f32.mrb[0].mxu0
    %v1741 = vadd.f32 0.0, %v1740
    %v1742 = vpop.f32.mrb[0].mxu0
    %1743 = vmatprep.mubr.bf16.mxu0 0
    %1744 = vmatmul.mubr.bf16.gmra.mrb[0].mxu0 %v1515
    %v1745 = vpop.f32.mrb[0].mxu0
    %v1746 = vadd.f32 0.0, %v1745
    %v1747 = vpop.f32.mrb[0].mxu0
    %v1748 = vpop.f32.mrb[0].mxu0
    %v1749 = vadd.f32 0.0, %v1748
    %v1750 = vpop.f32.mrb[0].mxu0
    %1751 = vmatprep.mubr.bf16.mxu0 0
    %1752 = vmatmul.mubr.bf16.gmra.mrb[0].mxu0 %v1517
    %v1753 = vpop.f32.mrb[0].mxu0
    %v1754 = vadd.f32 0.0, %v1753
    %v1755 = vpop.f32.mrb[0].mxu0
    %v1756 = vpop.f32.mrb[0].mxu0
    %v1757 = vadd.f32 0.0, %v1756
    %v1758 = vpop.f32.mrb[0].mxu0
    %1759 = vmatprep.mubr.bf16.mxu0 0
    %1760 = vmatmul.mubr.bf16.gmra.mrb[0].mxu0 %v1519
    %v1761 = vpop.f32.mrb[0].mxu0
    %v1762 = vadd.f32 0.0, %v1761
    %v1763 = vpop.f32.mrb[0].mxu0
    %v1764 = vpop.f32.mrb[0].mxu0
    %v1765 = vadd.f32 0.0, %v1764
    %v1766 = vpop.f32.mrb[0].mxu0
    %1767 = vmatprep.mubr.bf16.mxu0 0
    %1768 = vmatmul.mubr.bf16.gmra.mrb[0].mxu0 %v1521
    %v1769 = vpop.f32.mrb[0].mxu0
    %v1770 = vadd.f32 0.0, %v1769
    %v1771 = vpop.f32.mrb[0].mxu0
    %v1772 = vpop.f32.mrb[0].mxu0
    %v1773 = vadd.f32 0.0, %v1772
    %v1774 = vpop.f32.mrb[0].mxu0
    %1775 = vmatprep.mubr.bf16.mxu0 0
    %1776 = vmatmul.mubr.bf16.gmra.mrb[0].mxu0 %v1523
    %v1777 = vpop.f32.mrb[0].mxu0
    %v1778 = vadd.f32 0.0, %v1777
    %v1779 = vpop.f32.mrb[0].mxu0
    %v1780 = vpop.f32.mrb[0].mxu0
    %v1781 = vadd.f32 0.0, %v1780
    %v1782 = vpop.f32.mrb[0].mxu0
    %1783 = vmatprep.mubr.bf16.mxu0 0
    %1784 = vmatmul.mubr.bf16.gmra.mrb[0].mxu0 %v1525
    %v1785 = vpop.f32.mrb[0].mxu0
    %v1786 = vadd.f32 0.0, %v1785
    %v1787 = vpop.f32.mrb[0].mxu0
    %v1788 = vpop.f32.mrb[0].mxu0
    %v1789 = vadd.f32 0.0, %v1788
    %v1790 = vpop.f32.mrb[0].mxu0
    %1791 = vmatprep.mubr.bf16.mxu0 0
    %1792 = vmatmul.mubr.bf16.gmra.mrb[0].mxu0 %v1527
    %v1793 = vpop.f32.mrb[0].mxu0
    %v1794 = vadd.f32 0.0, %v1793
    %v1795 = vpop.f32.mrb[0].mxu0
    %v1796 = vpop.f32.mrb[0].mxu0
    %v1797 = vadd.f32 0.0, %v1796
    %v1798 = vpop.f32.mrb[0].mxu0
    %1799 = vmatprep.mubr.bf16.mxu0 0
    %1800 = vmatmul.mubr.bf16.gmra.mrb[0].mxu0 %v1529
    %v1801 = vpop.f32.mrb[0].mxu0
    %v1802 = vadd.f32 0.0, %v1801
    %v1803 = vpop.f32.mrb[0].mxu0
    %v1804 = vpop.f32.mrb[0].mxu0
    %v1805 = vadd.f32 0.0, %v1804
    %v1806 = vpop.f32.mrb[0].mxu0
    %1807 = vmatprep.mubr.bf16.mxu0 0
    %1808 = vmatmul.mubr.bf16.gmra.mrb[0].mxu0 %v1531
    %v1809 = vpop.f32.mrb[0].mxu0
    %v1810 = vadd.f32 0.0, %v1809
    %v1811 = vpop.f32.mrb[0].mxu0
    %v1812 = vpop.f32.mrb[0].mxu0
    %v1813 = vadd.f32 0.0, %v1812
    %v1814 = vpop.f32.mrb[0].mxu0
    %1815 = vmatprep.mubr.bf16.mxu0 0
    %1816 = vmatmul.mubr.bf16.gmra.mrb[0].mxu0 %v1533
    %v1817 = vpop.f32.mrb[0].mxu0
    %v1818 = vadd.f32 0.0, %v1817
    %v1819 = vpop.f32.mrb[0].mxu0
    %v1820 = vpop.f32.mrb[0].mxu0
    %v1821 = vadd.f32 0.0, %v1820
    %v1822 = vpop.f32.mrb[0].mxu0
    %1823 = vdwg.mxu0
    %vm1824 = vcmask 130048
    %1825 = vst.msk [vmem:[#allocation2] sm:$0xff] %vm1824, %v1570
    %1826 = vst.msk [vmem:[#allocation2 + $0x8] sm:$0xff] %vm1824, %v1573
    %1827 = vst.msk [vmem:[#allocation2 + $0x10] sm:$0xff] %vm1824, %v1578
    %1828 = vst.msk [vmem:[#allocation2 + $0x18] sm:$0xff] %vm1824, %v1581
    %1829 = vst.msk [vmem:[#allocation2 + $0x20] sm:$0xff] %vm1824, %v1586
    %1830 = vst.msk [vmem:[#allocation2 + $0x28] sm:$0xff] %vm1824, %v1589
    %1831 = vst.msk [vmem:[#allocation2 + $0x30] sm:$0xff] %vm1824, %v1594
    %1832 = vst.msk [vmem:[#allocation2 + $0x38] sm:$0xff] %vm1824, %v1597
    %1833 = vst.msk [vmem:[#allocation2 + $0x40] sm:$0xff] %vm1824, %v1602
    %1834 = vst.msk [vmem:[#allocation2 + $0x48] sm:$0xff] %vm1824, %v1605
    %1835 = vst.msk [vmem:[#allocation2 + $0x50] sm:$0xff] %vm1824, %v1610
    %1836 = vst.msk [vmem:[#allocation2 + $0x58] sm:$0xff] %vm1824, %v1613
    %1837 = vst.msk [vmem:[#allocation2 + $0x60] sm:$0xff] %vm1824, %v1618
    %1838 = vst.msk [vmem:[#allocation2 + $0x68] sm:$0xff] %vm1824, %v1621
    %1839 = vst.msk [vmem:[#allocation2 + $0x70] sm:$0xff] %vm1824, %v1626
    %1840 = vst.msk [vmem:[#allocation2 + $0x78] sm:$0xff] %vm1824, %v1629
    %1841 = vst.msk [vmem:[#allocation2 + $0x80] sm:$0xff] %vm1824, %v1634
    %1842 = vst.msk [vmem:[#allocation2 + $0x88] sm:$0xff] %vm1824, %v1637
    %1843 = vst.msk [vmem:[#allocation2 + $0x90] sm:$0xff] %vm1824, %v1642
    %1844 = vst.msk [vmem:[#allocation2 + $0x98] sm:$0xff] %vm1824, %v1645
    %1845 = vst.msk [vmem:[#allocation2 + $0xa0] sm:$0xff] %vm1824, %v1650
    %1846 = vst.msk [vmem:[#allocation2 + $0xa8] sm:$0xff] %vm1824, %v1653
    %1847 = vst.msk [vmem:[#allocation2 + $0xb0] sm:$0xff] %vm1824, %v1658
    %1848 = vst.msk [vmem:[#allocation2 + $0xb8] sm:$0xff] %vm1824, %v1661
    %1849 = vst.msk [vmem:[#allocation2 + $0xc0] sm:$0xff] %vm1824, %v1666
    %1850 = vst.msk [vmem:[#allocation2 + $0xc8] sm:$0xff] %vm1824, %v1669
    %1851 = vst.msk [vmem:[#allocation2 + $0xd0] sm:$0xff] %vm1824, %v1674
    %1852 = vst.msk [vmem:[#allocation2 + $0xd8] sm:$0xff] %vm1824, %v1677
    %1853 = vst.msk [vmem:[#allocation2 + $0xe0] sm:$0xff] %vm1824, %v1682
    %1854 = vst.msk [vmem:[#allocation2 + $0xe8] sm:$0xff] %vm1824, %v1685
    %1855 = vst.msk [vmem:[#allocation2 + $0xf0] sm:$0xff] %vm1824, %v1690
    %1856 = vst.msk [vmem:[#allocation2 + $0xf8] sm:$0xff] %vm1824, %v1693
    %1857 = vst.msk [vmem:[#allocation2 + $0x100] sm:$0xff] %vm1824, %v1698
    %1858 = vst.msk [vmem:[#allocation2 + $0x108] sm:$0xff] %vm1824, %v1701
    %1859 = vst.msk [vmem:[#allocation2 + $0x110] sm:$0xff] %vm1824, %v1706
    %1860 = vst.msk [vmem:[#allocation2 + $0x118] sm:$0xff] %vm1824, %v1709
    %1861 = vst.msk [vmem:[#allocation2 + $0x120] sm:$0xff] %vm1824, %v1714
    %1862 = vst.msk [vmem:[#allocation2 + $0x128] sm:$0xff] %vm1824, %v1717
    %1863 = vst.msk [vmem:[#allocation2 + $0x130] sm:$0xff] %vm1824, %v1722
    %1864 = vst.msk [vmem:[#allocation2 + $0x138] sm:$0xff] %vm1824, %v1725
    %1865 = vst.msk [vmem:[#allocation2 + $0x140] sm:$0xff] %vm1824, %v1730
    %1866 = vst.msk [vmem:[#allocation2 + $0x148] sm:$0xff] %vm1824, %v1733
    %1867 = vst.msk [vmem:[#allocation2 + $0x150] sm:$0xff] %vm1824, %v1738
    %1868 = vst.msk [vmem:[#allocation2 + $0x158] sm:$0xff] %vm1824, %v1741
    %1869 = vst.msk [vmem:[#allocation2 + $0x160] sm:$0xff] %vm1824, %v1746
    %1870 = vst.msk [vmem:[#allocation2 + $0x168] sm:$0xff] %vm1824, %v1749
    %1871 = vst.msk [vmem:[#allocation2 + $0x170] sm:$0xff] %vm1824, %v1754
    %1872 = vst.msk [vmem:[#allocation2 + $0x178] sm:$0xff] %vm1824, %v1757
    %1873 = vst.msk [vmem:[#allocation2 + $0x180] sm:$0xff] %vm1824, %v1762
    %1874 = vst.msk [vmem:[#allocation2 + $0x188] sm:$0xff] %vm1824, %v1765
    %1875 = vst.msk [vmem:[#allocation2 + $0x190] sm:$0xff] %vm1824, %v1770
    %1876 = vst.msk [vmem:[#allocation2 + $0x198] sm:$0xff] %vm1824, %v1773
    %1877 = vst.msk [vmem:[#allocation2 + $0x1a0] sm:$0xff] %vm1824, %v1778
    %1878 = vst.msk [vmem:[#allocation2 + $0x1a8] sm:$0xff] %vm1824, %v1781
    %1879 = vst.msk [vmem:[#allocation2 + $0x1b0] sm:$0xff] %vm1824, %v1786
    %1880 = vst.msk [vmem:[#allocation2 + $0x1b8] sm:$0xff] %vm1824, %v1789
    %1881 = vst.msk [vmem:[#allocation2 + $0x1c0] sm:$0xff] %vm1824, %v1794
    %1882 = vst.msk [vmem:[#allocation2 + $0x1c8] sm:$0xff] %vm1824, %v1797
    %1883 = vst.msk [vmem:[#allocation2 + $0x1d0] sm:$0xff] %vm1824, %v1802
    %1884 = vst.msk [vmem:[#allocation2 + $0x1d8] sm:$0xff] %vm1824, %v1805
    %1885 = vst.msk [vmem:[#allocation2 + $0x1e0] sm:$0xff] %vm1824, %v1810
    %1886 = vst.msk [vmem:[#allocation2 + $0x1e8] sm:$0xff] %vm1824, %v1813
    %1887 = vst.msk [vmem:[#allocation2 + $0x1f0] sm:$0xff] %vm1824, %v1818
    %1888 = vst.msk [vmem:[#allocation2 + $0x1f8] sm:$0xff] %vm1824, %v1821
    %v1890 = vshrl.u32 %v595, 16
    %v1892 = vshll.u32 %v595, 16
    %v1894 = vrot.slane %v1892, 1
    %v1895 = vor.u32 %v1890, %v1894
    %v1897 = vshll.u32 %v628, 16
    %v1899 = vrot.slane %v1897, 1
    %v1900 = vsel %vm645, %v1895, %v1899
    %v1902 = vshrl.u32 %v611, 16
    %v1904 = vshll.u32 %v611, 16
    %v1906 = vrot.slane %v1904, 1
    %v1907 = vor.u32 %v1902, %v1906
    %v1909 = vshll.u32 %v644, 16
    %v1911 = vrot.slane %v1909, 1
    %v1912 = vsel %vm645, %v1907, %v1911
    %1913 = vrot.lane.b32.xlu0 %v1900, 32
    %v1914 = vpop.permute.xlu0 %1913
    %1915 = vrot.lane.b32.xlu0 %v1912, 32
    %v1916 = vpop.permute.xlu0 %1915
    %v1921 = vrot.slane %v595, 1
    %v1922 = vrot.slane %v628, 1
    %v1923 = vsel %vm1142, %v1921, %v1922
    %v1924 = vrot.slane %v611, 1
    %v1925 = vrot.slane %v644, 1
    %v1926 = vsel %vm1142, %v1924, %v1925
    %1927 = vrot.lane.b32.xlu0 %v1923, 64
    %v1928 = vpop.permute.xlu0 %1927
    %1929 = vrot.lane.b32.xlu0 %v1926, 64
    %v1930 = vpop.permute.xlu0 %1929
    %v1932 = vsel %vm1298, %v595, %v1914
    %v1934 = vsel %vm1298, %v611, %v1916
    %v1936 = vsel %vm1361, %v1932, %v1928
    %v1938 = vsel %vm1361, %v1934, %v1930
    %s1939 = scalar_lea.vmem [#allocation6], 48
    %v1940 = vld [vmem:[%s1939] sm:$0xf]
    %v1941 = vld [vmem:[%s1939 + $0x4] sm:$0xf]
    %v1942 = vld [vmem:[%s1939 + $0x8] sm:$0xf]
    %v1943 = vld [vmem:[%s1939 + $0xc] sm:$0xf]
    %v1944 = vld [vmem:[%s1939 + $0x10] sm:$0xf]
    %v1945 = vld [vmem:[%s1939 + $0x14] sm:$0xf]
    %v1946 = vld [vmem:[%s1939 + $0x18] sm:$0xf]
    %v1947 = vld [vmem:[%s1939 + $0x1c] sm:$0xf]
    %v1948 = vld [vmem:[%s1939 + $0x20] sm:$0xf]
    %v1949 = vld [vmem:[%s1939 + $0x24] sm:$0xf]
    %v1950 = vld [vmem:[%s1939 + $0x28] sm:$0xf]
    %v1951 = vld [vmem:[%s1939 + $0x2c] sm:$0xf]
    %v1964 = vunpack.c.l.b16 %v1940
    %v1965 = vunpack.c.l.b16 %v1941
    %v1966 = vunpack.c.l.b16 %v1942
    %v1967 = vunpack.c.l.b16 %v1943
    %v1968 = vunpack.c.l.b16 %v1944
    %v1969 = vunpack.c.l.b16 %v1945
    %v1970 = vunpack.c.l.b16 %v1946
    %v1971 = vunpack.c.l.b16 %v1947
    %v1972 = vunpack.c.l.b16 %v1948
    %v1973 = vunpack.c.l.b16 %v1949
    %v1974 = vunpack.c.l.b16 %v1950
    %v1975 = vunpack.c.l.b16 %v1951
    %v1976 = vpack.c.b16 %v1965, %v1964
    %v1977 = vpack.c.b16 %v1967, %v1966
    %v1978 = vpack.c.b16 %v1969, %v1968
    %v1979 = vpack.c.b16 %v1971, %v1970
    %v1980 = vpack.c.b16 %v1973, %v1972
    %v1981 = vpack.c.b16 %v1975, %v1974
    %v1988 = vsel %vm1472, %v1936, 0
    %v1990 = vsel %vm1472, %v1938, 0
    %1992 = vmatprep.subr.bf16.mxu0 0
    %1993 = vmatpush1.bf16.msra.mxu0 %v1976
    %1994 = vmatprep.subr.bf16.mxu0 0
    %1995 = vmatpush1.bf16.msra.mxu0 %v1977
    %1996 = vmatprep.subr.bf16.mxu0 0
    %1997 = vmatpush1.bf16.msra.mxu0 %v1978
    %1998 = vmatprep.subr.bf16.mxu0 0
    %1999 = vmatpush1.bf16.msra.mxu0 %v1979
    %2000 = vmatprep.subr.bf16.mxu0 0
    %2001 = vmatpush1.bf16.msra.mxu0 %v1980
    %2002 = vmatprep.subr.bf16.mxu0 0
    %2003 = vmatpush1.bf16.msra.mxu0 %v1981
    %2004 = vmatprep.subr.bf16.mxu0 0
    %2005 = vmatpush1.bf16.msra.mxu0 0
    %2006 = vmatprep.subr.bf16.mxu0 0
    %2007 = vmatpush1.bf16.msra.mxu0 0
    %2008 = vmatprep.subr.bf16.mxu0 0
    %2009 = vmatpush1.bf16.msra.mxu0 0
    %2010 = vmatprep.subr.bf16.mxu0 0
    %2011 = vmatpush1.bf16.msra.mxu0 0
    %2012 = vmatprep.subr.bf16.mxu0 0
    %2013 = vmatpush1.bf16.msra.mxu0 0
    %2014 = vmatprep.subr.bf16.mxu0 0
    %2015 = vmatpush1.bf16.msra.mxu0 0
    %2016 = vmatprep.subr.bf16.mxu0 0
    %2017 = vmatpush1.bf16.msra.mxu0 0
    %2018 = vmatprep.subr.bf16.mxu0 0
    %2019 = vmatpush1.bf16.msra.mxu0 0
    %2020 = vmatprep.subr.bf16.mxu0 0
    %2021 = vmatpush1.bf16.msra.mxu0 0
    %2022 = vmatprep.subr.bf16.mxu0 0
    %2023 = vmatpush1.bf16.msra.mxu0 0
    %2024 = vmatprep.mubr.bf16.mxu0 0
    %2025 = vmatmul.mubr.bf16.gmra.mrb[0].mxu0 %v1475
    %v2026 = vpop.f32.mrb[0].mxu0
    %v2027 = vadd.f32 0.0, %v2026
    %v2028 = vpop.f32.mrb[0].mxu0
    %v2029 = vpop.f32.mrb[0].mxu0
    %v2030 = vadd.f32 0.0, %v2029
    %v2031 = vpop.f32.mrb[0].mxu0
    %2032 = vmatprep.mubr.bf16.mxu0 0
    %2033 = vmatmul.mubr.bf16.gmra.mrb[0].mxu0 %v1477
    %v2034 = vpop.f32.mrb[0].mxu0
    %v2035 = vadd.f32 0.0, %v2034
    %v2036 = vpop.f32.mrb[0].mxu0
    %v2037 = vpop.f32.mrb[0].mxu0
    %v2038 = vadd.f32 0.0, %v2037
    %v2039 = vpop.f32.mrb[0].mxu0
    %2040 = vmatprep.mubr.bf16.mxu0 0
    %2041 = vmatmul.mubr.bf16.gmra.mrb[0].mxu0 %v1479
    %v2042 = vpop.f32.mrb[0].mxu0
    %v2043 = vadd.f32 0.0, %v2042
    %v2044 = vpop.f32.mrb[0].mxu0
    %v2045 = vpop.f32.mrb[0].mxu0
    %v2046 = vadd.f32 0.0, %v2045
    %v2047 = vpop.f32.mrb[0].mxu0
    %2048 = vmatprep.mubr.bf16.mxu0 0
    %2049 = vmatmul.mubr.bf16.gmra.mrb[0].mxu0 %v1481
    %v2050 = vpop.f32.mrb[0].mxu0
    %v2051 = vadd.f32 0.0, %v2050
    %v2052 = vpop.f32.mrb[0].mxu0
    %v2053 = vpop.f32.mrb[0].mxu0
    %v2054 = vadd.f32 0.0, %v2053
    %v2055 = vpop.f32.mrb[0].mxu0
    %2056 = vmatprep.mubr.bf16.mxu0 0
    %2057 = vmatmul.mubr.bf16.gmra.mrb[0].mxu0 %v1483
    %v2058 = vpop.f32.mrb[0].mxu0
    %v2059 = vadd.f32 0.0, %v2058
    %v2060 = vpop.f32.mrb[0].mxu0
    %v2061 = vpop.f32.mrb[0].mxu0
    %v2062 = vadd.f32 0.0, %v2061
    %v2063 = vpop.f32.mrb[0].mxu0
    %2064 = vmatprep.mubr.bf16.mxu0 0
    %2065 = vmatmul.mubr.bf16.gmra.mrb[0].mxu0 %v1485
    %v2066 = vpop.f32.mrb[0].mxu0
    %v2067 = vadd.f32 0.0, %v2066
    %v2068 = vpop.f32.mrb[0].mxu0
    %v2069 = vpop.f32.mrb[0].mxu0
    %v2070 = vadd.f32 0.0, %v2069
    %v2071 = vpop.f32.mrb[0].mxu0
    %2072 = vmatprep.mubr.bf16.mxu0 0
    %2073 = vmatmul.mubr.bf16.gmra.mrb[0].mxu0 %v1487
    %v2074 = vpop.f32.mrb[0].mxu0
    %v2075 = vadd.f32 0.0, %v2074
    %v2076 = vpop.f32.mrb[0].mxu0
    %v2077 = vpop.f32.mrb[0].mxu0
    %v2078 = vadd.f32 0.0, %v2077
    %v2079 = vpop.f32.mrb[0].mxu0
    %2080 = vmatprep.mubr.bf16.mxu0 0
    %2081 = vmatmul.mubr.bf16.gmra.mrb[0].mxu0 %v1489
    %v2082 = vpop.f32.mrb[0].mxu0
    %v2083 = vadd.f32 0.0, %v2082
    %v2084 = vpop.f32.mrb[0].mxu0
    %v2085 = vpop.f32.mrb[0].mxu0
    %v2086 = vadd.f32 0.0, %v2085
    %v2087 = vpop.f32.mrb[0].mxu0
    %2088 = vmatprep.mubr.bf16.mxu0 0
    %2089 = vmatmul.mubr.bf16.gmra.mrb[0].mxu0 %v1491
    %v2090 = vpop.f32.mrb[0].mxu0
    %v2091 = vadd.f32 0.0, %v2090
    %v2092 = vpop.f32.mrb[0].mxu0
    %v2093 = vpop.f32.mrb[0].mxu0
    %v2094 = vadd.f32 0.0, %v2093
    %v2095 = vpop.f32.mrb[0].mxu0
    %2096 = vmatprep.mubr.bf16.mxu0 0
    %2097 = vmatmul.mubr.bf16.gmra.mrb[0].mxu0 %v1493
    %v2098 = vpop.f32.mrb[0].mxu0
    %v2099 = vadd.f32 0.0, %v2098
    %v2100 = vpop.f32.mrb[0].mxu0
    %v2101 = vpop.f32.mrb[0].mxu0
    %v2102 = vadd.f32 0.0, %v2101
    %v2103 = vpop.f32.mrb[0].mxu0
    %2104 = vmatprep.mubr.bf16.mxu0 0
    %2105 = vmatmul.mubr.bf16.gmra.mrb[0].mxu0 %v1495
    %v2106 = vpop.f32.mrb[0].mxu0
    %v2107 = vadd.f32 0.0, %v2106
    %v2108 = vpop.f32.mrb[0].mxu0
    %v2109 = vpop.f32.mrb[0].mxu0
    %v2110 = vadd.f32 0.0, %v2109
    %v2111 = vpop.f32.mrb[0].mxu0
    %2112 = vmatprep.mubr.bf16.mxu0 0
    %2113 = vmatmul.mubr.bf16.gmra.mrb[0].mxu0 %v1497
    %v2114 = vpop.f32.mrb[0].mxu0
    %v2115 = vadd.f32 0.0, %v2114
    %v2116 = vpop.f32.mrb[0].mxu0
    %v2117 = vpop.f32.mrb[0].mxu0
    %v2118 = vadd.f32 0.0, %v2117
    %v2119 = vpop.f32.mrb[0].mxu0
    %2120 = vmatprep.mubr.bf16.mxu0 0
    %2121 = vmatmul.mubr.bf16.gmra.mrb[0].mxu0 %v1499
    %v2122 = vpop.f32.mrb[0].mxu0
    %v2123 = vadd.f32 0.0, %v2122
    %v2124 = vpop.f32.mrb[0].mxu0
    %v2125 = vpop.f32.mrb[0].mxu0
    %v2126 = vadd.f32 0.0, %v2125
    %v2127 = vpop.f32.mrb[0].mxu0
    %2128 = vmatprep.mubr.bf16.mxu0 0
    %2129 = vmatmul.mubr.bf16.gmra.mrb[0].mxu0 %v1501
    %v2130 = vpop.f32.mrb[0].mxu0
    %v2131 = vadd.f32 0.0, %v2130
    %v2132 = vpop.f32.mrb[0].mxu0
    %v2133 = vpop.f32.mrb[0].mxu0
    %v2134 = vadd.f32 0.0, %v2133
    %v2135 = vpop.f32.mrb[0].mxu0
    %2136 = vmatprep.mubr.bf16.mxu0 0
    %2137 = vmatmul.mubr.bf16.gmra.mrb[0].mxu0 %v1503
    %v2138 = vpop.f32.mrb[0].mxu0
    %v2139 = vadd.f32 0.0, %v2138
    %v2140 = vpop.f32.mrb[0].mxu0
    %v2141 = vpop.f32.mrb[0].mxu0
    %v2142 = vadd.f32 0.0, %v2141
    %v2143 = vpop.f32.mrb[0].mxu0
    %2144 = vmatprep.mubr.bf16.mxu0 0
    %2145 = vmatmul.mubr.bf16.gmra.mrb[0].mxu0 %v1988
    %v2146 = vpop.f32.mrb[0].mxu0
    %v2147 = vadd.f32 0.0, %v2146
    %v2148 = vpop.f32.mrb[0].mxu0
    %v2149 = vpop.f32.mrb[0].mxu0
    %v2150 = vadd.f32 0.0, %v2149
    %v2151 = vpop.f32.mrb[0].mxu0
    %2152 = vmatprep.mubr.bf16.mxu0 0
    %2153 = vmatmul.mubr.bf16.gmra.mrb[0].mxu0 %v1505
    %v2154 = vpop.f32.mrb[0].mxu0
    %v2155 = vadd.f32 0.0, %v2154
    %v2156 = vpop.f32.mrb[0].mxu0
    %v2157 = vpop.f32.mrb[0].mxu0
    %v2158 = vadd.f32 0.0, %v2157
    %v2159 = vpop.f32.mrb[0].mxu0
    %2160 = vmatprep.mubr.bf16.mxu0 0
    %2161 = vmatmul.mubr.bf16.gmra.mrb[0].mxu0 %v1507
    %v2162 = vpop.f32.mrb[0].mxu0
    %v2163 = vadd.f32 0.0, %v2162
    %v2164 = vpop.f32.mrb[0].mxu0
    %v2165 = vpop.f32.mrb[0].mxu0
    %v2166 = vadd.f32 0.0, %v2165
    %v2167 = vpop.f32.mrb[0].mxu0
    %2168 = vmatprep.mubr.bf16.mxu0 0
    %2169 = vmatmul.mubr.bf16.gmra.mrb[0].mxu0 %v1509
    %v2170 = vpop.f32.mrb[0].mxu0
    %v2171 = vadd.f32 0.0, %v2170
    %v2172 = vpop.f32.mrb[0].mxu0
    %v2173 = vpop.f32.mrb[0].mxu0
    %v2174 = vadd.f32 0.0, %v2173
    %v2175 = vpop.f32.mrb[0].mxu0
    %2176 = vmatprep.mubr.bf16.mxu0 0
    %2177 = vmatmul.mubr.bf16.gmra.mrb[0].mxu0 %v1511
    %v2178 = vpop.f32.mrb[0].mxu0
    %v2179 = vadd.f32 0.0, %v2178
    %v2180 = vpop.f32.mrb[0].mxu0
    %v2181 = vpop.f32.mrb[0].mxu0
    %v2182 = vadd.f32 0.0, %v2181
    %v2183 = vpop.f32.mrb[0].mxu0
    %2184 = vmatprep.mubr.bf16.mxu0 0
    %2185 = vmatmul.mubr.bf16.gmra.mrb[0].mxu0 %v1513
    %v2186 = vpop.f32.mrb[0].mxu0
    %v2187 = vadd.f32 0.0, %v2186
    %v2188 = vpop.f32.mrb[0].mxu0
    %v2189 = vpop.f32.mrb[0].mxu0
    %v2190 = vadd.f32 0.0, %v2189
    %v2191 = vpop.f32.mrb[0].mxu0
    %2192 = vmatprep.mubr.bf16.mxu0 0
    %2193 = vmatmul.mubr.bf16.gmra.mrb[0].mxu0 %v1515
    %v2194 = vpop.f32.mrb[0].mxu0
    %v2195 = vadd.f32 0.0, %v2194
    %v2196 = vpop.f32.mrb[0].mxu0
    %v2197 = vpop.f32.mrb[0].mxu0
    %v2198 = vadd.f32 0.0, %v2197
    %v2199 = vpop.f32.mrb[0].mxu0
    %2200 = vmatprep.mubr.bf16.mxu0 0
    %2201 = vmatmul.mubr.bf16.gmra.mrb[0].mxu0 %v1517
    %v2202 = vpop.f32.mrb[0].mxu0
    %v2203 = vadd.f32 0.0, %v2202
    %v2204 = vpop.f32.mrb[0].mxu0
    %v2205 = vpop.f32.mrb[0].mxu0
    %v2206 = vadd.f32 0.0, %v2205
    %v2207 = vpop.f32.mrb[0].mxu0
    %2208 = vmatprep.mubr.bf16.mxu0 0
    %2209 = vmatmul.mubr.bf16.gmra.mrb[0].mxu0 %v1519
    %v2210 = vpop.f32.mrb[0].mxu0
    %v2211 = vadd.f32 0.0, %v2210
    %v2212 = vpop.f32.mrb[0].mxu0
    %v2213 = vpop.f32.mrb[0].mxu0
    %v2214 = vadd.f32 0.0, %v2213
    %v2215 = vpop.f32.mrb[0].mxu0
    %2216 = vmatprep.mubr.bf16.mxu0 0
    %2217 = vmatmul.mubr.bf16.gmra.mrb[0].mxu0 %v1521
    %v2218 = vpop.f32.mrb[0].mxu0
    %v2219 = vadd.f32 0.0, %v2218
    %v2220 = vpop.f32.mrb[0].mxu0
    %v2221 = vpop.f32.mrb[0].mxu0
    %v2222 = vadd.f32 0.0, %v2221
    %v2223 = vpop.f32.mrb[0].mxu0
    %2224 = vmatprep.mubr.bf16.mxu0 0
    %2225 = vmatmul.mubr.bf16.gmra.mrb[0].mxu0 %v1523
    %v2226 = vpop.f32.mrb[0].mxu0
    %v2227 = vadd.f32 0.0, %v2226
    %v2228 = vpop.f32.mrb[0].mxu0
    %v2229 = vpop.f32.mrb[0].mxu0
    %v2230 = vadd.f32 0.0, %v2229
    %v2231 = vpop.f32.mrb[0].mxu0
    %2232 = vmatprep.mubr.bf16.mxu0 0
    %2233 = vmatmul.mubr.bf16.gmra.mrb[0].mxu0 %v1525
    %v2234 = vpop.f32.mrb[0].mxu0
    %v2235 = vadd.f32 0.0, %v2234
    %v2236 = vpop.f32.mrb[0].mxu0
    %v2237 = vpop.f32.mrb[0].mxu0
    %v2238 = vadd.f32 0.0, %v2237
    %v2239 = vpop.f32.mrb[0].mxu0
    %2240 = vmatprep.mubr.bf16.mxu0 0
    %2241 = vmatmul.mubr.bf16.gmra.mrb[0].mxu0 %v1527
    %v2242 = vpop.f32.mrb[0].mxu0
    %v2243 = vadd.f32 0.0, %v2242
    %v2244 = vpop.f32.mrb[0].mxu0
    %v2245 = vpop.f32.mrb[0].mxu0
    %v2246 = vadd.f32 0.0, %v2245
    %v2247 = vpop.f32.mrb[0].mxu0
    %2248 = vmatprep.mubr.bf16.mxu0 0
    %2249 = vmatmul.mubr.bf16.gmra.mrb[0].mxu0 %v1529
    %v2250 = vpop.f32.mrb[0].mxu0
    %v2251 = vadd.f32 0.0, %v2250
    %v2252 = vpop.f32.mrb[0].mxu0
    %v2253 = vpop.f32.mrb[0].mxu0
    %v2254 = vadd.f32 0.0, %v2253
    %v2255 = vpop.f32.mrb[0].mxu0
    %2256 = vmatprep.mubr.bf16.mxu0 0
    %2257 = vmatmul.mubr.bf16.gmra.mrb[0].mxu0 %v1531
    %v2258 = vpop.f32.mrb[0].mxu0
    %v2259 = vadd.f32 0.0, %v2258
    %v2260 = vpop.f32.mrb[0].mxu0
    %v2261 = vpop.f32.mrb[0].mxu0
    %v2262 = vadd.f32 0.0, %v2261
    %v2263 = vpop.f32.mrb[0].mxu0
    %2264 = vmatprep.mubr.bf16.mxu0 0
    %2265 = vmatmul.mubr.bf16.gmra.mrb[0].mxu0 %v1533
    %v2266 = vpop.f32.mrb[0].mxu0
    %v2267 = vadd.f32 0.0, %v2266
    %v2268 = vpop.f32.mrb[0].mxu0
    %v2269 = vpop.f32.mrb[0].mxu0
    %v2270 = vadd.f32 0.0, %v2269
    %v2271 = vpop.f32.mrb[0].mxu0
    %2272 = vmatprep.mubr.bf16.mxu0 0
    %2273 = vmatmul.mubr.bf16.gmra.mrb[0].mxu0 %v1990
    %v2274 = vpop.f32.mrb[0].mxu0
    %v2275 = vadd.f32 0.0, %v2274
    %v2276 = vpop.f32.mrb[0].mxu0
    %v2277 = vpop.f32.mrb[0].mxu0
    %v2278 = vadd.f32 0.0, %v2277
    %v2279 = vpop.f32.mrb[0].mxu0
    %2280 = vdwg.mxu0
    %v2281 = vld [vmem:[#allocation2] sm:$0xff]
    %v2282 = vld [vmem:[#allocation2 + $0x8] sm:$0xff]
    %v2283 = vld [vmem:[#allocation2 + $0x10] sm:$0xff]
    %v2284 = vld [vmem:[#allocation2 + $0x18] sm:$0xff]
    %v2285 = vld [vmem:[#allocation2 + $0x20] sm:$0xff]
    %v2286 = vld [vmem:[#allocation2 + $0x28] sm:$0xff]
    %v2287 = vld [vmem:[#allocation2 + $0x30] sm:$0xff]
    %v2288 = vld [vmem:[#allocation2 + $0x38] sm:$0xff]
    %v2289 = vld [vmem:[#allocation2 + $0x40] sm:$0xff]
    %v2290 = vld [vmem:[#allocation2 + $0x48] sm:$0xff]
    %v2291 = vld [vmem:[#allocation2 + $0x50] sm:$0xff]
    %v2292 = vld [vmem:[#allocation2 + $0x58] sm:$0xff]
    %v2293 = vld [vmem:[#allocation2 + $0x60] sm:$0xff]
    %v2294 = vld [vmem:[#allocation2 + $0x68] sm:$0xff]
    %v2295 = vld [vmem:[#allocation2 + $0x70] sm:$0xff]
    %v2296 = vld [vmem:[#allocation2 + $0x78] sm:$0xff]
    %v2297 = vld [vmem:[#allocation2 + $0x80] sm:$0xff]
    %v2298 = vld [vmem:[#allocation2 + $0x88] sm:$0xff]
    %v2299 = vld [vmem:[#allocation2 + $0x90] sm:$0xff]
    %v2300 = vld [vmem:[#allocation2 + $0x98] sm:$0xff]
    %v2301 = vld [vmem:[#allocation2 + $0xa0] sm:$0xff]
    %v2302 = vld [vmem:[#allocation2 + $0xa8] sm:$0xff]
    %v2303 = vld [vmem:[#allocation2 + $0xb0] sm:$0xff]
    %v2304 = vld [vmem:[#allocation2 + $0xb8] sm:$0xff]
    %v2305 = vld [vmem:[#allocation2 + $0xc0] sm:$0xff]
    %v2306 = vld [vmem:[#allocation2 + $0xc8] sm:$0xff]
    %v2307 = vld [vmem:[#allocation2 + $0xd0] sm:$0xff]
    %v2308 = vld [vmem:[#allocation2 + $0xd8] sm:$0xff]
    %v2309 = vld [vmem:[#allocation2 + $0xe0] sm:$0xff]
    %v2310 = vld [vmem:[#allocation2 + $0xe8] sm:$0xff]
    %v2311 = vld [vmem:[#allocation2 + $0xf0] sm:$0xff]
    %v2312 = vld [vmem:[#allocation2 + $0xf8] sm:$0xff]
    %v2313 = vld [vmem:[#allocation2 + $0x100] sm:$0xff]
    %v2314 = vld [vmem:[#allocation2 + $0x108] sm:$0xff]
    %v2315 = vld [vmem:[#allocation2 + $0x110] sm:$0xff]
    %v2316 = vld [vmem:[#allocation2 + $0x118] sm:$0xff]
    %v2317 = vld [vmem:[#allocation2 + $0x120] sm:$0xff]
    %v2318 = vld [vmem:[#allocation2 + $0x128] sm:$0xff]
    %v2319 = vld [vmem:[#allocation2 + $0x130] sm:$0xff]
    %v2320 = vld [vmem:[#allocation2 + $0x138] sm:$0xff]
    %v2321 = vld [vmem:[#allocation2 + $0x140] sm:$0xff]
    %v2322 = vld [vmem:[#allocation2 + $0x148] sm:$0xff]
    %v2323 = vld [vmem:[#allocation2 + $0x150] sm:$0xff]
    %v2324 = vld [vmem:[#allocation2 + $0x158] sm:$0xff]
    %v2325 = vld [vmem:[#allocation2 + $0x160] sm:$0xff]
    %v2326 = vld [vmem:[#allocation2 + $0x168] sm:$0xff]
    %v2327 = vld [vmem:[#allocation2 + $0x170] sm:$0xff]
    %v2328 = vld [vmem:[#allocation2 + $0x178] sm:$0xff]
    %v2329 = vld [vmem:[#allocation2 + $0x180] sm:$0xff]
    %v2330 = vld [vmem:[#allocation2 + $0x188] sm:$0xff]
    %v2331 = vld [vmem:[#allocation2 + $0x190] sm:$0xff]
    %v2332 = vld [vmem:[#allocation2 + $0x198] sm:$0xff]
    %v2333 = vld [vmem:[#allocation2 + $0x1a0] sm:$0xff]
    %v2334 = vld [vmem:[#allocation2 + $0x1a8] sm:$0xff]
    %v2335 = vld [vmem:[#allocation2 + $0x1b0] sm:$0xff]
    %v2336 = vld [vmem:[#allocation2 + $0x1b8] sm:$0xff]
    %v2337 = vld [vmem:[#allocation2 + $0x1c0] sm:$0xff]
    %v2338 = vld [vmem:[#allocation2 + $0x1c8] sm:$0xff]
    %v2339 = vld [vmem:[#allocation2 + $0x1d0] sm:$0xff]
    %v2340 = vld [vmem:[#allocation2 + $0x1d8] sm:$0xff]
    %v2341 = vld [vmem:[#allocation2 + $0x1e0] sm:$0xff]
    %v2342 = vld [vmem:[#allocation2 + $0x1e8] sm:$0xff]
    %v2343 = vld [vmem:[#allocation2 + $0x1f0] sm:$0xff]
    %v2344 = vld [vmem:[#allocation2 + $0x1f8] sm:$0xff]
    %v2345 = vadd.f32 %v2281, %v2027
    %v2346 = vadd.f32 %v2282, %v2030
    %v2347 = vadd.f32 %v2283, %v2035
    %v2348 = vadd.f32 %v2284, %v2038
    %v2349 = vadd.f32 %v2285, %v2043
    %v2350 = vadd.f32 %v2286, %v2046
    %v2351 = vadd.f32 %v2287, %v2051
    %v2352 = vadd.f32 %v2288, %v2054
    %v2353 = vadd.f32 %v2289, %v2059
    %v2354 = vadd.f32 %v2290, %v2062
    %v2355 = vadd.f32 %v2291, %v2067
    %v2356 = vadd.f32 %v2292, %v2070
    %v2357 = vadd.f32 %v2293, %v2075
    %v2358 = vadd.f32 %v2294, %v2078
    %v2359 = vadd.f32 %v2295, %v2083
    %v2360 = vadd.f32 %v2296, %v2086
    %v2361 = vadd.f32 %v2297, %v2091
    %v2362 = vadd.f32 %v2298, %v2094
    %v2363 = vadd.f32 %v2299, %v2099
    %v2364 = vadd.f32 %v2300, %v2102
    %v2365 = vadd.f32 %v2301, %v2107
    %v2366 = vadd.f32 %v2302, %v2110
    %v2367 = vadd.f32 %v2303, %v2115
    %v2368 = vadd.f32 %v2304, %v2118
    %v2369 = vadd.f32 %v2305, %v2123
    %v2370 = vadd.f32 %v2306, %v2126
    %v2371 = vadd.f32 %v2307, %v2131
    %v2372 = vadd.f32 %v2308, %v2134
    %v2373 = vadd.f32 %v2309, %v2139
    %v2374 = vadd.f32 %v2310, %v2142
    %v2375 = vadd.f32 %v2311, %v2147
    %v2376 = vadd.f32 %v2312, %v2150
    %v2377 = vadd.f32 %v2313, %v2155
    %v2378 = vadd.f32 %v2314, %v2158
    %v2379 = vadd.f32 %v2315, %v2163
    %v2380 = vadd.f32 %v2316, %v2166
    %v2381 = vadd.f32 %v2317, %v2171
    %v2382 = vadd.f32 %v2318, %v2174
    %v2383 = vadd.f32 %v2319, %v2179
    %v2384 = vadd.f32 %v2320, %v2182
    %v2385 = vadd.f32 %v2321, %v2187
    %v2386 = vadd.f32 %v2322, %v2190
    %v2387 = vadd.f32 %v2323, %v2195
    %v2388 = vadd.f32 %v2324, %v2198
    %v2389 = vadd.f32 %v2325, %v2203
    %v2390 = vadd.f32 %v2326, %v2206
    %v2391 = vadd.f32 %v2327, %v2211
    %v2392 = vadd.f32 %v2328, %v2214
    %v2393 = vadd.f32 %v2329, %v2219
    %v2394 = vadd.f32 %v2330, %v2222
    %v2395 = vadd.f32 %v2331, %v2227
    %v2396 = vadd.f32 %v2332, %v2230
    %v2397 = vadd.f32 %v2333, %v2235
    %v2398 = vadd.f32 %v2334, %v2238
    %v2399 = vadd.f32 %v2335, %v2243
    %v2400 = vadd.f32 %v2336, %v2246
    %v2401 = vadd.f32 %v2337, %v2251
    %v2402 = vadd.f32 %v2338, %v2254
    %v2403 = vadd.f32 %v2339, %v2259
    %v2404 = vadd.f32 %v2340, %v2262
    %v2405 = vadd.f32 %v2341, %v2267
    %v2406 = vadd.f32 %v2342, %v2270
    %v2407 = vadd.f32 %v2343, %v2275
    %v2408 = vadd.f32 %v2344, %v2278
    %2409 = vst.msk [vmem:[#allocation2] sm:$0xff] %vm1824, %v2345
    %2410 = vst.msk [vmem:[#allocation2 + $0x8] sm:$0xff] %vm1824, %v2346
    %2411 = vst.msk [vmem:[#allocation2 + $0x10] sm:$0xff] %vm1824, %v2347
    %2412 = vst.msk [vmem:[#allocation2 + $0x18] sm:$0xff] %vm1824, %v2348
    %2413 = vst.msk [vmem:[#allocation2 + $0x20] sm:$0xff] %vm1824, %v2349
    %2414 = vst.msk [vmem:[#allocation2 + $0x28] sm:$0xff] %vm1824, %v2350
    %2415 = vst.msk [vmem:[#allocation2 + $0x30] sm:$0xff] %vm1824, %v2351
    %2416 = vst.msk [vmem:[#allocation2 + $0x38] sm:$0xff] %vm1824, %v2352
    %2417 = vst.msk [vmem:[#allocation2 + $0x40] sm:$0xff] %vm1824, %v2353
    %2418 = vst.msk [vmem:[#allocation2 + $0x48] sm:$0xff] %vm1824, %v2354
    %2419 = vst.msk [vmem:[#allocation2 + $0x50] sm:$0xff] %vm1824, %v2355
    %2420 = vst.msk [vmem:[#allocation2 + $0x58] sm:$0xff] %vm1824, %v2356
    %2421 = vst.msk [vmem:[#allocation2 + $0x60] sm:$0xff] %vm1824, %v2357
    %2422 = vst.msk [vmem:[#allocation2 + $0x68] sm:$0xff] %vm1824, %v2358
    %2423 = vst.msk [vmem:[#allocation2 + $0x70] sm:$0xff] %vm1824, %v2359
    %2424 = vst.msk [vmem:[#allocation2 + $0x78] sm:$0xff] %vm1824, %v2360
    %2425 = vst.msk [vmem:[#allocation2 + $0x80] sm:$0xff] %vm1824, %v2361
    %2426 = vst.msk [vmem:[#allocation2 + $0x88] sm:$0xff] %vm1824, %v2362
    %2427 = vst.msk [vmem:[#allocation2 + $0x90] sm:$0xff] %vm1824, %v2363
    %2428 = vst.msk [vmem:[#allocation2 + $0x98] sm:$0xff] %vm1824, %v2364
    %2429 = vst.msk [vmem:[#allocation2 + $0xa0] sm:$0xff] %vm1824, %v2365
    %2430 = vst.msk [vmem:[#allocation2 + $0xa8] sm:$0xff] %vm1824, %v2366
    %2431 = vst.msk [vmem:[#allocation2 + $0xb0] sm:$0xff] %vm1824, %v2367
    %2432 = vst.msk [vmem:[#allocation2 + $0xb8] sm:$0xff] %vm1824, %v2368
    %2433 = vst.msk [vmem:[#allocation2 + $0xc0] sm:$0xff] %vm1824, %v2369
    %2434 = vst.msk [vmem:[#allocation2 + $0xc8] sm:$0xff] %vm1824, %v2370
    %2435 = vst.msk [vmem:[#allocation2 + $0xd0] sm:$0xff] %vm1824, %v2371
    %2436 = vst.msk [vmem:[#allocation2 + $0xd8] sm:$0xff] %vm1824, %v2372
    %2437 = vst.msk [vmem:[#allocation2 + $0xe0] sm:$0xff] %vm1824, %v2373
    %2438 = vst.msk [vmem:[#allocation2 + $0xe8] sm:$0xff] %vm1824, %v2374
    %2439 = vst.msk [vmem:[#allocation2 + $0xf0] sm:$0xff] %vm1824, %v2375
    %2440 = vst.msk [vmem:[#allocation2 + $0xf8] sm:$0xff] %vm1824, %v2376
    %2441 = vst.msk [vmem:[#allocation2 + $0x100] sm:$0xff] %vm1824, %v2377
    %2442 = vst.msk [vmem:[#allocation2 + $0x108] sm:$0xff] %vm1824, %v2378
    %2443 = vst.msk [vmem:[#allocation2 + $0x110] sm:$0xff] %vm1824, %v2379
    %2444 = vst.msk [vmem:[#allocation2 + $0x118] sm:$0xff] %vm1824, %v2380
    %2445 = vst.msk [vmem:[#allocation2 + $0x120] sm:$0xff] %vm1824, %v2381
    %2446 = vst.msk [vmem:[#allocation2 + $0x128] sm:$0xff] %vm1824, %v2382
    %2447 = vst.msk [vmem:[#allocation2 + $0x130] sm:$0xff] %vm1824, %v2383
    %2448 = vst.msk [vmem:[#allocation2 + $0x138] sm:$0xff] %vm1824, %v2384
    %2449 = vst.msk [vmem:[#allocation2 + $0x140] sm:$0xff] %vm1824, %v2385
    %2450 = vst.msk [vmem:[#allocation2 + $0x148] sm:$0xff] %vm1824, %v2386
    %2451 = vst.msk [vmem:[#allocation2 + $0x150] sm:$0xff] %vm1824, %v2387
    %2452 = vst.msk [vmem:[#allocation2 + $0x158] sm:$0xff] %vm1824, %v2388
    %2453 = vst.msk [vmem:[#allocation2 + $0x160] sm:$0xff] %vm1824, %v2389
    %2454 = vst.msk [vmem:[#allocation2 + $0x168] sm:$0xff] %vm1824, %v2390
    %2455 = vst.msk [vmem:[#allocation2 + $0x170] sm:$0xff] %vm1824, %v2391
    %2456 = vst.msk [vmem:[#allocation2 + $0x178] sm:$0xff] %vm1824, %v2392
    %2457 = vst.msk [vmem:[#allocation2 + $0x180] sm:$0xff] %vm1824, %v2393
    %2458 = vst.msk [vmem:[#allocation2 + $0x188] sm:$0xff] %vm1824, %v2394
    %2459 = vst.msk [vmem:[#allocation2 + $0x190] sm:$0xff] %vm1824, %v2395
    %2460 = vst.msk [vmem:[#allocation2 + $0x198] sm:$0xff] %vm1824, %v2396
    %2461 = vst.msk [vmem:[#allocation2 + $0x1a0] sm:$0xff] %vm1824, %v2397
    %2462 = vst.msk [vmem:[#allocation2 + $0x1a8] sm:$0xff] %vm1824, %v2398
    %2463 = vst.msk [vmem:[#allocation2 + $0x1b0] sm:$0xff] %vm1824, %v2399
    %2464 = vst.msk [vmem:[#allocation2 + $0x1b8] sm:$0xff] %vm1824, %v2400
    %2465 = vst.msk [vmem:[#allocation2 + $0x1c0] sm:$0xff] %vm1824, %v2401
    %2466 = vst.msk [vmem:[#allocation2 + $0x1c8] sm:$0xff] %vm1824, %v2402
    %2467 = vst.msk [vmem:[#allocation2 + $0x1d0] sm:$0xff] %vm1824, %v2403
    %2468 = vst.msk [vmem:[#allocation2 + $0x1d8] sm:$0xff] %vm1824, %v2404
    %2469 = vst.msk [vmem:[#allocation2 + $0x1e0] sm:$0xff] %vm1824, %v2405
    %2470 = vst.msk [vmem:[#allocation2 + $0x1e8] sm:$0xff] %vm1824, %v2406
    %2471 = vst.msk [vmem:[#allocation2 + $0x1f0] sm:$0xff] %vm1824, %v2407
    %2472 = vst.msk [vmem:[#allocation2 + $0x1f8] sm:$0xff] %vm1824, %v2408
    %s2473 = scalar_lea.vmem [#allocation6], 96
    %v2474 = vld [vmem:[%s2473] sm:$0xf]
    %v2475 = vld [vmem:[%s2473 + $0x4] sm:$0xf]
    %v2476 = vld [vmem:[%s2473 + $0x8] sm:$0xf]
    %v2477 = vld [vmem:[%s2473 + $0xc] sm:$0xf]
    %v2478 = vld [vmem:[%s2473 + $0x10] sm:$0xf]
    %v2479 = vld [vmem:[%s2473 + $0x14] sm:$0xf]
    %v2480 = vld [vmem:[%s2473 + $0x18] sm:$0xf]
    %v2481 = vld [vmem:[%s2473 + $0x1c] sm:$0xf]
    %v2482 = vld [vmem:[%s2473 + $0x20] sm:$0xf]
    %v2483 = vld [vmem:[%s2473 + $0x24] sm:$0xf]
    %v2484 = vld [vmem:[%s2473 + $0x28] sm:$0xf]
    %v2485 = vld [vmem:[%s2473 + $0x2c] sm:$0xf]
    %v2498 = vunpack.c.l.b16 %v2474
    %v2499 = vunpack.c.l.b16 %v2475
    %v2500 = vunpack.c.l.b16 %v2476
    %v2501 = vunpack.c.l.b16 %v2477
    %v2502 = vunpack.c.l.b16 %v2478
    %v2503 = vunpack.c.l.b16 %v2479
    %v2504 = vunpack.c.l.b16 %v2480
    %v2505 = vunpack.c.l.b16 %v2481
    %v2506 = vunpack.c.l.b16 %v2482
    %v2507 = vunpack.c.l.b16 %v2483
    %v2508 = vunpack.c.l.b16 %v2484
    %v2509 = vunpack.c.l.b16 %v2485
    %v2510 = vpack.c.b16 %v2499, %v2498
    %v2511 = vpack.c.b16 %v2501, %v2500
    %v2512 = vpack.c.b16 %v2503, %v2502
    %v2513 = vpack.c.b16 %v2505, %v2504
    %v2514 = vpack.c.b16 %v2507, %v2506
    %v2515 = vpack.c.b16 %v2509, %v2508
    %2522 = vmatprep.subr.bf16.mxu0 0
    %2523 = vmatpush1.bf16.msra.mxu0 %v2510
    %2524 = vmatprep.subr.bf16.mxu0 0
    %2525 = vmatpush1.bf16.msra.mxu0 %v2511
    %2526 = vmatprep.subr.bf16.mxu0 0
    %2527 = vmatpush1.bf16.msra.mxu0 %v2512
    %2528 = vmatprep.subr.bf16.mxu0 0
    %2529 = vmatpush1.bf16.msra.mxu0 %v2513
    %2530 = vmatprep.subr.bf16.mxu0 0
    %2531 = vmatpush1.bf16.msra.mxu0 %v2514
    %2532 = vmatprep.subr.bf16.mxu0 0
    %2533 = vmatpush1.bf16.msra.mxu0 %v2515
    %2534 = vmatprep.subr.bf16.mxu0 0
    %2535 = vmatpush1.bf16.msra.mxu0 0
    %2536 = vmatprep.subr.bf16.mxu0 0
    %2537 = vmatpush1.bf16.msra.mxu0 0
    %2538 = vmatprep.subr.bf16.mxu0 0
    %2539 = vmatpush1.bf16.msra.mxu0 0
    %2540 = vmatprep.subr.bf16.mxu0 0
    %2541 = vmatpush1.bf16.msra.mxu0 0
    %2542 = vmatprep.subr.bf16.mxu0 0
    %2543 = vmatpush1.bf16.msra.mxu0 0
    %2544 = vmatprep.subr.bf16.mxu0 0
    %2545 = vmatpush1.bf16.msra.mxu0 0
    %2546 = vmatprep.subr.bf16.mxu0 0
    %2547 = vmatpush1.bf16.msra.mxu0 0
    %2548 = vmatprep.subr.bf16.mxu0 0
    %2549 = vmatpush1.bf16.msra.mxu0 0
    %2550 = vmatprep.subr.bf16.mxu0 0
    %2551 = vmatpush1.bf16.msra.mxu0 0
    %2552 = vmatprep.subr.bf16.mxu0 0
    %2553 = vmatpush1.bf16.msra.mxu0 0
    %2554 = vmatprep.mubr.bf16.mxu0 0
    %2555 = vmatmul.mubr.bf16.gmra.mrb[0].mxu0 %v1477
    %v2556 = vpop.f32.mrb[0].mxu0
    %v2557 = vadd.f32 0.0, %v2556
    %v2558 = vpop.f32.mrb[0].mxu0
    %v2559 = vpop.f32.mrb[0].mxu0
    %v2560 = vadd.f32 0.0, %v2559
    %v2561 = vpop.f32.mrb[0].mxu0
    %2562 = vmatprep.mubr.bf16.mxu0 0
    %2563 = vmatmul.mubr.bf16.gmra.mrb[0].mxu0 %v1479
    %v2564 = vpop.f32.mrb[0].mxu0
    %v2565 = vadd.f32 0.0, %v2564
    %v2566 = vpop.f32.mrb[0].mxu0
    %v2567 = vpop.f32.mrb[0].mxu0
    %v2568 = vadd.f32 0.0, %v2567
    %v2569 = vpop.f32.mrb[0].mxu0
    %2570 = vmatprep.mubr.bf16.mxu0 0
    %2571 = vmatmul.mubr.bf16.gmra.mrb[0].mxu0 %v1481
    %v2572 = vpop.f32.mrb[0].mxu0
    %v2573 = vadd.f32 0.0, %v2572
    %v2574 = vpop.f32.mrb[0].mxu0
    %v2575 = vpop.f32.mrb[0].mxu0
    %v2576 = vadd.f32 0.0, %v2575
    %v2577 = vpop.f32.mrb[0].mxu0
    %2578 = vmatprep.mubr.bf16.mxu0 0
    %2579 = vmatmul.mubr.bf16.gmra.mrb[0].mxu0 %v1483
    %v2580 = vpop.f32.mrb[0].mxu0
    %v2581 = vadd.f32 0.0, %v2580
    %v2582 = vpop.f32.mrb[0].mxu0
    %v2583 = vpop.f32.mrb[0].mxu0
    %v2584 = vadd.f32 0.0, %v2583
    %v2585 = vpop.f32.mrb[0].mxu0
    %2586 = vmatprep.mubr.bf16.mxu0 0
    %2587 = vmatmul.mubr.bf16.gmra.mrb[0].mxu0 %v1485
    %v2588 = vpop.f32.mrb[0].mxu0
    %v2589 = vadd.f32 0.0, %v2588
    %v2590 = vpop.f32.mrb[0].mxu0
    %v2591 = vpop.f32.mrb[0].mxu0
    %v2592 = vadd.f32 0.0, %v2591
    %v2593 = vpop.f32.mrb[0].mxu0
    %2594 = vmatprep.mubr.bf16.mxu0 0
    %2595 = vmatmul.mubr.bf16.gmra.mrb[0].mxu0 %v1487
    %v2596 = vpop.f32.mrb[0].mxu0
    %v2597 = vadd.f32 0.0, %v2596
    %v2598 = vpop.f32.mrb[0].mxu0
    %v2599 = vpop.f32.mrb[0].mxu0
    %v2600 = vadd.f32 0.0, %v2599
    %v2601 = vpop.f32.mrb[0].mxu0
    %2602 = vmatprep.mubr.bf16.mxu0 0
    %2603 = vmatmul.mubr.bf16.gmra.mrb[0].mxu0 %v1489
    %v2604 = vpop.f32.mrb[0].mxu0
    %v2605 = vadd.f32 0.0, %v2604
    %v2606 = vpop.f32.mrb[0].mxu0
    %v2607 = vpop.f32.mrb[0].mxu0
    %v2608 = vadd.f32 0.0, %v2607
    %v2609 = vpop.f32.mrb[0].mxu0
    %2610 = vmatprep.mubr.bf16.mxu0 0
    %2611 = vmatmul.mubr.bf16.gmra.mrb[0].mxu0 %v1491
    %v2612 = vpop.f32.mrb[0].mxu0
    %v2613 = vadd.f32 0.0, %v2612
    %v2614 = vpop.f32.mrb[0].mxu0
    %v2615 = vpop.f32.mrb[0].mxu0
    %v2616 = vadd.f32 0.0, %v2615
    %v2617 = vpop.f32.mrb[0].mxu0
    %2618 = vmatprep.mubr.bf16.mxu0 0
    %2619 = vmatmul.mubr.bf16.gmra.mrb[0].mxu0 %v1493
    %v2620 = vpop.f32.mrb[0].mxu0
    %v2621 = vadd.f32 0.0, %v2620
    %v2622 = vpop.f32.mrb[0].mxu0
    %v2623 = vpop.f32.mrb[0].mxu0
    %v2624 = vadd.f32 0.0, %v2623
    %v2625 = vpop.f32.mrb[0].mxu0
    %2626 = vmatprep.mubr.bf16.mxu0 0
    %2627 = vmatmul.mubr.bf16.gmra.mrb[0].mxu0 %v1495
    %v2628 = vpop.f32.mrb[0].mxu0
    %v2629 = vadd.f32 0.0, %v2628
    %v2630 = vpop.f32.mrb[0].mxu0
    %v2631 = vpop.f32.mrb[0].mxu0
    %v2632 = vadd.f32 0.0, %v2631
    %v2633 = vpop.f32.mrb[0].mxu0
    %2634 = vmatprep.mubr.bf16.mxu0 0
    %2635 = vmatmul.mubr.bf16.gmra.mrb[0].mxu0 %v1497
    %v2636 = vpop.f32.mrb[0].mxu0
    %v2637 = vadd.f32 0.0, %v2636
    %v2638 = vpop.f32.mrb[0].mxu0
    %v2639 = vpop.f32.mrb[0].mxu0
    %v2640 = vadd.f32 0.0, %v2639
    %v2641 = vpop.f32.mrb[0].mxu0
    %2642 = vmatprep.mubr.bf16.mxu0 0
    %2643 = vmatmul.mubr.bf16.gmra.mrb[0].mxu0 %v1499
    %v2644 = vpop.f32.mrb[0].mxu0
    %v2645 = vadd.f32 0.0, %v2644
    %v2646 = vpop.f32.mrb[0].mxu0
    %v2647 = vpop.f32.mrb[0].mxu0
    %v2648 = vadd.f32 0.0, %v2647
    %v2649 = vpop.f32.mrb[0].mxu0
    %2650 = vmatprep.mubr.bf16.mxu0 0
    %2651 = vmatmul.mubr.bf16.gmra.mrb[0].mxu0 %v1501
    %v2652 = vpop.f32.mrb[0].mxu0
    %v2653 = vadd.f32 0.0, %v2652
    %v2654 = vpop.f32.mrb[0].mxu0
    %v2655 = vpop.f32.mrb[0].mxu0
    %v2656 = vadd.f32 0.0, %v2655
    %v2657 = vpop.f32.mrb[0].mxu0
    %2658 = vmatprep.mubr.bf16.mxu0 0
    %2659 = vmatmul.mubr.bf16.gmra.mrb[0].mxu0 %v1503
    %v2660 = vpop.f32.mrb[0].mxu0
    %v2661 = vadd.f32 0.0, %v2660
    %v2662 = vpop.f32.mrb[0].mxu0
    %v2663 = vpop.f32.mrb[0].mxu0
    %v2664 = vadd.f32 0.0, %v2663
    %v2665 = vpop.f32.mrb[0].mxu0
    %2666 = vmatprep.mubr.bf16.mxu0 0
    %2667 = vmatmul.mubr.bf16.gmra.mrb[0].mxu0 %v1988
    %v2668 = vpop.f32.mrb[0].mxu0
    %v2669 = vadd.f32 0.0, %v2668
    %v2670 = vpop.f32.mrb[0].mxu0
    %v2671 = vpop.f32.mrb[0].mxu0
    %v2672 = vadd.f32 0.0, %v2671
    %v2673 = vpop.f32.mrb[0].mxu0
    %2674 = vmatprep.mubr.bf16.mxu0 0
    %2675 = vmatmul.mubr.bf16.gmra.mrb[0].mxu0 %v1473
    %v2676 = vpop.f32.mrb[0].mxu0
    %v2677 = vadd.f32 0.0, %v2676
    %v2678 = vpop.f32.mrb[0].mxu0
    %v2679 = vpop.f32.mrb[0].mxu0
    %v2680 = vadd.f32 0.0, %v2679
    %v2681 = vpop.f32.mrb[0].mxu0
    %2682 = vmatprep.mubr.bf16.mxu0 0
    %2683 = vmatmul.mubr.bf16.gmra.mrb[0].mxu0 %v1507
    %v2684 = vpop.f32.mrb[0].mxu0
    %v2685 = vadd.f32 0.0, %v2684
    %v2686 = vpop.f32.mrb[0].mxu0
    %v2687 = vpop.f32.mrb[0].mxu0
    %v2688 = vadd.f32 0.0, %v2687
    %v2689 = vpop.f32.mrb[0].mxu0
    %2690 = vmatprep.mubr.bf16.mxu0 0
    %2691 = vmatmul.mubr.bf16.gmra.mrb[0].mxu0 %v1509
    %v2692 = vpop.f32.mrb[0].mxu0
    %v2693 = vadd.f32 0.0, %v2692
    %v2694 = vpop.f32.mrb[0].mxu0
    %v2695 = vpop.f32.mrb[0].mxu0
    %v2696 = vadd.f32 0.0, %v2695
    %v2697 = vpop.f32.mrb[0].mxu0
    %2698 = vmatprep.mubr.bf16.mxu0 0
    %2699 = vmatmul.mubr.bf16.gmra.mrb[0].mxu0 %v1511
    %v2700 = vpop.f32.mrb[0].mxu0
    %v2701 = vadd.f32 0.0, %v2700
    %v2702 = vpop.f32.mrb[0].mxu0
    %v2703 = vpop.f32.mrb[0].mxu0
    %v2704 = vadd.f32 0.0, %v2703
    %v2705 = vpop.f32.mrb[0].mxu0
    %2706 = vmatprep.mubr.bf16.mxu0 0
    %2707 = vmatmul.mubr.bf16.gmra.mrb[0].mxu0 %v1513
    %v2708 = vpop.f32.mrb[0].mxu0
    %v2709 = vadd.f32 0.0, %v2708
    %v2710 = vpop.f32.mrb[0].mxu0
    %v2711 = vpop.f32.mrb[0].mxu0
    %v2712 = vadd.f32 0.0, %v2711
    %v2713 = vpop.f32.mrb[0].mxu0
    %2714 = vmatprep.mubr.bf16.mxu0 0
    %2715 = vmatmul.mubr.bf16.gmra.mrb[0].mxu0 %v1515
    %v2716 = vpop.f32.mrb[0].mxu0
    %v2717 = vadd.f32 0.0, %v2716
    %v2718 = vpop.f32.mrb[0].mxu0
    %v2719 = vpop.f32.mrb[0].mxu0
    %v2720 = vadd.f32 0.0, %v2719
    %v2721 = vpop.f32.mrb[0].mxu0
    %2722 = vmatprep.mubr.bf16.mxu0 0
    %2723 = vmatmul.mubr.bf16.gmra.mrb[0].mxu0 %v1517
    %v2724 = vpop.f32.mrb[0].mxu0
    %v2725 = vadd.f32 0.0, %v2724
    %v2726 = vpop.f32.mrb[0].mxu0
    %v2727 = vpop.f32.mrb[0].mxu0
    %v2728 = vadd.f32 0.0, %v2727
    %v2729 = vpop.f32.mrb[0].mxu0
    %2730 = vmatprep.mubr.bf16.mxu0 0
    %2731 = vmatmul.mubr.bf16.gmra.mrb[0].mxu0 %v1519
    %v2732 = vpop.f32.mrb[0].mxu0
    %v2733 = vadd.f32 0.0, %v2732
    %v2734 = vpop.f32.mrb[0].mxu0
    %v2735 = vpop.f32.mrb[0].mxu0
    %v2736 = vadd.f32 0.0, %v2735
    %v2737 = vpop.f32.mrb[0].mxu0
    %2738 = vmatprep.mubr.bf16.mxu0 0
    %2739 = vmatmul.mubr.bf16.gmra.mrb[0].mxu0 %v1521
    %v2740 = vpop.f32.mrb[0].mxu0
    %v2741 = vadd.f32 0.0, %v2740
    %v2742 = vpop.f32.mrb[0].mxu0
    %v2743 = vpop.f32.mrb[0].mxu0
    %v2744 = vadd.f32 0.0, %v2743
    %v2745 = vpop.f32.mrb[0].mxu0
    %2746 = vmatprep.mubr.bf16.mxu0 0
    %2747 = vmatmul.mubr.bf16.gmra.mrb[0].mxu0 %v1523
    %v2748 = vpop.f32.mrb[0].mxu0
    %v2749 = vadd.f32 0.0, %v2748
    %v2750 = vpop.f32.mrb[0].mxu0
    %v2751 = vpop.f32.mrb[0].mxu0
    %v2752 = vadd.f32 0.0, %v2751
    %v2753 = vpop.f32.mrb[0].mxu0
    %2754 = vmatprep.mubr.bf16.mxu0 0
    %2755 = vmatmul.mubr.bf16.gmra.mrb[0].mxu0 %v1525
    %v2756 = vpop.f32.mrb[0].mxu0
    %v2757 = vadd.f32 0.0, %v2756
    %v2758 = vpop.f32.mrb[0].mxu0
    %v2759 = vpop.f32.mrb[0].mxu0
    %v2760 = vadd.f32 0.0, %v2759
    %v2761 = vpop.f32.mrb[0].mxu0
    %2762 = vmatprep.mubr.bf16.mxu0 0
    %2763 = vmatmul.mubr.bf16.gmra.mrb[0].mxu0 %v1527
    %v2764 = vpop.f32.mrb[0].mxu0
    %v2765 = vadd.f32 0.0, %v2764
    %v2766 = vpop.f32.mrb[0].mxu0
    %v2767 = vpop.f32.mrb[0].mxu0
    %v2768 = vadd.f32 0.0, %v2767
    %v2769 = vpop.f32.mrb[0].mxu0
    %2770 = vmatprep.mubr.bf16.mxu0 0
    %2771 = vmatmul.mubr.bf16.gmra.mrb[0].mxu0 %v1529
    %v2772 = vpop.f32.mrb[0].mxu0
    %v2773 = vadd.f32 0.0, %v2772
    %v2774 = vpop.f32.mrb[0].mxu0
    %v2775 = vpop.f32.mrb[0].mxu0
    %v2776 = vadd.f32 0.0, %v2775
    %v2777 = vpop.f32.mrb[0].mxu0
    %2778 = vmatprep.mubr.bf16.mxu0 0
    %2779 = vmatmul.mubr.bf16.gmra.mrb[0].mxu0 %v1531
    %v2780 = vpop.f32.mrb[0].mxu0
    %v2781 = vadd.f32 0.0, %v2780
    %v2782 = vpop.f32.mrb[0].mxu0
    %v2783 = vpop.f32.mrb[0].mxu0
    %v2784 = vadd.f32 0.0, %v2783
    %v2785 = vpop.f32.mrb[0].mxu0
    %2786 = vmatprep.mubr.bf16.mxu0 0
    %2787 = vmatmul.mubr.bf16.gmra.mrb[0].mxu0 %v1533
    %v2788 = vpop.f32.mrb[0].mxu0
    %v2789 = vadd.f32 0.0, %v2788
    %v2790 = vpop.f32.mrb[0].mxu0
    %v2791 = vpop.f32.mrb[0].mxu0
    %v2792 = vadd.f32 0.0, %v2791
    %v2793 = vpop.f32.mrb[0].mxu0
    %2794 = vmatprep.mubr.bf16.mxu0 0
    %2795 = vmatmul.mubr.bf16.gmra.mrb[0].mxu0 %v1990
    %v2796 = vpop.f32.mrb[0].mxu0
    %v2797 = vadd.f32 0.0, %v2796
    %v2798 = vpop.f32.mrb[0].mxu0
    %v2799 = vpop.f32.mrb[0].mxu0
    %v2800 = vadd.f32 0.0, %v2799
    %v2801 = vpop.f32.mrb[0].mxu0
    %2802 = vmatprep.mubr.bf16.mxu0 0
    %2803 = vmatmul.mubr.bf16.gmra.mrb[0].mxu0 %v1473
    %v2804 = vpop.f32.mrb[0].mxu0
    %v2805 = vadd.f32 0.0, %v2804
    %v2806 = vpop.f32.mrb[0].mxu0
    %v2807 = vpop.f32.mrb[0].mxu0
    %v2808 = vadd.f32 0.0, %v2807
    %v2809 = vpop.f32.mrb[0].mxu0
    %2810 = vdwg.mxu0
    %v2811 = vld [vmem:[#allocation2] sm:$0xff]
    %v2812 = vld [vmem:[#allocation2 + $0x8] sm:$0xff]
    %v2813 = vld [vmem:[#allocation2 + $0x10] sm:$0xff]
    %v2814 = vld [vmem:[#allocation2 + $0x18] sm:$0xff]
    %v2815 = vld [vmem:[#allocation2 + $0x20] sm:$0xff]
    %v2816 = vld [vmem:[#allocation2 + $0x28] sm:$0xff]
    %v2817 = vld [vmem:[#allocation2 + $0x30] sm:$0xff]
    %v2818 = vld [vmem:[#allocation2 + $0x38] sm:$0xff]
    %v2819 = vld [vmem:[#allocation2 + $0x40] sm:$0xff]
    %v2820 = vld [vmem:[#allocation2 + $0x48] sm:$0xff]
    %v2821 = vld [vmem:[#allocation2 + $0x50] sm:$0xff]
    %v2822 = vld [vmem:[#allocation2 + $0x58] sm:$0xff]
    %v2823 = vld [vmem:[#allocation2 + $0x60] sm:$0xff]
    %v2824 = vld [vmem:[#allocation2 + $0x68] sm:$0xff]
    %v2825 = vld [vmem:[#allocation2 + $0x70] sm:$0xff]
    %v2826 = vld [vmem:[#allocation2 + $0x78] sm:$0xff]
    %v2827 = vld [vmem:[#allocation2 + $0x80] sm:$0xff]
    %v2828 = vld [vmem:[#allocation2 + $0x88] sm:$0xff]
    %v2829 = vld [vmem:[#allocation2 + $0x90] sm:$0xff]
    %v2830 = vld [vmem:[#allocation2 + $0x98] sm:$0xff]
    %v2831 = vld [vmem:[#allocation2 + $0xa0] sm:$0xff]
    %v2832 = vld [vmem:[#allocation2 + $0xa8] sm:$0xff]
    %v2833 = vld [vmem:[#allocation2 + $0xb0] sm:$0xff]
    %v2834 = vld [vmem:[#allocation2 + $0xb8] sm:$0xff]
    %v2835 = vld [vmem:[#allocation2 + $0xc0] sm:$0xff]
    %v2836 = vld [vmem:[#allocation2 + $0xc8] sm:$0xff]
    %v2837 = vld [vmem:[#allocation2 + $0xd0] sm:$0xff]
    %v2838 = vld [vmem:[#allocation2 + $0xd8] sm:$0xff]
    %v2839 = vld [vmem:[#allocation2 + $0xe0] sm:$0xff]
    %v2840 = vld [vmem:[#allocation2 + $0xe8] sm:$0xff]
    %v2841 = vld [vmem:[#allocation2 + $0xf0] sm:$0xff]
    %v2842 = vld [vmem:[#allocation2 + $0xf8] sm:$0xff]
    %v2843 = vld [vmem:[#allocation2 + $0x100] sm:$0xff]
    %v2844 = vld [vmem:[#allocation2 + $0x108] sm:$0xff]
    %v2845 = vld [vmem:[#allocation2 + $0x110] sm:$0xff]
    %v2846 = vld [vmem:[#allocation2 + $0x118] sm:$0xff]
    %v2847 = vld [vmem:[#allocation2 + $0x120] sm:$0xff]
    %v2848 = vld [vmem:[#allocation2 + $0x128] sm:$0xff]
    %v2849 = vld [vmem:[#allocation2 + $0x130] sm:$0xff]
    %v2850 = vld [vmem:[#allocation2 + $0x138] sm:$0xff]
    %v2851 = vld [vmem:[#allocation2 + $0x140] sm:$0xff]
    %v2852 = vld [vmem:[#allocation2 + $0x148] sm:$0xff]
    %v2853 = vld [vmem:[#allocation2 + $0x150] sm:$0xff]
    %v2854 = vld [vmem:[#allocation2 + $0x158] sm:$0xff]
    %v2855 = vld [vmem:[#allocation2 + $0x160] sm:$0xff]
    %v2856 = vld [vmem:[#allocation2 + $0x168] sm:$0xff]
    %v2857 = vld [vmem:[#allocation2 + $0x170] sm:$0xff]
    %v2858 = vld [vmem:[#allocation2 + $0x178] sm:$0xff]
    %v2859 = vld [vmem:[#allocation2 + $0x180] sm:$0xff]
    %v2860 = vld [vmem:[#allocation2 + $0x188] sm:$0xff]
    %v2861 = vld [vmem:[#allocation2 + $0x190] sm:$0xff]
    %v2862 = vld [vmem:[#allocation2 + $0x198] sm:$0xff]
    %v2863 = vld [vmem:[#allocation2 + $0x1a0] sm:$0xff]
    %v2864 = vld [vmem:[#allocation2 + $0x1a8] sm:$0xff]
    %v2865 = vld [vmem:[#allocation2 + $0x1b0] sm:$0xff]
    %v2866 = vld [vmem:[#allocation2 + $0x1b8] sm:$0xff]
    %v2867 = vld [vmem:[#allocation2 + $0x1c0] sm:$0xff]
    %v2868 = vld [vmem:[#allocation2 + $0x1c8] sm:$0xff]
    %v2869 = vld [vmem:[#allocation2 + $0x1d0] sm:$0xff]
    %v2870 = vld [vmem:[#allocation2 + $0x1d8] sm:$0xff]
    %v2871 = vld [vmem:[#allocation2 + $0x1e0] sm:$0xff]
    %v2872 = vld [vmem:[#allocation2 + $0x1e8] sm:$0xff]
    %v2873 = vld [vmem:[#allocation2 + $0x1f0] sm:$0xff]
    %v2874 = vld [vmem:[#allocation2 + $0x1f8] sm:$0xff]
    %v2875 = vadd.f32 %v2811, %v2557
    %v2876 = vadd.f32 %v2812, %v2560
    %v2877 = vadd.f32 %v2813, %v2565
    %v2878 = vadd.f32 %v2814, %v2568
    %v2879 = vadd.f32 %v2815, %v2573
    %v2880 = vadd.f32 %v2816, %v2576
    %v2881 = vadd.f32 %v2817, %v2581
    %v2882 = vadd.f32 %v2818, %v2584
    %v2883 = vadd.f32 %v2819, %v2589
    %v2884 = vadd.f32 %v2820, %v2592
    %v2885 = vadd.f32 %v2821, %v2597
    %v2886 = vadd.f32 %v2822, %v2600
    %v2887 = vadd.f32 %v2823, %v2605
    %v2888 = vadd.f32 %v2824, %v2608
    %v2889 = vadd.f32 %v2825, %v2613
    %v2890 = vadd.f32 %v2826, %v2616
    %v2891 = vadd.f32 %v2827, %v2621
    %v2892 = vadd.f32 %v2828, %v2624
    %v2893 = vadd.f32 %v2829, %v2629
    %v2894 = vadd.f32 %v2830, %v2632
    %v2895 = vadd.f32 %v2831, %v2637
    %v2896 = vadd.f32 %v2832, %v2640
    %v2897 = vadd.f32 %v2833, %v2645
    %v2898 = vadd.f32 %v2834, %v2648
    %v2899 = vadd.f32 %v2835, %v2653
    %v2900 = vadd.f32 %v2836, %v2656
    %v2901 = vadd.f32 %v2837, %v2661
    %v2902 = vadd.f32 %v2838, %v2664
    %v2903 = vadd.f32 %v2839, %v2669
    %v2904 = vadd.f32 %v2840, %v2672
    %v2905 = vadd.f32 %v2841, %v2677
    %v2906 = vadd.f32 %v2842, %v2680
    %v2907 = vadd.f32 %v2843, %v2685
    %v2908 = vadd.f32 %v2844, %v2688
    %v2909 = vadd.f32 %v2845, %v2693
    %v2910 = vadd.f32 %v2846, %v2696
    %v2911 = vadd.f32 %v2847, %v2701
    %v2912 = vadd.f32 %v2848, %v2704
    %v2913 = vadd.f32 %v2849, %v2709
    %v2914 = vadd.f32 %v2850, %v2712
    %v2915 = vadd.f32 %v2851, %v2717
    %v2916 = vadd.f32 %v2852, %v2720
    %v2917 = vadd.f32 %v2853, %v2725
    %v2918 = vadd.f32 %v2854, %v2728
    %v2919 = vadd.f32 %v2855, %v2733
    %v2920 = vadd.f32 %v2856, %v2736
    %v2921 = vadd.f32 %v2857, %v2741
    %v2922 = vadd.f32 %v2858, %v2744
    %v2923 = vadd.f32 %v2859, %v2749
    %v2924 = vadd.f32 %v2860, %v2752
    %v2925 = vadd.f32 %v2861, %v2757
    %v2926 = vadd.f32 %v2862, %v2760
    %v2927 = vadd.f32 %v2863, %v2765
    %v2928 = vadd.f32 %v2864, %v2768
    %v2929 = vadd.f32 %v2865, %v2773
    %v2930 = vadd.f32 %v2866, %v2776
    %v2931 = vadd.f32 %v2867, %v2781
    %v2932 = vadd.f32 %v2868, %v2784
    %v2933 = vadd.f32 %v2869, %v2789
    %v2934 = vadd.f32 %v2870, %v2792
    %v2935 = vadd.f32 %v2871, %v2797
    %v2936 = vadd.f32 %v2872, %v2800
    %v2937 = vadd.f32 %v2873, %v2805
    %v2938 = vadd.f32 %v2874, %v2808
    %2939 = vst.msk [vmem:[#allocation2] sm:$0xff] %vm1824, %v2875
    %2940 = vst.msk [vmem:[#allocation2 + $0x8] sm:$0xff] %vm1824, %v2876
    %2941 = vst.msk [vmem:[#allocation2 + $0x10] sm:$0xff] %vm1824, %v2877
    %2942 = vst.msk [vmem:[#allocation2 + $0x18] sm:$0xff] %vm1824, %v2878
    %2943 = vst.msk [vmem:[#allocation2 + $0x20] sm:$0xff] %vm1824, %v2879
    %2944 = vst.msk [vmem:[#allocation2 + $0x28] sm:$0xff] %vm1824, %v2880
    %2945 = vst.msk [vmem:[#allocation2 + $0x30] sm:$0xff] %vm1824, %v2881
    %2946 = vst.msk [vmem:[#allocation2 + $0x38] sm:$0xff] %vm1824, %v2882
    %2947 = vst.msk [vmem:[#allocation2 + $0x40] sm:$0xff] %vm1824, %v2883
    %2948 = vst.msk [vmem:[#allocation2 + $0x48] sm:$0xff] %vm1824, %v2884
    %2949 = vst.msk [vmem:[#allocation2 + $0x50] sm:$0xff] %vm1824, %v2885
    %2950 = vst.msk [vmem:[#allocation2 + $0x58] sm:$0xff] %vm1824, %v2886
    %2951 = vst.msk [vmem:[#allocation2 + $0x60] sm:$0xff] %vm1824, %v2887
    %2952 = vst.msk [vmem:[#allocation2 + $0x68] sm:$0xff] %vm1824, %v2888
    %2953 = vst.msk [vmem:[#allocation2 + $0x70] sm:$0xff] %vm1824, %v2889
    %2954 = vst.msk [vmem:[#allocation2 + $0x78] sm:$0xff] %vm1824, %v2890
    %2955 = vst.msk [vmem:[#allocation2 + $0x80] sm:$0xff] %vm1824, %v2891
    %2956 = vst.msk [vmem:[#allocation2 + $0x88] sm:$0xff] %vm1824, %v2892
    %2957 = vst.msk [vmem:[#allocation2 + $0x90] sm:$0xff] %vm1824, %v2893
    %2958 = vst.msk [vmem:[#allocation2 + $0x98] sm:$0xff] %vm1824, %v2894
    %2959 = vst.msk [vmem:[#allocation2 + $0xa0] sm:$0xff] %vm1824, %v2895
    %2960 = vst.msk [vmem:[#allocation2 + $0xa8] sm:$0xff] %vm1824, %v2896
    %2961 = vst.msk [vmem:[#allocation2 + $0xb0] sm:$0xff] %vm1824, %v2897
    %2962 = vst.msk [vmem:[#allocation2 + $0xb8] sm:$0xff] %vm1824, %v2898
    %2963 = vst.msk [vmem:[#allocation2 + $0xc0] sm:$0xff] %vm1824, %v2899
    %2964 = vst.msk [vmem:[#allocation2 + $0xc8] sm:$0xff] %vm1824, %v2900
    %2965 = vst.msk [vmem:[#allocation2 + $0xd0] sm:$0xff] %vm1824, %v2901
    %2966 = vst.msk [vmem:[#allocation2 + $0xd8] sm:$0xff] %vm1824, %v2902
    %2967 = vst.msk [vmem:[#allocation2 + $0xe0] sm:$0xff] %vm1824, %v2903
    %2968 = vst.msk [vmem:[#allocation2 + $0xe8] sm:$0xff] %vm1824, %v2904
    %2969 = vst.msk [vmem:[#allocation2 + $0xf0] sm:$0xff] %vm1824, %v2905
    %2970 = vst.msk [vmem:[#allocation2 + $0xf8] sm:$0xff] %vm1824, %v2906
    %2971 = vst.msk [vmem:[#allocation2 + $0x100] sm:$0xff] %vm1824, %v2907
    %2972 = vst.msk [vmem:[#allocation2 + $0x108] sm:$0xff] %vm1824, %v2908
    %2973 = vst.msk [vmem:[#allocation2 + $0x110] sm:$0xff] %vm1824, %v2909
    %2974 = vst.msk [vmem:[#allocation2 + $0x118] sm:$0xff] %vm1824, %v2910
    %2975 = vst.msk [vmem:[#allocation2 + $0x120] sm:$0xff] %vm1824, %v2911
    %2976 = vst.msk [vmem:[#allocation2 + $0x128] sm:$0xff] %vm1824, %v2912
    %2977 = vst.msk [vmem:[#allocation2 + $0x130] sm:$0xff] %vm1824, %v2913
    %2978 = vst.msk [vmem:[#allocation2 + $0x138] sm:$0xff] %vm1824, %v2914
    %2979 = vst.msk [vmem:[#allocation2 + $0x140] sm:$0xff] %vm1824, %v2915
    %2980 = vst.msk [vmem:[#allocation2 + $0x148] sm:$0xff] %vm1824, %v2916
    %2981 = vst.msk [vmem:[#allocation2 + $0x150] sm:$0xff] %vm1824, %v2917
    %2982 = vst.msk [vmem:[#allocation2 + $0x158] sm:$0xff] %vm1824, %v2918
    %2983 = vst.msk [vmem:[#allocation2 + $0x160] sm:$0xff] %vm1824, %v2919
    %2984 = vst.msk [vmem:[#allocation2 + $0x168] sm:$0xff] %vm1824, %v2920
    %2985 = vst.msk [vmem:[#allocation2 + $0x170] sm:$0xff] %vm1824, %v2921
    %2986 = vst.msk [vmem:[#allocation2 + $0x178] sm:$0xff] %vm1824, %v2922
    %2987 = vst.msk [vmem:[#allocation2 + $0x180] sm:$0xff] %vm1824, %v2923
    %2988 = vst.msk [vmem:[#allocation2 + $0x188] sm:$0xff] %vm1824, %v2924
    %2989 = vst.msk [vmem:[#allocation2 + $0x190] sm:$0xff] %vm1824, %v2925
    %2990 = vst.msk [vmem:[#allocation2 + $0x198] sm:$0xff] %vm1824, %v2926
    %2991 = vst.msk [vmem:[#allocation2 + $0x1a0] sm:$0xff] %vm1824, %v2927
    %2992 = vst.msk [vmem:[#allocation2 + $0x1a8] sm:$0xff] %vm1824, %v2928
    %2993 = vst.msk [vmem:[#allocation2 + $0x1b0] sm:$0xff] %vm1824, %v2929
    %2994 = vst.msk [vmem:[#allocation2 + $0x1b8] sm:$0xff] %vm1824, %v2930
    %2995 = vst.msk [vmem:[#allocation2 + $0x1c0] sm:$0xff] %vm1824, %v2931
    %2996 = vst.msk [vmem:[#allocation2 + $0x1c8] sm:$0xff] %vm1824, %v2932
    %2997 = vst.msk [vmem:[#allocation2 + $0x1d0] sm:$0xff] %vm1824, %v2933
    %2998 = vst.msk [vmem:[#allocation2 + $0x1d8] sm:$0xff] %vm1824, %v2934
    %2999 = vst.msk [vmem:[#allocation2 + $0x1e0] sm:$0xff] %vm1824, %v2935
    %3000 = vst.msk [vmem:[#allocation2 + $0x1e8] sm:$0xff] %vm1824, %v2936
    %3001 = vst.msk [vmem:[#allocation2 + $0x1f0] sm:$0xff] %vm1824, %v2937
    %3002 = vst.msk [vmem:[#allocation2 + $0x1f8] sm:$0xff] %vm1824, %v2938
    %v3003 = vld [vmem:[#allocation2] sm:$0xff]
    %v3004 = vld [vmem:[#allocation2 + $0x8] sm:$0xff]
    %v3005 = vld [vmem:[#allocation2 + $0x10] sm:$0xff]
    %v3006 = vld [vmem:[#allocation2 + $0x18] sm:$0xff]
    %v3007 = vld [vmem:[#allocation2 + $0x20] sm:$0xff]
    %v3008 = vld [vmem:[#allocation2 + $0x28] sm:$0xff]
    %v3009 = vld [vmem:[#allocation2 + $0x30] sm:$0xff]
    %v3010 = vld [vmem:[#allocation2 + $0x38] sm:$0xff]
    %v3011 = vld [vmem:[#allocation2 + $0x40] sm:$0xff]
    %v3012 = vld [vmem:[#allocation2 + $0x48] sm:$0xff]
    %v3013 = vld [vmem:[#allocation2 + $0x50] sm:$0xff]
    %v3014 = vld [vmem:[#allocation2 + $0x58] sm:$0xff]
    %v3015 = vld [vmem:[#allocation2 + $0x60] sm:$0xff]
    %v3016 = vld [vmem:[#allocation2 + $0x68] sm:$0xff]
    %v3017 = vld [vmem:[#allocation2 + $0x70] sm:$0xff]
    %v3018 = vld [vmem:[#allocation2 + $0x78] sm:$0xff]
    %v3019 = vld [vmem:[#allocation2 + $0x80] sm:$0xff]
    %v3020 = vld [vmem:[#allocation2 + $0x88] sm:$0xff]
    %v3021 = vld [vmem:[#allocation2 + $0x90] sm:$0xff]
    %v3022 = vld [vmem:[#allocation2 + $0x98] sm:$0xff]
    %v3023 = vld [vmem:[#allocation2 + $0xa0] sm:$0xff]
    %v3024 = vld [vmem:[#allocation2 + $0xa8] sm:$0xff]
    %v3025 = vld [vmem:[#allocation2 + $0xb0] sm:$0xff]
    %v3026 = vld [vmem:[#allocation2 + $0xb8] sm:$0xff]
    %v3027 = vld [vmem:[#allocation2 + $0xc0] sm:$0xff]
    %v3028 = vld [vmem:[#allocation2 + $0xc8] sm:$0xff]
    %v3029 = vld [vmem:[#allocation2 + $0xd0] sm:$0xff]
    %v3030 = vld [vmem:[#allocation2 + $0xd8] sm:$0xff]
    %v3031 = vld [vmem:[#allocation2 + $0xe0] sm:$0xff]
    %v3032 = vld [vmem:[#allocation2 + $0xe8] sm:$0xff]
    %v3033 = vld [vmem:[#allocation2 + $0xf0] sm:$0xff]
    %v3034 = vld [vmem:[#allocation2 + $0xf8] sm:$0xff]
    %v3035 = vld [vmem:[#allocation2 + $0x100] sm:$0xff]
    %v3036 = vld [vmem:[#allocation2 + $0x108] sm:$0xff]
    %v3037 = vld [vmem:[#allocation2 + $0x110] sm:$0xff]
    %v3038 = vld [vmem:[#allocation2 + $0x118] sm:$0xff]
    %v3039 = vld [vmem:[#allocation2 + $0x120] sm:$0xff]
    %v3040 = vld [vmem:[#allocation2 + $0x128] sm:$0xff]
    %v3041 = vld [vmem:[#allocation2 + $0x130] sm:$0xff]
    %v3042 = vld [vmem:[#allocation2 + $0x138] sm:$0xff]
    %v3043 = vld [vmem:[#allocation2 + $0x140] sm:$0xff]
    %v3044 = vld [vmem:[#allocation2 + $0x148] sm:$0xff]
    %v3045 = vld [vmem:[#allocation2 + $0x150] sm:$0xff]
    %v3046 = vld [vmem:[#allocation2 + $0x158] sm:$0xff]
    %v3047 = vld [vmem:[#allocation2 + $0x160] sm:$0xff]
    %v3048 = vld [vmem:[#allocation2 + $0x168] sm:$0xff]
    %v3049 = vld [vmem:[#allocation2 + $0x170] sm:$0xff]
    %v3050 = vld [vmem:[#allocation2 + $0x178] sm:$0xff]
    %v3051 = vld [vmem:[#allocation2 + $0x180] sm:$0xff]
    %v3052 = vld [vmem:[#allocation2 + $0x188] sm:$0xff]
    %v3053 = vld [vmem:[#allocation2 + $0x190] sm:$0xff]
    %v3054 = vld [vmem:[#allocation2 + $0x198] sm:$0xff]
    %v3055 = vld [vmem:[#allocation2 + $0x1a0] sm:$0xff]
    %v3056 = vld [vmem:[#allocation2 + $0x1a8] sm:$0xff]
    %v3057 = vld [vmem:[#allocation2 + $0x1b0] sm:$0xff]
    %v3058 = vld [vmem:[#allocation2 + $0x1b8] sm:$0xff]
    %v3059 = vld [vmem:[#allocation2 + $0x1c0] sm:$0xff]
    %v3060 = vld [vmem:[#allocation2 + $0x1c8] sm:$0xff]
    %v3061 = vld [vmem:[#allocation2 + $0x1d0] sm:$0xff]
    %v3062 = vld [vmem:[#allocation2 + $0x1d8] sm:$0xff]
    %v3063 = vld [vmem:[#allocation2 + $0x1e0] sm:$0xff]
    %v3064 = vld [vmem:[#allocation2 + $0x1e8] sm:$0xff]
    %v3065 = vld [vmem:[#allocation2 + $0x1f0] sm:$0xff]
    %v3066 = vld [vmem:[#allocation2 + $0x1f8] sm:$0xff]
    %v3067 = vld [vmem:[#allocation8] sm:$0x1]
    %v3069 = vlaneseq
    %v3070 = vshrl.u32 %v3069, 7
    %v3071 = vsub.s32 0, %v3070
    %v3072 = vrot.slane %v3067, %v3071
    %v3074 = vadd.f32 %v3003, %v3072
    %v3075 = vadd.f32 %v3004, %v3072
    %v3076 = vadd.f32 %v3005, %v3072
    %v3077 = vadd.f32 %v3006, %v3072
    %v3078 = vadd.f32 %v3007, %v3072
    %v3079 = vadd.f32 %v3008, %v3072
    %v3080 = vadd.f32 %v3009, %v3072
    %v3081 = vadd.f32 %v3010, %v3072
    %v3082 = vadd.f32 %v3011, %v3072
    %v3083 = vadd.f32 %v3012, %v3072
    %v3084 = vadd.f32 %v3013, %v3072
    %v3085 = vadd.f32 %v3014, %v3072
    %v3086 = vadd.f32 %v3015, %v3072
    %v3087 = vadd.f32 %v3016, %v3072
    %v3088 = vadd.f32 %v3017, %v3072
    %v3089 = vadd.f32 %v3018, %v3072
    %v3090 = vadd.f32 %v3019, %v3072
    %v3091 = vadd.f32 %v3020, %v3072
    %v3092 = vadd.f32 %v3021, %v3072
    %v3093 = vadd.f32 %v3022, %v3072
    %v3094 = vadd.f32 %v3023, %v3072
    %v3095 = vadd.f32 %v3024, %v3072
    %v3096 = vadd.f32 %v3025, %v3072
    %v3097 = vadd.f32 %v3026, %v3072
    %v3098 = vadd.f32 %v3027, %v3072
    %v3099 = vadd.f32 %v3028, %v3072
    %v3100 = vadd.f32 %v3029, %v3072
    %v3101 = vadd.f32 %v3030, %v3072
    %v3102 = vadd.f32 %v3031, %v3072
    %v3103 = vadd.f32 %v3032, %v3072
    %v3104 = vadd.f32 %v3033, %v3072
    %v3105 = vadd.f32 %v3034, %v3072
    %v3106 = vadd.f32 %v3035, %v3072
    %v3107 = vadd.f32 %v3036, %v3072
    %v3108 = vadd.f32 %v3037, %v3072
    %v3109 = vadd.f32 %v3038, %v3072
    %v3110 = vadd.f32 %v3039, %v3072
    %v3111 = vadd.f32 %v3040, %v3072
    %v3112 = vadd.f32 %v3041, %v3072
    %v3113 = vadd.f32 %v3042, %v3072
    %v3114 = vadd.f32 %v3043, %v3072
    %v3115 = vadd.f32 %v3044, %v3072
    %v3116 = vadd.f32 %v3045, %v3072
    %v3117 = vadd.f32 %v3046, %v3072
    %v3118 = vadd.f32 %v3047, %v3072
    %v3119 = vadd.f32 %v3048, %v3072
    %v3120 = vadd.f32 %v3049, %v3072
    %v3121 = vadd.f32 %v3050, %v3072
    %v3122 = vadd.f32 %v3051, %v3072
    %v3123 = vadd.f32 %v3052, %v3072
    %v3124 = vadd.f32 %v3053, %v3072
    %v3125 = vadd.f32 %v3054, %v3072
    %v3126 = vadd.f32 %v3055, %v3072
    %v3127 = vadd.f32 %v3056, %v3072
    %v3128 = vadd.f32 %v3057, %v3072
    %v3129 = vadd.f32 %v3058, %v3072
    %v3130 = vadd.f32 %v3059, %v3072
    %v3131 = vadd.f32 %v3060, %v3072
    %v3132 = vadd.f32 %v3061, %v3072
    %v3133 = vadd.f32 %v3062, %v3072
    %v3134 = vadd.f32 %v3063, %v3072
    %v3135 = vadd.f32 %v3064, %v3072
    %v3136 = vadd.f32 %v3065, %v3072
    %v3137 = vadd.f32 %v3066, %v3072
    %v3138 = vmax.f32 %v3074, 0.0
    %v3139 = vmax.f32 %v3075, 0.0
    %v3140 = vmax.f32 %v3076, 0.0
    %v3141 = vmax.f32 %v3077, 0.0
    %v3142 = vmax.f32 %v3078, 0.0
    %v3143 = vmax.f32 %v3079, 0.0
    %v3144 = vmax.f32 %v3080, 0.0
    %v3145 = vmax.f32 %v3081, 0.0
    %v3146 = vmax.f32 %v3082, 0.0
    %v3147 = vmax.f32 %v3083, 0.0
    %v3148 = vmax.f32 %v3084, 0.0
    %v3149 = vmax.f32 %v3085, 0.0
    %v3150 = vmax.f32 %v3086, 0.0
    %v3151 = vmax.f32 %v3087, 0.0
    %v3152 = vmax.f32 %v3088, 0.0
    %v3153 = vmax.f32 %v3089, 0.0
    %v3154 = vmax.f32 %v3090, 0.0
    %v3155 = vmax.f32 %v3091, 0.0
    %v3156 = vmax.f32 %v3092, 0.0
    %v3157 = vmax.f32 %v3093, 0.0
    %v3158 = vmax.f32 %v3094, 0.0
    %v3159 = vmax.f32 %v3095, 0.0
    %v3160 = vmax.f32 %v3096, 0.0
    %v3161 = vmax.f32 %v3097, 0.0
    %v3162 = vmax.f32 %v3098, 0.0
    %v3163 = vmax.f32 %v3099, 0.0
    %v3164 = vmax.f32 %v3100, 0.0
    %v3165 = vmax.f32 %v3101, 0.0
    %v3166 = vmax.f32 %v3102, 0.0
    %v3167 = vmax.f32 %v3103, 0.0
    %v3168 = vmax.f32 %v3104, 0.0
    %v3169 = vmax.f32 %v3105, 0.0
    %v3170 = vmax.f32 %v3106, 0.0
    %v3171 = vmax.f32 %v3107, 0.0
    %v3172 = vmax.f32 %v3108, 0.0
    %v3173 = vmax.f32 %v3109, 0.0
    %v3174 = vmax.f32 %v3110, 0.0
    %v3175 = vmax.f32 %v3111, 0.0
    %v3176 = vmax.f32 %v3112, 0.0
    %v3177 = vmax.f32 %v3113, 0.0
    %v3178 = vmax.f32 %v3114, 0.0
    %v3179 = vmax.f32 %v3115, 0.0
    %v3180 = vmax.f32 %v3116, 0.0
    %v3181 = vmax.f32 %v3117, 0.0
    %v3182 = vmax.f32 %v3118, 0.0
    %v3183 = vmax.f32 %v3119, 0.0
    %v3184 = vmax.f32 %v3120, 0.0
    %v3185 = vmax.f32 %v3121, 0.0
    %v3186 = vmax.f32 %v3122, 0.0
    %v3187 = vmax.f32 %v3123, 0.0
    %v3188 = vmax.f32 %v3124, 0.0
    %v3189 = vmax.f32 %v3125, 0.0
    %v3190 = vmax.f32 %v3126, 0.0
    %v3191 = vmax.f32 %v3127, 0.0
    %v3192 = vmax.f32 %v3128, 0.0
    %v3193 = vmax.f32 %v3129, 0.0
    %v3194 = vmax.f32 %v3130, 0.0
    %v3195 = vmax.f32 %v3131, 0.0
    %v3196 = vmax.f32 %v3132, 0.0
    %v3197 = vmax.f32 %v3133, 0.0
    %v3198 = vmax.f32 %v3134, 0.0
    %v3199 = vmax.f32 %v3135, 0.0
    %v3200 = vmax.f32 %v3136, 0.0
    %v3201 = vmax.f32 %v3137, 0.0
    %v3202 = vpack.c.bf16 %v3139, %v3138
    %v3203 = vpack.c.bf16 %v3141, %v3140
    %v3204 = vpack.c.bf16 %v3143, %v3142
    %v3205 = vpack.c.bf16 %v3145, %v3144
    %v3206 = vpack.c.bf16 %v3147, %v3146
    %v3207 = vpack.c.bf16 %v3149, %v3148
    %v3208 = vpack.c.bf16 %v3151, %v3150
    %v3209 = vpack.c.bf16 %v3153, %v3152
    %v3210 = vpack.c.bf16 %v3155, %v3154
    %v3211 = vpack.c.bf16 %v3157, %v3156
    %v3212 = vpack.c.bf16 %v3159, %v3158
    %v3213 = vpack.c.bf16 %v3161, %v3160
    %v3214 = vpack.c.bf16 %v3163, %v3162
    %v3215 = vpack.c.bf16 %v3165, %v3164
    %v3216 = vpack.c.bf16 %v3167, %v3166
    %v3217 = vpack.c.bf16 %v3169, %v3168
    %v3218 = vpack.c.bf16 %v3171, %v3170
    %v3219 = vpack.c.bf16 %v3173, %v3172
    %v3220 = vpack.c.bf16 %v3175, %v3174
    %v3221 = vpack.c.bf16 %v3177, %v3176
    %v3222 = vpack.c.bf16 %v3179, %v3178
    %v3223 = vpack.c.bf16 %v3181, %v3180
    %v3224 = vpack.c.bf16 %v3183, %v3182
    %v3225 = vpack.c.bf16 %v3185, %v3184
    %v3226 = vpack.c.bf16 %v3187, %v3186
    %v3227 = vpack.c.bf16 %v3189, %v3188
    %v3228 = vpack.c.bf16 %v3191, %v3190
    %v3229 = vpack.c.bf16 %v3193, %v3192
    %v3230 = vpack.c.bf16 %v3195, %v3194
    %v3231 = vpack.c.bf16 %v3197, %v3196
    %v3232 = vpack.c.bf16 %v3199, %v3198
    %v3233 = vpack.c.bf16 %v3201, %v3200
    %v3266 = vunpack.c.l.b16 %v3202
    %v3267 = vunpack.c.h.b16 %v3202
    %v3268 = vunpack.c.l.b16 %v3203
    %v3269 = vunpack.c.h.b16 %v3203
    %v3270 = vunpack.c.l.b16 %v3204
    %v3271 = vunpack.c.h.b16 %v3204
    %v3272 = vunpack.c.l.b16 %v3205
    %v3273 = vunpack.c.h.b16 %v3205
    %v3274 = vunpack.c.l.b16 %v3206
    %v3275 = vunpack.c.h.b16 %v3206
    %v3276 = vunpack.c.l.b16 %v3207
    %v3277 = vunpack.c.h.b16 %v3207
    %v3278 = vunpack.c.l.b16 %v3208
    %v3279 = vunpack.c.h.b16 %v3208
    %v3280 = vunpack.c.l.b16 %v3209
    %v3281 = vunpack.c.h.b16 %v3209
    %v3282 = vunpack.c.l.b16 %v3210
    %v3283 = vunpack.c.h.b16 %v3210
    %v3284 = vunpack.c.l.b16 %v3211
    %v3285 = vunpack.c.h.b16 %v3211
    %v3286 = vunpack.c.l.b16 %v3212
    %v3287 = vunpack.c.h.b16 %v3212
    %v3288 = vunpack.c.l.b16 %v3213
    %v3289 = vunpack.c.h.b16 %v3213
    %v3290 = vunpack.c.l.b16 %v3214
    %v3291 = vunpack.c.h.b16 %v3214
    %v3292 = vunpack.c.l.b16 %v3215
    %v3293 = vunpack.c.h.b16 %v3215
    %v3294 = vunpack.c.l.b16 %v3216
    %v3295 = vunpack.c.h.b16 %v3216
    %v3296 = vunpack.c.l.b16 %v3217
    %v3297 = vunpack.c.h.b16 %v3217
    %v3298 = vunpack.c.l.b16 %v3218
    %v3299 = vunpack.c.h.b16 %v3218
    %v3300 = vunpack.c.l.b16 %v3219
    %v3301 = vunpack.c.h.b16 %v3219
    %v3302 = vunpack.c.l.b16 %v3220
    %v3303 = vunpack.c.h.b16 %v3220
    %v3304 = vunpack.c.l.b16 %v3221
    %v3305 = vunpack.c.h.b16 %v3221
    %v3306 = vunpack.c.l.b16 %v3222
    %v3307 = vunpack.c.h.b16 %v3222
    %v3308 = vunpack.c.l.b16 %v3223
    %v3309 = vunpack.c.h.b16 %v3223
    %v3310 = vunpack.c.l.b16 %v3224
    %v3311 = vunpack.c.h.b16 %v3224
    %v3312 = vunpack.c.l.b16 %v3225
    %v3313 = vunpack.c.h.b16 %v3225
    %v3314 = vunpack.c.l.b16 %v3226
    %v3315 = vunpack.c.h.b16 %v3226
    %v3316 = vunpack.c.l.b16 %v3227
    %v3317 = vunpack.c.h.b16 %v3227
    %v3318 = vunpack.c.l.b16 %v3228
    %v3319 = vunpack.c.h.b16 %v3228
    %v3320 = vunpack.c.l.b16 %v3229
    %v3321 = vunpack.c.h.b16 %v3229
    %v3322 = vunpack.c.l.b16 %v3230
    %v3323 = vunpack.c.h.b16 %v3230
    %v3324 = vunpack.c.l.b16 %v3231
    %v3325 = vunpack.c.h.b16 %v3231
    %v3326 = vunpack.c.l.b16 %v3232
    %v3327 = vunpack.c.h.b16 %v3232
    %v3328 = vunpack.c.l.b16 %v3233
    %v3329 = vunpack.c.h.b16 %v3233
    %v3330 = vpack.c.b16 %v3266, %v3266
    %v3331 = vpack.c.b16 %v3267, %v3267
    %v3332 = vpack.c.b16 %v3268, %v3268
    %v3333 = vpack.c.b16 %v3269, %v3269
    %v3334 = vpack.c.b16 %v3270, %v3270
    %v3335 = vpack.c.b16 %v3271, %v3271
    %v3336 = vpack.c.b16 %v3272, %v3272
    %v3337 = vpack.c.b16 %v3273, %v3273
    %v3338 = vpack.c.b16 %v3274, %v3274
    %v3339 = vpack.c.b16 %v3275, %v3275
    %v3340 = vpack.c.b16 %v3276, %v3276
    %v3341 = vpack.c.b16 %v3277, %v3277
    %v3342 = vpack.c.b16 %v3278, %v3278
    %v3343 = vpack.c.b16 %v3279, %v3279
    %v3344 = vpack.c.b16 %v3280, %v3280
    %v3345 = vpack.c.b16 %v3281, %v3281
    %v3346 = vpack.c.b16 %v3282, %v3282
    %v3347 = vpack.c.b16 %v3283, %v3283
    %v3348 = vpack.c.b16 %v3284, %v3284
    %v3349 = vpack.c.b16 %v3285, %v3285
    %v3350 = vpack.c.b16 %v3286, %v3286
    %v3351 = vpack.c.b16 %v3287, %v3287
    %v3352 = vpack.c.b16 %v3288, %v3288
    %v3353 = vpack.c.b16 %v3289, %v3289
    %v3354 = vpack.c.b16 %v3290, %v3290
    %v3355 = vpack.c.b16 %v3291, %v3291
    %v3356 = vpack.c.b16 %v3292, %v3292
    %v3357 = vpack.c.b16 %v3293, %v3293
    %v3358 = vpack.c.b16 %v3294, %v3294
    %v3359 = vpack.c.b16 %v3295, %v3295
    %v3360 = vpack.c.b16 %v3296, %v3296
    %v3361 = vpack.c.b16 %v3297, %v3297
    %v3362 = vpack.c.b16 %v3298, %v3298
    %v3363 = vpack.c.b16 %v3299, %v3299
    %v3364 = vpack.c.b16 %v3300, %v3300
    %v3365 = vpack.c.b16 %v3301, %v3301
    %v3366 = vpack.c.b16 %v3302, %v3302
    %v3367 = vpack.c.b16 %v3303, %v3303
    %v3368 = vpack.c.b16 %v3304, %v3304
    %v3369 = vpack.c.b16 %v3305, %v3305
    %v3370 = vpack.c.b16 %v3306, %v3306
    %v3371 = vpack.c.b16 %v3307, %v3307
    %v3372 = vpack.c.b16 %v3308, %v3308
    %v3373 = vpack.c.b16 %v3309, %v3309
    %v3374 = vpack.c.b16 %v3310, %v3310
    %v3375 = vpack.c.b16 %v3311, %v3311
    %v3376 = vpack.c.b16 %v3312, %v3312
    %v3377 = vpack.c.b16 %v3313, %v3313
    %v3378 = vpack.c.b16 %v3314, %v3314
    %v3379 = vpack.c.b16 %v3315, %v3315
    %v3380 = vpack.c.b16 %v3316, %v3316
    %v3381 = vpack.c.b16 %v3317, %v3317
    %v3382 = vpack.c.b16 %v3318, %v3318
    %v3383 = vpack.c.b16 %v3319, %v3319
    %v3384 = vpack.c.b16 %v3320, %v3320
    %v3385 = vpack.c.b16 %v3321, %v3321
    %v3386 = vpack.c.b16 %v3322, %v3322
    %v3387 = vpack.c.b16 %v3323, %v3323
    %v3388 = vpack.c.b16 %v3324, %v3324
    %v3389 = vpack.c.b16 %v3325, %v3325
    %v3390 = vpack.c.b16 %v3326, %v3326
    %v3391 = vpack.c.b16 %v3327, %v3327
    %v3392 = vpack.c.b16 %v3328, %v3328
    %v3393 = vpack.c.b16 %v3329, %v3329
    %vm3458 = vcmask 125952
    %3459 = vst.msk [vmem:[#allocation9] sm:$0xf] %vm3458, %v3330
    %3460 = vst.msk [vmem:[#allocation9 + $0x4] sm:$0xf] %vm3458, %v3331
    %3461 = vst.msk [vmem:[#allocation9 + $0x8] sm:$0xf] %vm3458, %v3332
    %3462 = vst.msk [vmem:[#allocation9 + $0xc] sm:$0xf] %vm3458, %v3333
    %3463 = vst.msk [vmem:[#allocation9 + $0x10] sm:$0xf] %vm3458, %v3334
    %3464 = vst.msk [vmem:[#allocation9 + $0x14] sm:$0xf] %vm3458, %v3335
    %3465 = vst.msk [vmem:[#allocation9 + $0x18] sm:$0xf] %vm3458, %v3336
    %3466 = vst.msk [vmem:[#allocation9 + $0x1c] sm:$0xf] %vm3458, %v3337
    %3467 = vst.msk [vmem:[#allocation9 + $0x20] sm:$0xf] %vm3458, %v3338
    %3468 = vst.msk [vmem:[#allocation9 + $0x24] sm:$0xf] %vm3458, %v3339
    %3469 = vst.msk [vmem:[#allocation9 + $0x28] sm:$0xf] %vm3458, %v3340
    %3470 = vst.msk [vmem:[#allocation9 + $0x2c] sm:$0xf] %vm3458, %v3341
    %3471 = vst.msk [vmem:[#allocation9 + $0x30] sm:$0xf] %vm3458, %v3342
    %3472 = vst.msk [vmem:[#allocation9 + $0x34] sm:$0xf] %vm3458, %v3343
    %3473 = vst.msk [vmem:[#allocation9 + $0x38] sm:$0xf] %vm3458, %v3344
    %3474 = vst.msk [vmem:[#allocation9 + $0x3c] sm:$0xf] %vm3458, %v3345
    %3475 = vst.msk [vmem:[#allocation9 + $0x40] sm:$0xf] %vm3458, %v3346
    %3476 = vst.msk [vmem:[#allocation9 + $0x44] sm:$0xf] %vm3458, %v3347
    %3477 = vst.msk [vmem:[#allocation9 + $0x48] sm:$0xf] %vm3458, %v3348
    %3478 = vst.msk [vmem:[#allocation9 + $0x4c] sm:$0xf] %vm3458, %v3349
    %3479 = vst.msk [vmem:[#allocation9 + $0x50] sm:$0xf] %vm3458, %v3350
    %3480 = vst.msk [vmem:[#allocation9 + $0x54] sm:$0xf] %vm3458, %v3351
    %3481 = vst.msk [vmem:[#allocation9 + $0x58] sm:$0xf] %vm3458, %v3352
    %3482 = vst.msk [vmem:[#allocation9 + $0x5c] sm:$0xf] %vm3458, %v3353
    %3483 = vst.msk [vmem:[#allocation9 + $0x60] sm:$0xf] %vm3458, %v3354
    %3484 = vst.msk [vmem:[#allocation9 + $0x64] sm:$0xf] %vm3458, %v3355
    %3485 = vst.msk [vmem:[#allocation9 + $0x68] sm:$0xf] %vm3458, %v3356
    %3486 = vst.msk [vmem:[#allocation9 + $0x6c] sm:$0xf] %vm3458, %v3357
    %3487 = vst.msk [vmem:[#allocation9 + $0x70] sm:$0xf] %vm3458, %v3358
    %3488 = vst.msk [vmem:[#allocation9 + $0x74] sm:$0xf] %vm3458, %v3359
    %3489 = vst.msk [vmem:[#allocation9 + $0x78] sm:$0xf] %vm3458, %v3360
    %3490 = vst.msk [vmem:[#allocation9 + $0x7c] sm:$0xf] %vm3458, %v3361
    %3491 = vst.msk [vmem:[#allocation9 + $0x80] sm:$0xf] %vm3458, %v3362
    %3492 = vst.msk [vmem:[#allocation9 + $0x84] sm:$0xf] %vm3458, %v3363
    %3493 = vst.msk [vmem:[#allocation9 + $0x88] sm:$0xf] %vm3458, %v3364
    %3494 = vst.msk [vmem:[#allocation9 + $0x8c] sm:$0xf] %vm3458, %v3365
    %3495 = vst.msk [vmem:[#allocation9 + $0x90] sm:$0xf] %vm3458, %v3366
    %3496 = vst.msk [vmem:[#allocation9 + $0x94] sm:$0xf] %vm3458, %v3367
    %3497 = vst.msk [vmem:[#allocation9 + $0x98] sm:$0xf] %vm3458, %v3368
    %3498 = vst.msk [vmem:[#allocation9 + $0x9c] sm:$0xf] %vm3458, %v3369
    %3499 = vst.msk [vmem:[#allocation9 + $0xa0] sm:$0xf] %vm3458, %v3370
    %3500 = vst.msk [vmem:[#allocation9 + $0xa4] sm:$0xf] %vm3458, %v3371
    %3501 = vst.msk [vmem:[#allocation9 + $0xa8] sm:$0xf] %vm3458, %v3372
    %3502 = vst.msk [vmem:[#allocation9 + $0xac] sm:$0xf] %vm3458, %v3373
    %3503 = vst.msk [vmem:[#allocation9 + $0xb0] sm:$0xf] %vm3458, %v3374
    %3504 = vst.msk [vmem:[#allocation9 + $0xb4] sm:$0xf] %vm3458, %v3375
    %3505 = vst.msk [vmem:[#allocation9 + $0xb8] sm:$0xf] %vm3458, %v3376
    %3506 = vst.msk [vmem:[#allocation9 + $0xbc] sm:$0xf] %vm3458, %v3377
    %3507 = vst.msk [vmem:[#allocation9 + $0xc0] sm:$0xf] %vm3458, %v3378
    %3508 = vst.msk [vmem:[#allocation9 + $0xc4] sm:$0xf] %vm3458, %v3379
    %3509 = vst.msk [vmem:[#allocation9 + $0xc8] sm:$0xf] %vm3458, %v3380
    %3510 = vst.msk [vmem:[#allocation9 + $0xcc] sm:$0xf] %vm3458, %v3381
    %3511 = vst.msk [vmem:[#allocation9 + $0xd0] sm:$0xf] %vm3458, %v3382
    %3512 = vst.msk [vmem:[#allocation9 + $0xd4] sm:$0xf] %vm3458, %v3383
    %3513 = vst.msk [vmem:[#allocation9 + $0xd8] sm:$0xf] %vm3458, %v3384
    %3514 = vst.msk [vmem:[#allocation9 + $0xdc] sm:$0xf] %vm3458, %v3385
    %3515 = vst.msk [vmem:[#allocation9 + $0xe0] sm:$0xf] %vm3458, %v3386
    %3516 = vst.msk [vmem:[#allocation9 + $0xe4] sm:$0xf] %vm3458, %v3387
    %3517 = vst.msk [vmem:[#allocation9 + $0xe8] sm:$0xf] %vm3458, %v3388
    %3518 = vst.msk [vmem:[#allocation9 + $0xec] sm:$0xf] %vm3458, %v3389
    %3519 = vst.msk [vmem:[#allocation9 + $0xf0] sm:$0xf] %vm3458, %v3390
    %3520 = vst.msk [vmem:[#allocation9 + $0xf4] sm:$0xf] %vm3458, %v3391
    %3521 = vst.msk [vmem:[#allocation9 + $0xf8] sm:$0xf] %vm3458, %v3392
    %3522 = vst.msk [vmem:[#allocation9 + $0xfc] sm:$0xf] %vm3458, %v3393
    // Predicated region
    $region26: #{tpu_custom_call.1} parent=1 // pred_check
      _
    $region27: #{tpu_custom_call.1} parent=1 // pred_check_branch
      %3524 = sbr.rel (0) target = $region29
    $region28: #{tpu_custom_call.1} parent=1 // pred_region
      %s3526 = ssub.s32 4096, 4096
      %3527 = vsyncadd [#allocation5], %s3526
      %s3528 = sshll.u32 [#allocation9], 4
      %s3529 = int_to_ptr.vmem [resolvable:$true] %s3528
      %3534 = dma.vmem_to_hbm [thread:$0]  %s3529, 4096, %s3, [#allocation5], 64, 64, 4
    $region29: #{tpu_custom_call.1} parent=1 // pred_fallthru
      _
    // Predicated region
    $region30: #{tpu_custom_call.1} parent=1 // pred_check
      _
    $region31: #{tpu_custom_call.1} parent=1 // pred_check_branch
      %3536 = sbr.rel (0) target = $region33
    $region32: #{tpu_custom_call.1} parent=1 // pred_region
      %3537 = dma.done [#allocation5], 4096
    $region33: #{tpu_custom_call.1} parent=1 // pred_fallthru
      _
    %3538 = vsyncpa [#allocation4], 1
    %3539 = vsyncpa [#allocation7], 1
    %3540 = vsyncpa [#allocation5], 1

</llo_original>
